<compile_context>
chip_gen: v6e
topology: v6e:2x2x1
jax: 0.10.0
libtpu: 0.0.40
codegen_flags: <defaults>
</compile_context>

<pallas_src>
import jax
import jax.numpy as jnp
from jax.experimental import pallas as pl
from jax.experimental.pallas import tpu as pltpu

NEG_SLOPE = 0.2
EPS = 1e-5


# ---------------------------------------------------------------------------
# Kernels
# ---------------------------------------------------------------------------
def _conv_tile(x_ref, h_ref, w_ref):
    """3x3 conv on one row-block -> channel-major f32 tile (Cout, th*W)."""
    th, Wp, Cin = x_ref.shape
    W = Wp - 2
    Cout = w_ref.shape[1]
    xt = jnp.concatenate([x_ref[...], h_ref[...]], axis=0)        # (th+2, Wp, Cin) bf16
    acc = jnp.zeros((Cout, th * W), jnp.float32)
    for dx in range(3):                                           # horizontal taps
        xs = xt[:, dx:dx + W, :].reshape((th + 2) * W, Cin)       # shifted, flattened rows
        for dy in range(3):                                       # vertical taps (free slices)
            tap = xs[dy * W:(dy + th) * W, :]                     # (th*W, Cin)
            # (Cout, Cin) . (th*W, Cin)^T -> (Cout, th*W), f32 MXU accumulation
            acc = acc + jax.lax.dot_general(
                w_ref[3 * dy + dx], tap, (((1,), (1,)), ((), ())),
                preferred_element_type=jnp.float32)
    return acc


def _stats_kernel(x_ref, h_ref, w_ref, sum_ref, ssq_ref):
    """Per-tile partial BatchNorm statistics (no conv output written to HBM)."""
    acc = _conv_tile(x_ref, h_ref, w_ref)
    sum_ref[...] = jnp.sum(acc, axis=1, keepdims=True)            # (Cout, 1)
    ssq_ref[...] = jnp.sum(acc * acc, axis=1, keepdims=True)      # (Cout, 1)


def _conv_bn_act_kernel(x_ref, h_ref, w_ref, scale_ref, shift_ref, o_ref):
    """Conv (recomputed) + affine BatchNorm + LeakyReLU, channel-major output."""
    acc = _conv_tile(x_ref, h_ref, w_ref)
    y = acc * scale_ref[...] + shift_ref[...]                     # per-channel affine BN
    o_ref[...] = jnp.where(y >= 0, y, NEG_SLOPE * y)              # LeakyReLU(0.2)


# ---------------------------------------------------------------------------
# Tiling heuristic
# ---------------------------------------------------------------------------
def _pick_row_block(H, W, Cin, Cout):
    """Row-block th: th | H, (th*W) % 128 == 0 (or th == H), fits VMEM budget."""
    legal = [th for th in range(1, H + 1)
             if H % th == 0 and ((th * W) % 128 == 0 or th == H)]

    def vmem_bytes(th):
        tile_in = (th + 2) * (W + 2) * Cin * 2                    # bf16 input block
        tile_out = Cout * th * W * 4                              # f32 output block
        # double-buffered blocks + rough in-kernel temporaries (taps, acc)
        return 6 * tile_in + 4 * tile_out

    fitting = [th for th in legal if vmem_bytes(th) <= 10 * 2**20]
    pool = fitting if fitting else [min(legal)]
    target_rows = 2048                                            # ~roofline-optimal tile
    return min(pool, key=lambda th: (abs(th * W - target_rows), th))


# ---------------------------------------------------------------------------
# Forward pass
# ---------------------------------------------------------------------------
def conv_bn_relu_forward(x, conv_w, gamma, beta):
    """x: (N, Cin, H, W) f32; conv_w: (Cout, Cin, 3, 3); gamma/beta: (Cout,)."""
    N, Cin, H, W = x.shape
    Cout = conv_w.shape[0]
    Wp = W + 2
    th = _pick_row_block(H, W, Cin, Cout)
    n_hblk = H // th

    # ---- XLA prologue (one cheap pass over the input) -----------------------
    x_nhwc = jnp.transpose(x.astype(jnp.float32), (0, 2, 3, 1))
    xpad = jnp.pad(x_nhwc, ((0, 0), (1, 1), (1, 1), (0, 0)),
                   mode="reflect").astype(jnp.bfloat16)           # (N, H+2, Wp, Cin)
    # 2-row halo below every row-block (so the input BlockSpecs never overlap).
    halo_rows = ((jnp.arange(n_hblk, dtype=jnp.int32) + 1) * th)[:, None] \
        + jnp.arange(2, dtype=jnp.int32)[None, :]                 # (n_hblk, 2)
    halo = xpad[:, halo_rows]                                     # (N, n_hblk, 2, Wp, Cin)
    # (Cout, Cin, 3, 3) -> (9, Cout, Cin), tap-major, bf16.
    w9 = jnp.transpose(conv_w.astype(jnp.float32), (2, 3, 0, 1)) \
        .reshape(9, Cout, Cin).astype(jnp.bfloat16)

    grid = (N, n_hblk)
    x_spec = pl.BlockSpec((None, th, Wp, Cin), lambda n, i: (n, i, 0, 0))
    h_spec = pl.BlockSpec((None, None, 2, Wp, Cin), lambda n, i: (n, i, 0, 0, 0))
    w_spec = pl.BlockSpec((9, Cout, Cin), lambda n, i: (0, 0, 0))
    cparams = pltpu.CompilerParams(
        dimension_semantics=("parallel", "parallel"),
        vmem_limit_bytes=48 * 1024 * 1024)
    conv_flops = 2 * N * H * W * 9 * Cin * Cout
    in_bytes = xpad.size * 2 + halo.size * 2 + w9.size * 2

    # ---- pass 1: per-tile partial BatchNorm statistics ----------------------
    psum, pssq = pl.pallas_call(
        _stats_kernel,
        grid=grid,
        in_specs=[x_spec, h_spec, w_spec],
        out_specs=(pl.BlockSpec((None, None, Cout, 1), lambda n, i: (n, i, 0, 0)),
                   pl.BlockSpec((None, None, Cout, 1), lambda n, i: (n, i, 0, 0))),
        out_shape=(jax.ShapeDtypeStruct((N, n_hblk, Cout, 1), jnp.float32),
                   jax.ShapeDtypeStruct((N, n_hblk, Cout, 1), jnp.float32)),
        compiler_params=cparams,
        cost_estimate=pl.CostEstimate(flops=conv_flops, transcendentals=0,
                                      bytes_accessed=in_bytes + 2 * N * n_hblk * Cout * 4),
    )(xpad, halo, w9)

    # ---- BatchNorm affine params (training semantics: biased batch stats) ---
    M = N * H * W
    mean = psum.sum(axis=(0, 1)) / M                              # (Cout, 1) f32
    # TODO(synk): E[x^2]-E[x]^2 in f32 can cancel when |mean| >> std; the
    # partial-sum tree + clamp keeps it sane for conv activations here.
    var = jnp.maximum(pssq.sum(axis=(0, 1)) / M - mean * mean, 0.0)
    scale = gamma.astype(jnp.float32)[:, None] * jax.lax.rsqrt(var + EPS)
    shift = beta.astype(jnp.float32)[:, None] - mean * scale
    # TODO(synk): running_mean/running_var EMA buffer updates are not modeled.

    # ---- pass 2: conv (recomputed) + BN + LeakyReLU, written in NCHW order --
    out_flat = pl.pallas_call(
        _conv_bn_act_kernel,
        grid=grid,
        in_specs=[x_spec, h_spec, w_spec,
                  pl.BlockSpec((Cout, 1), lambda n, i: (0, 0)),
                  pl.BlockSpec((Cout, 1), lambda n, i: (0, 0))],
        out_specs=pl.BlockSpec((None, Cout, th * W), lambda n, i: (n, 0, i)),
        out_shape=jax.ShapeDtypeStruct((N, Cout, H * W), jnp.float32),
        compiler_params=cparams,
        cost_estimate=pl.CostEstimate(flops=conv_flops, transcendentals=0,
                                      bytes_accessed=in_bytes + N * Cout * H * W * 4),
    )(xpad, halo, w9, scale, shift)

    return out_flat.reshape(N, Cout, H, W)                        # free reshape -> NCHW


# ---------------------------------------------------------------------------
# Pure-JAX reference (conv operands in bf16 to mirror the kernel's MXU path)
# ---------------------------------------------------------------------------
def _reference(x, conv_w, gamma, beta):
    xpad = jnp.pad(x.astype(jnp.float32), ((0, 0), (0, 0), (1, 1), (1, 1)),
                   mode="reflect")
    conv = jax.lax.conv_general_dilated(
        xpad.astype(jnp.bfloat16), conv_w.astype(jnp.bfloat16), (1, 1), "VALID",
        dimension_numbers=("NCHW", "OIHW", "NCHW"),
        preferred_element_type=jnp.float32)
    mean = conv.mean(axis=(0, 2, 3), keepdims=True)
    var = conv.var(axis=(0, 2, 3), keepdims=True)
    y = (conv - mean) * jax.lax.rsqrt(var + EPS) * gamma[None, :, None, None] \
        + beta[None, :, None, None]
    return jnp.where(y >= 0, y, NEG_SLOPE * y)


if __name__ == "__main__":
    key = jax.random.PRNGKey(0)
    k1, k2 = jax.random.split(key)

    N, Cin, H, W = 2, 4, 16, 16
    Cout = 8

    x = jax.random.normal(k1, (N, Cin, H, W), dtype=jnp.float32)
    conv_w = jax.random.normal(k2, (Cout, Cin, 3, 3), dtype=jnp.float32) * 0.1
    gamma = jnp.ones((Cout,), jnp.float32)    # fresh BatchNorm2d: weight = 1
    beta = jnp.zeros((Cout,), jnp.float32)    # fresh BatchNorm2d: bias = 0

    fwd = jax.jit(conv_bn_relu_forward)
    out = jax.block_until_ready(fwd(x, conv_w, gamma, beta))
    assert out.shape == (N, Cout, H, W)

    ref = jax.block_until_ready(_reference(x, conv_w, gamma, beta))
    max_err = float(jnp.max(jnp.abs(out - ref)))
    assert jnp.allclose(out, ref, atol=2e-3, rtol=2e-3), max_err

    print("KERNEL_OK")
</pallas_src>

<mosaic_0001>
module attributes {stable_mosaic.version = 11 : i64} {
  func.func @_stats_kernel(%arg0: i32, %arg1: i32, %arg2: memref<1x16x18x4xbf16, #tpu.memory_space<vmem>>, %arg3: memref<1x1x2x18x4xbf16, #tpu.memory_space<vmem>>, %arg4: memref<9x8x4xbf16, #tpu.memory_space<vmem>>, %arg5: memref<1x1x8x1xf32, #tpu.memory_space<vmem>>, %arg6: memref<1x1x8x1xf32, #tpu.memory_space<vmem>>) attributes {dimension_semantics = [#tpu.dimension_semantics<parallel>, #tpu.dimension_semantics<parallel>], iteration_bounds = array<i64: 2, 1>, scalar_prefetch = 0 : i64, scratch_operands = 0 : i64, tpu.core_type = #tpu.core_type<tc>, window_params = [{transform_indices = @transform_0, window_bounds = array<i64: 1, 16, 18, 4>}, {transform_indices = @transform_1, window_bounds = array<i64: 1, 1, 2, 18, 4>}, {pipeline_mode = #tpu.pipeline_mode<synchronous>, transform_indices = @transform_2, window_bounds = array<i64: 9, 8, 4>}, {transform_indices = @transform_3, window_bounds = array<i64: 1, 1, 8, 1>}, {transform_indices = @transform_4, window_bounds = array<i64: 1, 1, 8, 1>}]} {
    %c0 = arith.constant 0 : index
    %c0_0 = arith.constant 0 : index
    %c0_1 = arith.constant 0 : index
    %c0_2 = arith.constant 0 : index
    %0 = vector.load %arg2[%c0, %c0_0, %c0_1, %c0_2] : memref<1x16x18x4xbf16, #tpu.memory_space<vmem>>, vector<1x16x18x4xbf16>
    %1 = vector.shape_cast %0 : vector<1x16x18x4xbf16> to vector<16x18x4xbf16>
    %c0_3 = arith.constant 0 : index
    %c0_4 = arith.constant 0 : index
    %c0_5 = arith.constant 0 : index
    %c0_6 = arith.constant 0 : index
    %c0_7 = arith.constant 0 : index
    %2 = vector.load %arg3[%c0_3, %c0_4, %c0_5, %c0_6, %c0_7] : memref<1x1x2x18x4xbf16, #tpu.memory_space<vmem>>, vector<1x1x2x18x4xbf16>
    %3 = vector.shape_cast %2 : vector<1x1x2x18x4xbf16> to vector<2x18x4xbf16>
    %4 = tpu.concatenate %1, %3 in 0 : vector<16x18x4xbf16>, vector<2x18x4xbf16> -> vector<18x18x4xbf16>
    %cst = arith.constant 0.000000e+00 : f32
    %5 = vector.broadcast %cst : f32 to vector<8x256xf32>
    %6 = vector.extract_strided_slice %4 {offsets = [0, 0, 0], sizes = [18, 16, 4], strides = [1, 1, 1]} : vector<18x18x4xbf16> to vector<18x16x4xbf16>
    %7 = vector.shape_cast %6 : vector<18x16x4xbf16> to vector<288x4xbf16>
    %8 = vector.extract_strided_slice %7 {offsets = [0, 0], sizes = [256, 4], strides = [1, 1]} : vector<288x4xbf16> to vector<256x4xbf16>
    %c0_8 = arith.constant 0 : index
    %c0_9 = arith.constant 0 : index
    %c0_10 = arith.constant 0 : index
    %9 = vector.load %arg4[%c0_8, %c0_9, %c0_10] : memref<9x8x4xbf16, #tpu.memory_space<vmem>>, vector<1x8x4xbf16>
    %10 = vector.shape_cast %9 : vector<1x8x4xbf16> to vector<8x4xbf16>
    %cst_11 = arith.constant dense<0.000000e+00> : vector<8x256xf32>
    %11 = tpu.matmul %10, %8, %cst_11 {dimension_numbers = #tpu.dot_dimension_numbers<[1], [1], [0], [0], [0, 0, 1, 0], [], []>} : vector<8x4xbf16>, vector<256x4xbf16>, vector<8x256xf32> -> vector<8x256xf32>
    %12 = arith.addf %5, %11 : vector<8x256xf32>
    %13 = vector.extract_strided_slice %7 {offsets = [16, 0], sizes = [256, 4], strides = [1, 1]} : vector<288x4xbf16> to vector<256x4xbf16>
    %c3 = arith.constant 3 : index
    %c0_12 = arith.constant 0 : index
    %c0_13 = arith.constant 0 : index
    %14 = vector.load %arg4[%c3, %c0_12, %c0_13] : memref<9x8x4xbf16, #tpu.memory_space<vmem>>, vector<1x8x4xbf16>
    %15 = vector.shape_cast %14 : vector<1x8x4xbf16> to vector<8x4xbf16>
    %cst_14 = arith.constant dense<0.000000e+00> : vector<8x256xf32>
    %16 = tpu.matmul %15, %13, %cst_14 {dimension_numbers = #tpu.dot_dimension_numbers<[1], [1], [0], [0], [0, 0, 1, 0], [], []>} : vector<8x4xbf16>, vector<256x4xbf16>, vector<8x256xf32> -> vector<8x256xf32>
    %17 = arith.addf %12, %16 : vector<8x256xf32>
    %18 = vector.extract_strided_slice %7 {offsets = [32, 0], sizes = [256, 4], strides = [1, 1]} : vector<288x4xbf16> to vector<256x4xbf16>
    %c6 = arith.constant 6 : index
    %c0_15 = arith.constant 0 : index
    %c0_16 = arith.constant 0 : index
    %19 = vector.load %arg4[%c6, %c0_15, %c0_16] : memref<9x8x4xbf16, #tpu.memory_space<vmem>>, vector<1x8x4xbf16>
    %20 = vector.shape_cast %19 : vector<1x8x4xbf16> to vector<8x4xbf16>
    %cst_17 = arith.constant dense<0.000000e+00> : vector<8x256xf32>
    %21 = tpu.matmul %20, %18, %cst_17 {dimension_numbers = #tpu.dot_dimension_numbers<[1], [1], [0], [0], [0, 0, 1, 0], [], []>} : vector<8x4xbf16>, vector<256x4xbf16>, vector<8x256xf32> -> vector<8x256xf32>
    %22 = arith.addf %17, %21 : vector<8x256xf32>
    %23 = vector.extract_strided_slice %4 {offsets = [0, 1, 0], sizes = [18, 16, 4], strides = [1, 1, 1]} : vector<18x18x4xbf16> to vector<18x16x4xbf16>
    %24 = vector.shape_cast %23 : vector<18x16x4xbf16> to vector<288x4xbf16>
    %25 = vector.extract_strided_slice %24 {offsets = [0, 0], sizes = [256, 4], strides = [1, 1]} : vector<288x4xbf16> to vector<256x4xbf16>
    %c1 = arith.constant 1 : index
    %c0_18 = arith.constant 0 : index
    %c0_19 = arith.constant 0 : index
    %26 = vector.load %arg4[%c1, %c0_18, %c0_19] : memref<9x8x4xbf16, #tpu.memory_space<vmem>>, vector<1x8x4xbf16>
    %27 = vector.shape_cast %26 : vector<1x8x4xbf16> to vector<8x4xbf16>
    %cst_20 = arith.constant dense<0.000000e+00> : vector<8x256xf32>
    %28 = tpu.matmul %27, %25, %cst_20 {dimension_numbers = #tpu.dot_dimension_numbers<[1], [1], [0], [0], [0, 0, 1, 0], [], []>} : vector<8x4xbf16>, vector<256x4xbf16>, vector<8x256xf32> -> vector<8x256xf32>
    %29 = arith.addf %22, %28 : vector<8x256xf32>
    %30 = vector.extract_strided_slice %24 {offsets = [16, 0], sizes = [256, 4], strides = [1, 1]} : vector<288x4xbf16> to vector<256x4xbf16>
    %c4 = arith.constant 4 : index
    %c0_21 = arith.constant 0 : index
    %c0_22 = arith.constant 0 : index
    %31 = vector.load %arg4[%c4, %c0_21, %c0_22] : memref<9x8x4xbf16, #tpu.memory_space<vmem>>, vector<1x8x4xbf16>
    %32 = vector.shape_cast %31 : vector<1x8x4xbf16> to vector<8x4xbf16>
    %cst_23 = arith.constant dense<0.000000e+00> : vector<8x256xf32>
    %33 = tpu.matmul %32, %30, %cst_23 {dimension_numbers = #tpu.dot_dimension_numbers<[1], [1], [0], [0], [0, 0, 1, 0], [], []>} : vector<8x4xbf16>, vector<256x4xbf16>, vector<8x256xf32> -> vector<8x256xf32>
    %34 = arith.addf %29, %33 : vector<8x256xf32>
    %35 = vector.extract_strided_slice %24 {offsets = [32, 0], sizes = [256, 4], strides = [1, 1]} : vector<288x4xbf16> to vector<256x4xbf16>
    %c7 = arith.constant 7 : index
    %c0_24 = arith.constant 0 : index
    %c0_25 = arith.constant 0 : index
    %36 = vector.load %arg4[%c7, %c0_24, %c0_25] : memref<9x8x4xbf16, #tpu.memory_space<vmem>>, vector<1x8x4xbf16>
    %37 = vector.shape_cast %36 : vector<1x8x4xbf16> to vector<8x4xbf16>
    %cst_26 = arith.constant dense<0.000000e+00> : vector<8x256xf32>
    %38 = tpu.matmul %37, %35, %cst_26 {dimension_numbers = #tpu.dot_dimension_numbers<[1], [1], [0], [0], [0, 0, 1, 0], [], []>} : vector<8x4xbf16>, vector<256x4xbf16>, vector<8x256xf32> -> vector<8x256xf32>
    %39 = arith.addf %34, %38 : vector<8x256xf32>
    %40 = vector.extract_strided_slice %4 {offsets = [0, 2, 0], sizes = [18, 16, 4], strides = [1, 1, 1]} : vector<18x18x4xbf16> to vector<18x16x4xbf16>
    %41 = vector.shape_cast %40 : vector<18x16x4xbf16> to vector<288x4xbf16>
    %42 = vector.extract_strided_slice %41 {offsets = [0, 0], sizes = [256, 4], strides = [1, 1]} : vector<288x4xbf16> to vector<256x4xbf16>
    %c2 = arith.constant 2 : index
    %c0_27 = arith.constant 0 : index
    %c0_28 = arith.constant 0 : index
    %43 = vector.load %arg4[%c2, %c0_27, %c0_28] : memref<9x8x4xbf16, #tpu.memory_space<vmem>>, vector<1x8x4xbf16>
    %44 = vector.shape_cast %43 : vector<1x8x4xbf16> to vector<8x4xbf16>
    %cst_29 = arith.constant dense<0.000000e+00> : vector<8x256xf32>
    %45 = tpu.matmul %44, %42, %cst_29 {dimension_numbers = #tpu.dot_dimension_numbers<[1], [1], [0], [0], [0, 0, 1, 0], [], []>} : vector<8x4xbf16>, vector<256x4xbf16>, vector<8x256xf32> -> vector<8x256xf32>
    %46 = arith.addf %39, %45 : vector<8x256xf32>
    %47 = vector.extract_strided_slice %41 {offsets = [16, 0], sizes = [256, 4], strides = [1, 1]} : vector<288x4xbf16> to vector<256x4xbf16>
    %c5 = arith.constant 5 : index
    %c0_30 = arith.constant 0 : index
    %c0_31 = arith.constant 0 : index
    %48 = vector.load %arg4[%c5, %c0_30, %c0_31] : memref<9x8x4xbf16, #tpu.memory_space<vmem>>, vector<1x8x4xbf16>
    %49 = vector.shape_cast %48 : vector<1x8x4xbf16> to vector<8x4xbf16>
    %cst_32 = arith.constant dense<0.000000e+00> : vector<8x256xf32>
    %50 = tpu.matmul %49, %47, %cst_32 {dimension_numbers = #tpu.dot_dimension_numbers<[1], [1], [0], [0], [0, 0, 1, 0], [], []>} : vector<8x4xbf16>, vector<256x4xbf16>, vector<8x256xf32> -> vector<8x256xf32>
    %51 = arith.addf %46, %50 : vector<8x256xf32>
    %52 = vector.extract_strided_slice %41 {offsets = [32, 0], sizes = [256, 4], strides = [1, 1]} : vector<288x4xbf16> to vector<256x4xbf16>
    %c8 = arith.constant 8 : index
    %c0_33 = arith.constant 0 : index
    %c0_34 = arith.constant 0 : index
    %53 = vector.load %arg4[%c8, %c0_33, %c0_34] : memref<9x8x4xbf16, #tpu.memory_space<vmem>>, vector<1x8x4xbf16>
    %54 = vector.shape_cast %53 : vector<1x8x4xbf16> to vector<8x4xbf16>
    %cst_35 = arith.constant dense<0.000000e+00> : vector<8x256xf32>
    %55 = tpu.matmul %54, %52, %cst_35 {dimension_numbers = #tpu.dot_dimension_numbers<[1], [1], [0], [0], [0, 0, 1, 0], [], []>} : vector<8x4xbf16>, vector<256x4xbf16>, vector<8x256xf32> -> vector<8x256xf32>
    %56 = arith.addf %51, %55 : vector<8x256xf32>
    %cst_36 = arith.constant dense<0.000000e+00> : vector<8xf32>
    %57 = vector.multi_reduction <add>, %56, %cst_36 [1] : vector<8x256xf32> to vector<8xf32>
    %58 = vector.shape_cast %57 : vector<8xf32> to vector<8x1xf32>
    %c0_37 = arith.constant 0 : index
    %c0_38 = arith.constant 0 : index
    %c0_39 = arith.constant 0 : index
    %c0_40 = arith.constant 0 : index
    %59 = vector.load %arg5[%c0_37, %c0_38, %c0_39, %c0_40] : memref<1x1x8x1xf32, #tpu.memory_space<vmem>>, vector<1x1x8x1xf32>
    %60 = vector.shape_cast %59 : vector<1x1x8x1xf32> to vector<8x1xf32>
    %61 = vector.shape_cast %58 : vector<8x1xf32> to vector<1x1x8x1xf32>
    tpu.vector_store %arg5[%c0_37, %c0_38, %c0_39, %c0_40], %61 {strides = array<i32>} : memref<1x1x8x1xf32, #tpu.memory_space<vmem>>, vector<1x1x8x1xf32>,
    %62 = arith.mulf %56, %56 : vector<8x256xf32>
    %cst_41 = arith.constant dense<0.000000e+00> : vector<8xf32>
    %63 = vector.multi_reduction <add>, %62, %cst_41 [1] : vector<8x256xf32> to vector<8xf32>
    %64 = vector.shape_cast %63 : vector<8xf32> to vector<8x1xf32>
    %c0_42 = arith.constant 0 : index
    %c0_43 = arith.constant 0 : index
    %c0_44 = arith.constant 0 : index
    %c0_45 = arith.constant 0 : index
    %65 = vector.load %arg6[%c0_42, %c0_43, %c0_44, %c0_45] : memref<1x1x8x1xf32, #tpu.memory_space<vmem>>, vector<1x1x8x1xf32>
    %66 = vector.shape_cast %65 : vector<1x1x8x1xf32> to vector<8x1xf32>
    %67 = vector.shape_cast %64 : vector<8x1xf32> to vector<1x1x8x1xf32>
    tpu.vector_store %arg6[%c0_42, %c0_43, %c0_44, %c0_45], %67 {strides = array<i32>} : memref<1x1x8x1xf32, #tpu.memory_space<vmem>>, vector<1x1x8x1xf32>,
    return
  }
  func.func @transform_0(%arg0: i32, %arg1: i32) -> (i32, i32, i32, i32) {
    %c0_i32 = arith.constant 0 : i32
    %c0_i32_0 = arith.constant 0 : i32
    %c0_i32_1 = arith.constant 0 : i32
    return %arg0, %arg1, %c0_i32, %c0_i32_0 : i32, i32, i32, i32
  }
  func.func @transform_1(%arg0: i32, %arg1: i32) -> (i32, i32, i32, i32, i32) {
    %c0_i32 = arith.constant 0 : i32
    %c0_i32_0 = arith.constant 0 : i32
    %c0_i32_1 = arith.constant 0 : i32
    %c0_i32_2 = arith.constant 0 : i32
    return %arg0, %arg1, %c0_i32, %c0_i32_0, %c0_i32_1 : i32, i32, i32, i32, i32
  }
  func.func @transform_2(%arg0: i32, %arg1: i32) -> (i32, i32, i32) {
    %c0_i32 = arith.constant 0 : i32
    %c0_i32_0 = arith.constant 0 : i32
    %c0_i32_1 = arith.constant 0 : i32
    %c0_i32_2 = arith.constant 0 : i32
    return %c0_i32, %c0_i32_0, %c0_i32_1 : i32, i32, i32
  }
  func.func @transform_3(%arg0: i32, %arg1: i32) -> (i32, i32, i32, i32) {
    %c0_i32 = arith.constant 0 : i32
    %c0_i32_0 = arith.constant 0 : i32
    %c0_i32_1 = arith.constant 0 : i32
    return %arg0, %arg1, %c0_i32, %c0_i32_0 : i32, i32, i32, i32
  }
  func.func @transform_4(%arg0: i32, %arg1: i32) -> (i32, i32, i32, i32) {
    %c0_i32 = arith.constant 0 : i32
    %c0_i32_0 = arith.constant 0 : i32
    %c0_i32_1 = arith.constant 0 : i32
    return %arg0, %arg1, %c0_i32, %c0_i32_0 : i32, i32, i32, i32
  }
}

module attributes {stable_mosaic.version = 11 : i64} {
  func.func @_conv_bn_act_kernel(%arg0: i32, %arg1: i32, %arg2: memref<1x16x18x4xbf16, #tpu.memory_space<vmem>>, %arg3: memref<1x1x2x18x4xbf16, #tpu.memory_space<vmem>>, %arg4: memref<9x8x4xbf16, #tpu.memory_space<vmem>>, %arg5: memref<8x1xf32, #tpu.memory_space<vmem>>, %arg6: memref<8x1xf32, #tpu.memory_space<vmem>>, %arg7: memref<1x8x256xf32, #tpu.memory_space<vmem>>) attributes {dimension_semantics = [#tpu.dimension_semantics<parallel>, #tpu.dimension_semantics<parallel>], iteration_bounds = array<i64: 2, 1>, scalar_prefetch = 0 : i64, scratch_operands = 0 : i64, tpu.core_type = #tpu.core_type<tc>, window_params = [{transform_indices = @transform_0, window_bounds = array<i64: 1, 16, 18, 4>}, {transform_indices = @transform_1, window_bounds = array<i64: 1, 1, 2, 18, 4>}, {pipeline_mode = #tpu.pipeline_mode<synchronous>, transform_indices = @transform_2, window_bounds = array<i64: 9, 8, 4>}, {pipeline_mode = #tpu.pipeline_mode<synchronous>, transform_indices = @transform_3, window_bounds = array<i64: 8, 1>}, {pipeline_mode = #tpu.pipeline_mode<synchronous>, transform_indices = @transform_4, window_bounds = array<i64: 8, 1>}, {transform_indices = @transform_5, window_bounds = array<i64: 1, 8, 256>}]} {
    %c0 = arith.constant 0 : index
    %c0_0 = arith.constant 0 : index
    %c0_1 = arith.constant 0 : index
    %c0_2 = arith.constant 0 : index
    %0 = vector.load %arg2[%c0, %c0_0, %c0_1, %c0_2] : memref<1x16x18x4xbf16, #tpu.memory_space<vmem>>, vector<1x16x18x4xbf16>
    %1 = vector.shape_cast %0 : vector<1x16x18x4xbf16> to vector<16x18x4xbf16>
    %c0_3 = arith.constant 0 : index
    %c0_4 = arith.constant 0 : index
    %c0_5 = arith.constant 0 : index
    %c0_6 = arith.constant 0 : index
    %c0_7 = arith.constant 0 : index
    %2 = vector.load %arg3[%c0_3, %c0_4, %c0_5, %c0_6, %c0_7] : memref<1x1x2x18x4xbf16, #tpu.memory_space<vmem>>, vector<1x1x2x18x4xbf16>
    %3 = vector.shape_cast %2 : vector<1x1x2x18x4xbf16> to vector<2x18x4xbf16>
    %4 = tpu.concatenate %1, %3 in 0 : vector<16x18x4xbf16>, vector<2x18x4xbf16> -> vector<18x18x4xbf16>
    %cst = arith.constant 0.000000e+00 : f32
    %5 = vector.broadcast %cst : f32 to vector<8x256xf32>
    %6 = vector.extract_strided_slice %4 {offsets = [0, 0, 0], sizes = [18, 16, 4], strides = [1, 1, 1]} : vector<18x18x4xbf16> to vector<18x16x4xbf16>
    %7 = vector.shape_cast %6 : vector<18x16x4xbf16> to vector<288x4xbf16>
    %8 = vector.extract_strided_slice %7 {offsets = [0, 0], sizes = [256, 4], strides = [1, 1]} : vector<288x4xbf16> to vector<256x4xbf16>
    %c0_8 = arith.constant 0 : index
    %c0_9 = arith.constant 0 : index
    %c0_10 = arith.constant 0 : index
    %9 = vector.load %arg4[%c0_8, %c0_9, %c0_10] : memref<9x8x4xbf16, #tpu.memory_space<vmem>>, vector<1x8x4xbf16>
    %10 = vector.shape_cast %9 : vector<1x8x4xbf16> to vector<8x4xbf16>
    %cst_11 = arith.constant dense<0.000000e+00> : vector<8x256xf32>
    %11 = tpu.matmul %10, %8, %cst_11 {dimension_numbers = #tpu.dot_dimension_numbers<[1], [1], [0], [0], [0, 0, 1, 0], [], []>} : vector<8x4xbf16>, vector<256x4xbf16>, vector<8x256xf32> -> vector<8x256xf32>
    %12 = arith.addf %5, %11 : vector<8x256xf32>
    %13 = vector.extract_strided_slice %7 {offsets = [16, 0], sizes = [256, 4], strides = [1, 1]} : vector<288x4xbf16> to vector<256x4xbf16>
    %c3 = arith.constant 3 : index
    %c0_12 = arith.constant 0 : index
    %c0_13 = arith.constant 0 : index
    %14 = vector.load %arg4[%c3, %c0_12, %c0_13] : memref<9x8x4xbf16, #tpu.memory_space<vmem>>, vector<1x8x4xbf16>
    %15 = vector.shape_cast %14 : vector<1x8x4xbf16> to vector<8x4xbf16>
    %cst_14 = arith.constant dense<0.000000e+00> : vector<8x256xf32>
    %16 = tpu.matmul %15, %13, %cst_14 {dimension_numbers = #tpu.dot_dimension_numbers<[1], [1], [0], [0], [0, 0, 1, 0], [], []>} : vector<8x4xbf16>, vector<256x4xbf16>, vector<8x256xf32> -> vector<8x256xf32>
    %17 = arith.addf %12, %16 : vector<8x256xf32>
    %18 = vector.extract_strided_slice %7 {offsets = [32, 0], sizes = [256, 4], strides = [1, 1]} : vector<288x4xbf16> to vector<256x4xbf16>
    %c6 = arith.constant 6 : index
    %c0_15 = arith.constant 0 : index
    %c0_16 = arith.constant 0 : index
    %19 = vector.load %arg4[%c6, %c0_15, %c0_16] : memref<9x8x4xbf16, #tpu.memory_space<vmem>>, vector<1x8x4xbf16>
    %20 = vector.shape_cast %19 : vector<1x8x4xbf16> to vector<8x4xbf16>
    %cst_17 = arith.constant dense<0.000000e+00> : vector<8x256xf32>
    %21 = tpu.matmul %20, %18, %cst_17 {dimension_numbers = #tpu.dot_dimension_numbers<[1], [1], [0], [0], [0, 0, 1, 0], [], []>} : vector<8x4xbf16>, vector<256x4xbf16>, vector<8x256xf32> -> vector<8x256xf32>
    %22 = arith.addf %17, %21 : vector<8x256xf32>
    %23 = vector.extract_strided_slice %4 {offsets = [0, 1, 0], sizes = [18, 16, 4], strides = [1, 1, 1]} : vector<18x18x4xbf16> to vector<18x16x4xbf16>
    %24 = vector.shape_cast %23 : vector<18x16x4xbf16> to vector<288x4xbf16>
    %25 = vector.extract_strided_slice %24 {offsets = [0, 0], sizes = [256, 4], strides = [1, 1]} : vector<288x4xbf16> to vector<256x4xbf16>
    %c1 = arith.constant 1 : index
    %c0_18 = arith.constant 0 : index
    %c0_19 = arith.constant 0 : index
    %26 = vector.load %arg4[%c1, %c0_18, %c0_19] : memref<9x8x4xbf16, #tpu.memory_space<vmem>>, vector<1x8x4xbf16>
    %27 = vector.shape_cast %26 : vector<1x8x4xbf16> to vector<8x4xbf16>
    %cst_20 = arith.constant dense<0.000000e+00> : vector<8x256xf32>
    %28 = tpu.matmul %27, %25, %cst_20 {dimension_numbers = #tpu.dot_dimension_numbers<[1], [1], [0], [0], [0, 0, 1, 0], [], []>} : vector<8x4xbf16>, vector<256x4xbf16>, vector<8x256xf32> -> vector<8x256xf32>
    %29 = arith.addf %22, %28 : vector<8x256xf32>
    %30 = vector.extract_strided_slice %24 {offsets = [16, 0], sizes = [256, 4], strides = [1, 1]} : vector<288x4xbf16> to vector<256x4xbf16>
    %c4 = arith.constant 4 : index
    %c0_21 = arith.constant 0 : index
    %c0_22 = arith.constant 0 : index
    %31 = vector.load %arg4[%c4, %c0_21, %c0_22] : memref<9x8x4xbf16, #tpu.memory_space<vmem>>, vector<1x8x4xbf16>
    %32 = vector.shape_cast %31 : vector<1x8x4xbf16> to vector<8x4xbf16>
    %cst_23 = arith.constant dense<0.000000e+00> : vector<8x256xf32>
    %33 = tpu.matmul %32, %30, %cst_23 {dimension_numbers = #tpu.dot_dimension_numbers<[1], [1], [0], [0], [0, 0, 1, 0], [], []>} : vector<8x4xbf16>, vector<256x4xbf16>, vector<8x256xf32> -> vector<8x256xf32>
    %34 = arith.addf %29, %33 : vector<8x256xf32>
    %35 = vector.extract_strided_slice %24 {offsets = [32, 0], sizes = [256, 4], strides = [1, 1]} : vector<288x4xbf16> to vector<256x4xbf16>
    %c7 = arith.constant 7 : index
    %c0_24 = arith.constant 0 : index
    %c0_25 = arith.constant 0 : index
    %36 = vector.load %arg4[%c7, %c0_24, %c0_25] : memref<9x8x4xbf16, #tpu.memory_space<vmem>>, vector<1x8x4xbf16>
    %37 = vector.shape_cast %36 : vector<1x8x4xbf16> to vector<8x4xbf16>
    %cst_26 = arith.constant dense<0.000000e+00> : vector<8x256xf32>
    %38 = tpu.matmul %37, %35, %cst_26 {dimension_numbers = #tpu.dot_dimension_numbers<[1], [1], [0], [0], [0, 0, 1, 0], [], []>} : vector<8x4xbf16>, vector<256x4xbf16>, vector<8x256xf32> -> vector<8x256xf32>
    %39 = arith.addf %34, %38 : vector<8x256xf32>
    %40 = vector.extract_strided_slice %4 {offsets = [0, 2, 0], sizes = [18, 16, 4], strides = [1, 1, 1]} : vector<18x18x4xbf16> to vector<18x16x4xbf16>
    %41 = vector.shape_cast %40 : vector<18x16x4xbf16> to vector<288x4xbf16>
    %42 = vector.extract_strided_slice %41 {offsets = [0, 0], sizes = [256, 4], strides = [1, 1]} : vector<288x4xbf16> to vector<256x4xbf16>
    %c2 = arith.constant 2 : index
    %c0_27 = arith.constant 0 : index
    %c0_28 = arith.constant 0 : index
    %43 = vector.load %arg4[%c2, %c0_27, %c0_28] : memref<9x8x4xbf16, #tpu.memory_space<vmem>>, vector<1x8x4xbf16>
    %44 = vector.shape_cast %43 : vector<1x8x4xbf16> to vector<8x4xbf16>
    %cst_29 = arith.constant dense<0.000000e+00> : vector<8x256xf32>
    %45 = tpu.matmul %44, %42, %cst_29 {dimension_numbers = #tpu.dot_dimension_numbers<[1], [1], [0], [0], [0, 0, 1, 0], [], []>} : vector<8x4xbf16>, vector<256x4xbf16>, vector<8x256xf32> -> vector<8x256xf32>
    %46 = arith.addf %39, %45 : vector<8x256xf32>
    %47 = vector.extract_strided_slice %41 {offsets = [16, 0], sizes = [256, 4], strides = [1, 1]} : vector<288x4xbf16> to vector<256x4xbf16>
    %c5 = arith.constant 5 : index
    %c0_30 = arith.constant 0 : index
    %c0_31 = arith.constant 0 : index
    %48 = vector.load %arg4[%c5, %c0_30, %c0_31] : memref<9x8x4xbf16, #tpu.memory_space<vmem>>, vector<1x8x4xbf16>
    %49 = vector.shape_cast %48 : vector<1x8x4xbf16> to vector<8x4xbf16>
    %cst_32 = arith.constant dense<0.000000e+00> : vector<8x256xf32>
    %50 = tpu.matmul %49, %47, %cst_32 {dimension_numbers = #tpu.dot_dimension_numbers<[1], [1], [0], [0], [0, 0, 1, 0], [], []>} : vector<8x4xbf16>, vector<256x4xbf16>, vector<8x256xf32> -> vector<8x256xf32>
    %51 = arith.addf %46, %50 : vector<8x256xf32>
    %52 = vector.extract_strided_slice %41 {offsets = [32, 0], sizes = [256, 4], strides = [1, 1]} : vector<288x4xbf16> to vector<256x4xbf16>
    %c8 = arith.constant 8 : index
    %c0_33 = arith.constant 0 : index
    %c0_34 = arith.constant 0 : index
    %53 = vector.load %arg4[%c8, %c0_33, %c0_34] : memref<9x8x4xbf16, #tpu.memory_space<vmem>>, vector<1x8x4xbf16>
    %54 = vector.shape_cast %53 : vector<1x8x4xbf16> to vector<8x4xbf16>
    %cst_35 = arith.constant dense<0.000000e+00> : vector<8x256xf32>
    %55 = tpu.matmul %54, %52, %cst_35 {dimension_numbers = #tpu.dot_dimension_numbers<[1], [1], [0], [0], [0, 0, 1, 0], [], []>} : vector<8x4xbf16>, vector<256x4xbf16>, vector<8x256xf32> -> vector<8x256xf32>
    %56 = arith.addf %51, %55 : vector<8x256xf32>
    %c0_36 = arith.constant 0 : index
    %c0_37 = arith.constant 0 : index
    %57 = vector.load %arg5[%c0_36, %c0_37] : memref<8x1xf32, #tpu.memory_space<vmem>>, vector<8x1xf32>
    %58 = vector.broadcast %57 : vector<8x1xf32> to vector<8x256xf32>
    %59 = arith.mulf %56, %58 : vector<8x256xf32>
    %c0_38 = arith.constant 0 : index
    %c0_39 = arith.constant 0 : index
    %60 = vector.load %arg6[%c0_38, %c0_39] : memref<8x1xf32, #tpu.memory_space<vmem>>, vector<8x1xf32>
    %61 = vector.broadcast %60 : vector<8x1xf32> to vector<8x256xf32>
    %62 = arith.addf %59, %61 : vector<8x256xf32>
    %cst_40 = arith.constant 0.000000e+00 : f32
    %63 = vector.broadcast %cst_40 : f32 to vector<8x256xf32>
    %64 = arith.cmpf oge, %62, %63 : vector<8x256xf32>
    %cst_41 = arith.constant 2.000000e-01 : f32
    %65 = vector.broadcast %cst_41 : f32 to vector<8x256xf32>
    %66 = arith.mulf %65, %62 : vector<8x256xf32>
    %67 = arith.select %64, %62, %66 : vector<8x256xi1>, vector<8x256xf32>
    %c0_42 = arith.constant 0 : index
    %c0_43 = arith.constant 0 : index
    %c0_44 = arith.constant 0 : index
    %68 = vector.load %arg7[%c0_42, %c0_43, %c0_44] : memref<1x8x256xf32, #tpu.memory_space<vmem>>, vector<1x8x256xf32>
    %69 = vector.shape_cast %68 : vector<1x8x256xf32> to vector<8x256xf32>
    %70 = vector.shape_cast %67 : vector<8x256xf32> to vector<1x8x256xf32>
    tpu.vector_store %arg7[%c0_42, %c0_43, %c0_44], %70 {strides = array<i32>} : memref<1x8x256xf32, #tpu.memory_space<vmem>>, vector<1x8x256xf32>,
    return
  }
  func.func @transform_0(%arg0: i32, %arg1: i32) -> (i32, i32, i32, i32) {
    %c0_i32 = arith.constant 0 : i32
    %c0_i32_0 = arith.constant 0 : i32
    %c0_i32_1 = arith.constant 0 : i32
    return %arg0, %arg1, %c0_i32, %c0_i32_0 : i32, i32, i32, i32
  }
  func.func @transform_1(%arg0: i32, %arg1: i32) -> (i32, i32, i32, i32, i32) {
    %c0_i32 = arith.constant 0 : i32
    %c0_i32_0 = arith.constant 0 : i32
    %c0_i32_1 = arith.constant 0 : i32
    %c0_i32_2 = arith.constant 0 : i32
    return %arg0, %arg1, %c0_i32, %c0_i32_0, %c0_i32_1 : i32, i32, i32, i32, i32
  }
  func.func @transform_2(%arg0: i32, %arg1: i32) -> (i32, i32, i32) {
    %c0_i32 = arith.constant 0 : i32
    %c0_i32_0 = arith.constant 0 : i32
    %c0_i32_1 = arith.constant 0 : i32
    %c0_i32_2 = arith.constant 0 : i32
    return %c0_i32, %c0_i32_0, %c0_i32_1 : i32, i32, i32
  }
  func.func @transform_3(%arg0: i32, %arg1: i32) -> (i32, i32) {
    %c0_i32 = arith.constant 0 : i32
    %c0_i32_0 = arith.constant 0 : i32
    %c0_i32_1 = arith.constant 0 : i32
    return %c0_i32, %c0_i32_0 : i32, i32
  }
  func.func @transform_4(%arg0: i32, %arg1: i32) -> (i32, i32) {
    %c0_i32 = arith.constant 0 : i32
    %c0_i32_0 = arith.constant 0 : i32
    %c0_i32_1 = arith.constant 0 : i32
    return %c0_i32, %c0_i32_0 : i32, i32
  }
  func.func @transform_5(%arg0: i32, %arg1: i32) -> (i32, i32, i32) {
    %c0_i32 = arith.constant 0 : i32
    %c0_i32_0 = arith.constant 0 : i32
    return %arg0, %c0_i32, %arg1 : i32, i32, i32
  }
}

</mosaic_0001>

<llo_original>
// kernel: conv_bn_relu_forward.3
$region0: #{conv_bn_relu_forward.3}
  #allocation0 [shape = 'u32[]', space=smem, size = 0x4, offset = 0x4, fixed_abs, tag = 'smem constant byte address 0x4 - core index']
  #allocation1 [shape = 'u32[144,128]{1,0:T(1,128)}', space=vmem, size = 0x12000, scoped, tag = 'internal scratch']
  %s0 = inlined_call_operand.vmem [shape: bf16[2,18,18,4], index: 0, kind: input, shape index: {}]
  %s1 = inlined_call_operand.vmem [shape: bf16[2,1,2,18,4], index: 1, kind: input, shape index: {}]
  %s2 = inlined_call_operand.vmem [shape: bf16[9,8,4], index: 2, kind: input, shape index: {}]
  %s3 = inlined_call_operand.vmem [shape: f32[8,1], index: 3, kind: input, shape index: {}]
  %s4 = inlined_call_operand.vmem [shape: f32[8,1], index: 4, kind: input, shape index: {}]
  %s5 = inlined_call_operand.vmem [shape: f32[2,8,256], index: 5, kind: output, shape index: {}]
  %s6 = sld [smem:[#allocation0]]
  $region53: #{conv_bn_relu_forward.3} parent=0
    _
  %s8 = ssub.s32 1, %s6
  %s9 = scalar_select 0, %s8, %s6
  loop: start=0, step=1, limit=4
  $region2: #{conv_bn_relu_forward.3} parent=0 // loop_pre_header
    _
  $region3: #{conv_bn_relu_forward.3} parent=0 // loop_header
    %s11 = sphi 0, %s15
    %p12 = scmp.ge.s32.totalorder %s11, 4
    %s18 = sphi 0, %s30
    %s19 = sphi 0, %s26
    %s20 = sphi 0, %s18
    %s21 = sphi 0, %s19
    %s22 = sphi 0, %s20
    %s23 = sphi 0, %s21
    %s35 = sphi 0, %s37
    %s38 = sphi 0, %s35
    %s39 = sphi 0, %s38
    %s55 = sphi 0, %s39
    %s63 = sphi 0, %s65
    %s66 = sphi 0, %s63
    %s67 = sphi 0, %s66
    %s83 = sphi 0, %s67
    %s87 = sphi 0, %s87
    %s89 = sphi 0, %s87
    %s90 = sphi 0, %s89
    %s104 = sphi 0, %s90
    %s108 = sphi 0, %s108
    %s110 = sphi 0, %s108
    %s111 = sphi 0, %s110
    %s125 = sphi 0, %s111
    %s129 = sphi 0, %s129
    %s131 = sphi 0, %s129
    %s132 = sphi 0, %s131
    %s146 = sphi 0, %s132
    %s154 = sphi 0, %s156
    %s157 = sphi 0, %s154
    %s158 = sphi 0, %s157
    %s174 = sphi 0, %s158
  $region4: #{conv_bn_relu_forward.3} parent=0 // loop_header_branch
    %14 = sbr.rel (%p12) target = $region8
  $region5: #{conv_bn_relu_forward.3} parent=0 // loop_body
    %s16 = ssub.s32 %s11, 1
    %s17 = ssub.s32 %s11, 2
    %s24 = sadd.s32 1, %s19
    %p25 = scmp.ge.s32.totalorder %s24, 1
    %s26 = scalar_select %p25, 0, %s24
    %s27 = sadd.s32 1, %s18
    %s28 = scalar_select %p25, %s27, %s18
    %p29 = scmp.ge.s32.totalorder %s28, 2
    %s30 = scalar_select %p29, 0, %s28
    %s31 = ssub.s32 %s18, %s30
    %s32 = ssub.s32 %s19, %s26
    %s33 = sor.u32 %s31, %s32
    %p34 = scmp.eq.s32.totalorder %s33, 0
    %s36 = sadd.s32 %s35, 1
    %s37 = scalar_select %p34, %s35, %s36
    %p40 = pneg %p34
    %p41 = scmp.eq.s32.totalorder %s11, 1
    %p42 = por %p40, %p41
    %p43 = scmp.ne.s32.totalorder %s35, %s38
    %p44 = scmp.eq.s32.totalorder %s11, 0
    %p45 = por %p43, %p44
    %p46 = scmp.ne.s32.totalorder %s35, %s38
    %p47 = scmp.eq.s32.totalorder %s16, 1
    %p48 = por %p46, %p47
    %p49 = scmp.ne.s32.totalorder %s38, %s39
    %p50 = scmp.eq.s32.totalorder %s16, 0
    %p51 = por %p49, %p50
    %p52 = scmp.ne.s32.totalorder %s38, %s39
    %p53 = scmp.eq.s32.totalorder %s17, 1
    %p54 = por %p52, %p53
    %p56 = scmp.ne.s32.totalorder %s39, %s55
    %p57 = scmp.eq.s32.totalorder %s17, 0
    %p58 = por %p56, %p57
    %s59 = ssub.s32 %s18, %s30
    %s60 = ssub.s32 %s19, %s26
    %s61 = sor.u32 %s59, %s60
    %p62 = scmp.eq.s32.totalorder %s61, 0
    %s64 = sadd.s32 %s63, 1
    %s65 = scalar_select %p62, %s63, %s64
    %p68 = pneg %p62
    %p69 = scmp.eq.s32.totalorder %s11, 1
    %p70 = por %p68, %p69
    %p71 = scmp.ne.s32.totalorder %s63, %s66
    %p72 = scmp.eq.s32.totalorder %s11, 0
    %p73 = por %p71, %p72
    %p74 = scmp.ne.s32.totalorder %s63, %s66
    %p75 = scmp.eq.s32.totalorder %s16, 1
    %p76 = por %p74, %p75
    %p77 = scmp.ne.s32.totalorder %s66, %s67
    %p78 = scmp.eq.s32.totalorder %s16, 0
    %p79 = por %p77, %p78
    %p80 = scmp.ne.s32.totalorder %s66, %s67
    %p81 = scmp.eq.s32.totalorder %s17, 1
    %p82 = por %p80, %p81
    %p84 = scmp.ne.s32.totalorder %s67, %s83
    %p85 = scmp.eq.s32.totalorder %s17, 0
    %p86 = por %p84, %p85
    %s88 = sadd.s32 %s87, 1
    %p91 = scmp.eq.s32.totalorder %s11, 1
    %p92 = scmp.ne.s32.totalorder %s87, %s89
    %p93 = scmp.eq.s32.totalorder %s11, 0
    %p94 = por %p92, %p93
    %p95 = scmp.ne.s32.totalorder %s87, %s89
    %p96 = scmp.eq.s32.totalorder %s16, 1
    %p97 = por %p95, %p96
    %p98 = scmp.ne.s32.totalorder %s89, %s90
    %p99 = scmp.eq.s32.totalorder %s16, 0
    %p100 = por %p98, %p99
    %p101 = scmp.ne.s32.totalorder %s89, %s90
    %p102 = scmp.eq.s32.totalorder %s17, 1
    %p103 = por %p101, %p102
    %p105 = scmp.ne.s32.totalorder %s90, %s104
    %p106 = scmp.eq.s32.totalorder %s17, 0
    %p107 = por %p105, %p106
    %s109 = sadd.s32 %s108, 1
    %p112 = scmp.eq.s32.totalorder %s11, 1
    %p113 = scmp.ne.s32.totalorder %s108, %s110
    %p114 = scmp.eq.s32.totalorder %s11, 0
    %p115 = por %p113, %p114
    %p116 = scmp.ne.s32.totalorder %s108, %s110
    %p117 = scmp.eq.s32.totalorder %s16, 1
    %p118 = por %p116, %p117
    %p119 = scmp.ne.s32.totalorder %s110, %s111
    %p120 = scmp.eq.s32.totalorder %s16, 0
    %p121 = por %p119, %p120
    %p122 = scmp.ne.s32.totalorder %s110, %s111
    %p123 = scmp.eq.s32.totalorder %s17, 1
    %p124 = por %p122, %p123
    %p126 = scmp.ne.s32.totalorder %s111, %s125
    %p127 = scmp.eq.s32.totalorder %s17, 0
    %p128 = por %p126, %p127
    %s130 = sadd.s32 %s129, 1
    %p133 = scmp.eq.s32.totalorder %s11, 1
    %p134 = scmp.ne.s32.totalorder %s129, %s131
    %p135 = scmp.eq.s32.totalorder %s11, 0
    %p136 = por %p134, %p135
    %p137 = scmp.ne.s32.totalorder %s129, %s131
    %p138 = scmp.eq.s32.totalorder %s16, 1
    %p139 = por %p137, %p138
    %p140 = scmp.ne.s32.totalorder %s131, %s132
    %p141 = scmp.eq.s32.totalorder %s16, 0
    %p142 = por %p140, %p141
    %p143 = scmp.ne.s32.totalorder %s131, %s132
    %p144 = scmp.eq.s32.totalorder %s17, 1
    %p145 = por %p143, %p144
    %p147 = scmp.ne.s32.totalorder %s132, %s146
    %p148 = scmp.eq.s32.totalorder %s17, 0
    %p149 = por %p147, %p148
    %s150 = ssub.s32 %s18, %s30
    %s151 = ssub.s32 %s19, %s26
    %s152 = sor.u32 %s150, %s151
    %p153 = scmp.eq.s32.totalorder %s152, 0
    %s155 = sadd.s32 %s154, 1
    %s156 = scalar_select %p153, %s154, %s155
    %p159 = pneg %p153
    %p160 = scmp.eq.s32.totalorder %s11, 1
    %p161 = por %p159, %p160
    %p162 = scmp.ne.s32.totalorder %s154, %s157
    %p163 = scmp.eq.s32.totalorder %s11, 0
    %p164 = por %p162, %p163
    %p165 = scmp.ne.s32.totalorder %s154, %s157
    %p166 = scmp.eq.s32.totalorder %s16, 1
    %p167 = por %p165, %p166
    %p168 = scmp.ne.s32.totalorder %s157, %s158
    %p169 = scmp.eq.s32.totalorder %s16, 0
    %p170 = por %p168, %p169
    %p171 = scmp.ne.s32.totalorder %s157, %s158
    %p172 = scmp.eq.s32.totalorder %s17, 1
    %p173 = por %p171, %p172
    %p175 = scmp.ne.s32.totalorder %s158, %s174
    %p176 = scmp.eq.s32.totalorder %s17, 0
    %p177 = por %p175, %p176
    %p178 = scmp.le.s32.totalorder 1, %s11
    %p179 = scmp.lt.s32.totalorder %s11, 3
    %p180 = pnand %p178, %p179
    %p181 = pneg %p180
    // Predicated region
    $region9: #{conv_bn_relu_forward.3} parent=5 // pred_check
      _
    $region10: #{conv_bn_relu_forward.3} parent=5 // pred_check_branch
      %183 = sbr.rel (%p180) target = $region12
    $region11: #{conv_bn_relu_forward.3} parent=5 // pred_region
      %s184 = ssub.s32 %s11, 1
      // Predicated region
      $region13: #{conv_bn_relu_forward.3} parent=11 // pred_check
        %p185 = pneg %p100
      $region14: #{conv_bn_relu_forward.3} parent=11 // pred_check_branch
        %187 = sbr.rel (%p185) target = $region16
      $region15: #{conv_bn_relu_forward.3} parent=11 // pred_region
        _
      $region16: #{conv_bn_relu_forward.3} parent=11 // pred_fallthru
        _
      // Predicated region
      $region17: #{conv_bn_relu_forward.3} parent=11 // pred_check
        %p188 = pneg %p121
      $region18: #{conv_bn_relu_forward.3} parent=11 // pred_check_branch
        %190 = sbr.rel (%p188) target = $region20
      $region19: #{conv_bn_relu_forward.3} parent=11 // pred_region
        _
      $region20: #{conv_bn_relu_forward.3} parent=11 // pred_fallthru
        _
      // Predicated region
      $region21: #{conv_bn_relu_forward.3} parent=11 // pred_check
        %p191 = pneg %p142
      $region22: #{conv_bn_relu_forward.3} parent=11 // pred_check_branch
        %193 = sbr.rel (%p191) target = $region24
      $region23: #{conv_bn_relu_forward.3} parent=11 // pred_region
        _
      $region24: #{conv_bn_relu_forward.3} parent=11 // pred_fallthru
        _
    $region12: #{conv_bn_relu_forward.3} parent=5 // pred_fallthru
      _
    %p194 = scmp.lt.s32.totalorder %s11, 2
    // Predicated region
    $region25: #{conv_bn_relu_forward.3} parent=5 // pred_check
      %p195 = pneg %p194
    $region26: #{conv_bn_relu_forward.3} parent=5 // pred_check_branch
      %197 = sbr.rel (%p195) target = $region28
    $region27: #{conv_bn_relu_forward.3} parent=5 // pred_region
      // Predicated region
      $region29: #{conv_bn_relu_forward.3} parent=27 // pred_check
        %p198 = pneg %p45
      $region30: #{conv_bn_relu_forward.3} parent=27 // pred_check_branch
        %200 = sbr.rel (%p198) target = $region32
      $region31: #{conv_bn_relu_forward.3} parent=27 // pred_region
        %s201 = smul.u32 16, %s19
        %s202 = ssub.s32 18, %s201
        %p203 = scmp.lt.s32.totalorder %s202, 16
        %s204 = scalar_select %p203, %s202, 16
        %s205 = smul.u32 64, %s204
        %s206 = smul.u32 %s205, 3
        %p207 = scmp.lt.s32.totalorder %s18, 1
        %s208 = scalar_select %p207, %s18, 1
        %p209 = scmp.lt.s32.totalorder %s201, 17
        %s210 = scalar_select %p209, %s201, 17
        %s211 = smul.addr %s210, 3
        %s212 = smul.addr %s208, 54
        %s213 = sadd.s32 %s211, %s212
        %s214 = smul.addr %s213, 4
        %s215 = scalar_lea.vmem %s0, %s214
        %s216 = smul.u32 16, %s19
        %s217 = ssub.s32 18, %s216
        %p218 = scmp.lt.s32.totalorder %s217, 16
        %s219 = scalar_select %p218, %s217, 16
        %s220 = smul.u32 64, %s219
        %s221 = smul.u32 %s220, 3
      $region32: #{conv_bn_relu_forward.3} parent=27 // pred_fallthru
        _
      // Predicated region
      $region33: #{conv_bn_relu_forward.3} parent=27 // pred_check
        %p222 = pneg %p73
      $region34: #{conv_bn_relu_forward.3} parent=27 // pred_check_branch
        %224 = sbr.rel (%p222) target = $region36
      $region35: #{conv_bn_relu_forward.3} parent=27 // pred_region
        %p225 = scmp.lt.s32.totalorder %s18, 1
        %s226 = scalar_select %p225, %s18, 1
        %p227 = scmp.lt.s32.totalorder %s19, 0
        %s228 = scalar_select %p227, %s19, 0
        %s229 = smul.addr %s228, 6
        %s230 = smul.addr %s226, 6
        %s231 = sadd.s32 %s229, %s230
        %s232 = smul.addr %s231, 4
        %s233 = scalar_lea.vmem %s1, %s232
      $region36: #{conv_bn_relu_forward.3} parent=27 // pred_fallthru
        _
    $region28: #{conv_bn_relu_forward.3} parent=5 // pred_fallthru
      _
    %p234 = scmp.le.s32.totalorder 1, %s11
    %p235 = scmp.lt.s32.totalorder %s11, 3
    %p236 = pnand %p234, %p235
    %p237 = pneg %p236
    // Predicated region
    $region37: #{conv_bn_relu_forward.3} parent=5 // pred_check
      _
    $region38: #{conv_bn_relu_forward.3} parent=5 // pred_check_branch
      %239 = sbr.rel (%p236) target = $region40
    $region39: #{conv_bn_relu_forward.3} parent=5 // pred_region
      %s240 = ssub.s32 %s11, 1
      %s241 = smul.u32 16, %s21
      %s242 = ssub.s32 18, %s241
      %p243 = scmp.lt.s32.totalorder %s242, 16
      %s244 = scalar_select %p243, %s242, 16
      %s245 = smul.u32 64, %s244
      %s246 = smul.u32 %s245, 3
      %p247 = scmp.lt.s32.totalorder %s20, 1
      %s248 = scalar_select %p247, %s20, 1
      %p249 = scmp.lt.s32.totalorder %s241, 17
      %s250 = scalar_select %p249, %s241, 17
      %s251 = smul.addr %s250, 3
      %s252 = smul.addr %s248, 54
      %s253 = sadd.s32 %s251, %s252
      %s254 = smul.addr %s253, 4
      %s255 = scalar_lea.vmem %s0, %s254
      %p256 = pneg %p51
      %p257 = pneg %p48
      %p258 = scmp.lt.s32.totalorder %s20, 1
      %s259 = scalar_select %p258, %s20, 1
      %p260 = scmp.lt.s32.totalorder %s21, 0
      %s261 = scalar_select %p260, %s21, 0
      %s262 = smul.addr %s261, 6
      %s263 = smul.addr %s259, 6
      %s264 = sadd.s32 %s262, %s263
      %s265 = smul.addr %s264, 4
      %s266 = scalar_lea.vmem %s1, %s265
      %p267 = pneg %p79
      %p268 = pneg %p76
      %p269 = pneg %p100
      %p270 = pneg %p97
      %p271 = pneg %p121
      %p272 = pneg %p118
      %p273 = pneg %p142
      %p274 = pneg %p139
      %p275 = pneg %p170
      %p276 = pneg %p167
      %s277 = smul.u32 2, %s21
      %p278 = scmp.lt.s32.totalorder %s20, 1
      %s279 = scalar_select %p278, %s20, 1
      %p280 = scmp.lt.s32.totalorder %s277, 1
      %s281 = scalar_select %p280, %s277, 1
      %s282 = smul.addr %s279, 2
      %s283 = sadd.s32 %s281, %s282
      %s284 = smul.addr %s283, 8
      %s285 = scalar_lea.vmem %s5, %s284
      %s286 = smul.u32 16, %s21
      %s287 = ssub.s32 18, %s286
      %p288 = scmp.lt.s32.totalorder %s287, 16
      %s289 = scalar_select %p288, %s287, 16
      %s290 = smul.u32 64, %s289
      %s291 = smul.u32 %s290, 3
      %p292 = scmp.lt.s32.totalorder %s20, 1
      %s293 = scalar_select %p292, %s20, 1
      %p294 = scmp.lt.s32.totalorder %s286, 17
      %s295 = scalar_select %p294, %s286, 17
      %s296 = smul.addr %s295, 3
      %s297 = smul.addr %s293, 54
      %s298 = sadd.s32 %s296, %s297
      %s299 = smul.addr %s298, 4
      %s300 = scalar_lea.vmem %s0, %s299
      %s301 = smul.u32 16, %s21
      %s302 = ssub.s32 18, %s301
      %p303 = scmp.lt.s32.totalorder %s302, 16
      %s304 = scalar_select %p303, %s302, 16
      %s305 = smul.u32 64, %s304
      %s306 = smul.u32 %s305, 3
      %p307 = scmp.lt.s32.totalorder %s20, 1
      %s308 = scalar_select %p307, %s20, 1
      %p309 = scmp.lt.s32.totalorder %s21, 0
      %s310 = scalar_select %p309, %s21, 0
      %s311 = smul.addr %s310, 6
      %s312 = smul.addr %s308, 6
      %s313 = sadd.s32 %s311, %s312
      %s314 = smul.addr %s313, 4
      %s315 = scalar_lea.vmem %s1, %s314
      %s316 = smul.u32 2, %s21
      %p317 = scmp.lt.s32.totalorder %s20, 1
      %s318 = scalar_select %p317, %s20, 1
      %p319 = scmp.lt.s32.totalorder %s316, 1
      %s320 = scalar_select %p319, %s316, 1
      %s321 = smul.addr %s318, 2
      %s322 = sadd.s32 %s320, %s321
      %s323 = smul.addr %s322, 8
      %s324 = scalar_lea.vmem %s5, %s323
      %s325 = smul.u32 2, %s21
      %v327 = vld [vmem:[%s300] sm:$0xf]
      %v328 = vld [vmem:[%s300 + $0x4] sm:$0xf]
      %v329 = vld [vmem:[%s300 + $0x8] sm:$0x1]
      %v330 = vld [vmem:[%s300 + $0xc] sm:$0xf]
      %v331 = vld [vmem:[%s300 + $0x10] sm:$0xf]
      %v332 = vld [vmem:[%s300 + $0x14] sm:$0x1]
      %v333 = vld [vmem:[%s300 + $0x18] sm:$0xf]
      %v334 = vld [vmem:[%s300 + $0x1c] sm:$0xf]
      %v335 = vld [vmem:[%s300 + $0x20] sm:$0x1]
      %v336 = vld [vmem:[%s300 + $0x24] sm:$0xf]
      %v337 = vld [vmem:[%s300 + $0x28] sm:$0xf]
      %v338 = vld [vmem:[%s300 + $0x2c] sm:$0x1]
      %v339 = vld [vmem:[%s300 + $0x30] sm:$0xf]
      %v340 = vld [vmem:[%s300 + $0x34] sm:$0xf]
      %v341 = vld [vmem:[%s300 + $0x38] sm:$0x1]
      %v342 = vld [vmem:[%s300 + $0x3c] sm:$0xf]
      %v343 = vld [vmem:[%s300 + $0x40] sm:$0xf]
      %v344 = vld [vmem:[%s300 + $0x44] sm:$0x1]
      %v345 = vld [vmem:[%s300 + $0x48] sm:$0xf]
      %v346 = vld [vmem:[%s300 + $0x4c] sm:$0xf]
      %v347 = vld [vmem:[%s300 + $0x50] sm:$0x1]
      %v348 = vld [vmem:[%s300 + $0x54] sm:$0xf]
      %v349 = vld [vmem:[%s300 + $0x58] sm:$0xf]
      %v350 = vld [vmem:[%s300 + $0x5c] sm:$0x1]
      %v351 = vld [vmem:[%s300 + $0x60] sm:$0xf]
      %v352 = vld [vmem:[%s300 + $0x64] sm:$0xf]
      %v353 = vld [vmem:[%s300 + $0x68] sm:$0x1]
      %v354 = vld [vmem:[%s300 + $0x6c] sm:$0xf]
      %v355 = vld [vmem:[%s300 + $0x70] sm:$0xf]
      %v356 = vld [vmem:[%s300 + $0x74] sm:$0x1]
      %v357 = vld [vmem:[%s300 + $0x78] sm:$0xf]
      %v358 = vld [vmem:[%s300 + $0x7c] sm:$0xf]
      %v359 = vld [vmem:[%s300 + $0x80] sm:$0x1]
      %v360 = vld [vmem:[%s300 + $0x84] sm:$0xf]
      %v361 = vld [vmem:[%s300 + $0x88] sm:$0xf]
      %v362 = vld [vmem:[%s300 + $0x8c] sm:$0x1]
      %v363 = vld [vmem:[%s300 + $0x90] sm:$0xf]
      %v364 = vld [vmem:[%s300 + $0x94] sm:$0xf]
      %v365 = vld [vmem:[%s300 + $0x98] sm:$0x1]
      %v366 = vld [vmem:[%s300 + $0x9c] sm:$0xf]
      %v367 = vld [vmem:[%s300 + $0xa0] sm:$0xf]
      %v368 = vld [vmem:[%s300 + $0xa4] sm:$0x1]
      %v369 = vld [vmem:[%s300 + $0xa8] sm:$0xf]
      %v370 = vld [vmem:[%s300 + $0xac] sm:$0xf]
      %v371 = vld [vmem:[%s300 + $0xb0] sm:$0x1]
      %v372 = vld [vmem:[%s300 + $0xb4] sm:$0xf]
      %v373 = vld [vmem:[%s300 + $0xb8] sm:$0xf]
      %v374 = vld [vmem:[%s300 + $0xbc] sm:$0x1]
      %v375 = vld [vmem:[%s315] sm:$0xf]
      %v376 = vld [vmem:[%s315 + $0x4] sm:$0xf]
      %v377 = vld [vmem:[%s315 + $0x8] sm:$0x1]
      %v378 = vld [vmem:[%s315 + $0xc] sm:$0xf]
      %v379 = vld [vmem:[%s315 + $0x10] sm:$0xf]
      %v380 = vld [vmem:[%s315 + $0x14] sm:$0x1]
      %v381 = vld [vmem:[%s2] sm:$0xf]
      %s382 = scalar_lea.vmem %s2, 12
      %v383 = vld [vmem:[%s382] sm:$0xf]
      %v416 = vunpack.c.l.b16 %v330
      %v417 = vunpack.c.l.b16 %v331
      %v418 = vunpack.c.l.b16 %v333
      %v419 = vunpack.c.l.b16 %v334
      %v420 = vunpack.c.l.b16 %v336
      %v421 = vunpack.c.l.b16 %v337
      %v422 = vunpack.c.l.b16 %v339
      %v423 = vunpack.c.l.b16 %v340
      %v424 = vunpack.c.l.b16 %v342
      %v425 = vunpack.c.l.b16 %v343
      %v426 = vunpack.c.l.b16 %v345
      %v427 = vunpack.c.l.b16 %v346
      %v428 = vunpack.c.l.b16 %v348
      %v429 = vunpack.c.l.b16 %v349
      %v430 = vunpack.c.l.b16 %v351
      %v431 = vunpack.c.l.b16 %v352
      %v432 = vunpack.c.l.b16 %v354
      %v433 = vunpack.c.l.b16 %v355
      %v434 = vunpack.c.l.b16 %v357
      %v435 = vunpack.c.l.b16 %v358
      %v436 = vunpack.c.l.b16 %v360
      %v437 = vunpack.c.l.b16 %v361
      %v438 = vunpack.c.l.b16 %v363
      %v439 = vunpack.c.l.b16 %v364
      %v440 = vunpack.c.l.b16 %v366
      %v441 = vunpack.c.l.b16 %v367
      %v442 = vunpack.c.l.b16 %v369
      %v443 = vunpack.c.l.b16 %v370
      %v444 = vunpack.c.l.b16 %v372
      %v445 = vunpack.c.l.b16 %v373
      %v446 = vunpack.c.l.b16 %v375
      %v447 = vunpack.c.l.b16 %v376
      %v448 = vpack.c.b16 %v417, %v416
      %v449 = vpack.c.b16 %v419, %v418
      %v450 = vpack.c.b16 %v421, %v420
      %v451 = vpack.c.b16 %v423, %v422
      %v452 = vpack.c.b16 %v425, %v424
      %v453 = vpack.c.b16 %v427, %v426
      %v454 = vpack.c.b16 %v429, %v428
      %v455 = vpack.c.b16 %v431, %v430
      %v456 = vpack.c.b16 %v433, %v432
      %v457 = vpack.c.b16 %v435, %v434
      %v458 = vpack.c.b16 %v437, %v436
      %v459 = vpack.c.b16 %v439, %v438
      %v460 = vpack.c.b16 %v441, %v440
      %v461 = vpack.c.b16 %v443, %v442
      %v462 = vpack.c.b16 %v445, %v444
      %v463 = vpack.c.b16 %v447, %v446
      %vm464 = vcmask 31744
      %v466 = vsel %vm464, %v383, 0
      %v469 = vsel %vm464, %v448, 0
      %v472 = vsel %vm464, %v449, 0
      %v475 = vsel %vm464, %v450, 0
      %v478 = vsel %vm464, %v451, 0
      %v481 = vsel %vm464, %v452, 0
      %v484 = vsel %vm464, %v453, 0
      %v487 = vsel %vm464, %v454, 0
      %v490 = vsel %vm464, %v455, 0
      %v493 = vsel %vm464, %v456, 0
      %v496 = vsel %vm464, %v457, 0
      %v499 = vsel %vm464, %v458, 0
      %v502 = vsel %vm464, %v459, 0
      %v505 = vsel %vm464, %v460, 0
      %v508 = vsel %vm464, %v461, 0
      %v511 = vsel %vm464, %v462, 0
      %v514 = vsel %vm464, %v463, 0
      %516 = vmatprep.subr.bf16.mxu0 0
      %517 = vmatpush1.bf16.xpose.msra.mxu0 %v490
      %518 = vmatprep.subr.bf16.mxu0 0
      %519 = vmatpush1.bf16.xpose.msra.mxu0 %v487
      %520 = vmatprep.subr.bf16.mxu0 0
      %521 = vmatpush1.bf16.xpose.msra.mxu0 %v484
      %522 = vmatprep.subr.bf16.mxu0 0
      %523 = vmatpush1.bf16.xpose.msra.mxu0 %v481
      %524 = vmatprep.subr.bf16.mxu0 0
      %525 = vmatpush1.bf16.xpose.msra.mxu0 %v478
      %526 = vmatprep.subr.bf16.mxu0 0
      %527 = vmatpush1.bf16.xpose.msra.mxu0 %v475
      %528 = vmatprep.subr.bf16.mxu0 0
      %529 = vmatpush1.bf16.xpose.msra.mxu0 %v472
      %530 = vmatprep.subr.bf16.mxu0 0
      %531 = vmatpush1.bf16.xpose.msra.mxu0 %v469
      %532 = vmatprep.subr.bf16.mxu0 0
      %533 = vmatpush2.bf16.xpose.msra.mxu0 %v514
      %534 = vmatprep.subr.bf16.mxu0 0
      %535 = vmatpush2.bf16.xpose.msra.mxu0 %v511
      %536 = vmatprep.subr.bf16.mxu0 0
      %537 = vmatpush2.bf16.xpose.msra.mxu0 %v508
      %538 = vmatprep.subr.bf16.mxu0 0
      %539 = vmatpush2.bf16.xpose.msra.mxu0 %v505
      %540 = vmatprep.subr.bf16.mxu0 0
      %541 = vmatpush2.bf16.xpose.msra.mxu0 %v502
      %542 = vmatprep.subr.bf16.mxu0 0
      %543 = vmatpush2.bf16.xpose.msra.mxu0 %v499
      %544 = vmatprep.subr.bf16.mxu0 0
      %545 = vmatpush2.bf16.xpose.msra.mxu0 %v496
      %546 = vmatprep.subr.bf16.mxu0 0
      %547 = vmatpush2.bf16.xpose.msra.mxu0 %v493
      %548 = vmatprep.mubr.bf16.mxu0 0
      %549 = vmatmul.mubr.bf16.gmra.mxu0 %v466
      %v550 = vpop.f32.mrf.mxu0
      %v551 = vadd.f32 0.0, %v550
      %v552 = vpop.f32.mrf.mxu0
      %v553 = vadd.f32 0.0, %v552
      %v554 = vpop.f32.mrf.mxu0
      %v555 = vpop.f32.mrf.mxu0
      %556 = vdwg.mxu0
      %v559 = vunpack.c.l.b16 %v327
      %v560 = vunpack.c.l.b16 %v328
      %v561 = vpack.c.b16 %v560, %v559
      %v563 = vsel %vm464, %v381, 0
      %v566 = vsel %vm464, %v561, 0
      %568 = vmatprep.subr.bf16.mxu0 0
      %569 = vmatpush1.bf16.xpose.msra.mxu0 %v487
      %570 = vmatprep.subr.bf16.mxu0 0
      %571 = vmatpush1.bf16.xpose.msra.mxu0 %v484
      %572 = vmatprep.subr.bf16.mxu0 0
      %573 = vmatpush1.bf16.xpose.msra.mxu0 %v481
      %574 = vmatprep.subr.bf16.mxu0 0
      %575 = vmatpush1.bf16.xpose.msra.mxu0 %v478
      %576 = vmatprep.subr.bf16.mxu0 0
      %577 = vmatpush1.bf16.xpose.msra.mxu0 %v475
      %578 = vmatprep.subr.bf16.mxu0 0
      %579 = vmatpush1.bf16.xpose.msra.mxu0 %v472
      %580 = vmatprep.subr.bf16.mxu0 0
      %581 = vmatpush1.bf16.xpose.msra.mxu0 %v469
      %582 = vmatprep.subr.bf16.mxu0 0
      %583 = vmatpush1.bf16.xpose.msra.mxu0 %v566
      %584 = vmatprep.subr.bf16.mxu0 0
      %585 = vmatpush2.bf16.xpose.msra.mxu0 %v511
      %586 = vmatprep.subr.bf16.mxu0 0
      %587 = vmatpush2.bf16.xpose.msra.mxu0 %v508
      %588 = vmatprep.subr.bf16.mxu0 0
      %589 = vmatpush2.bf16.xpose.msra.mxu0 %v505
      %590 = vmatprep.subr.bf16.mxu0 0
      %591 = vmatpush2.bf16.xpose.msra.mxu0 %v502
      %592 = vmatprep.subr.bf16.mxu0 0
      %593 = vmatpush2.bf16.xpose.msra.mxu0 %v499
      %594 = vmatprep.subr.bf16.mxu0 0
      %595 = vmatpush2.bf16.xpose.msra.mxu0 %v496
      %596 = vmatprep.subr.bf16.mxu0 0
      %597 = vmatpush2.bf16.xpose.msra.mxu0 %v493
      %598 = vmatprep.subr.bf16.mxu0 0
      %599 = vmatpush2.bf16.xpose.msra.mxu0 %v490
      %600 = vmatprep.mubr.bf16.mxu0 0
      %601 = vmatmul.mubr.bf16.gmra.mxu0 %v563
      %v602 = vpop.f32.mrf.mxu0
      %v603 = vadd.f32 %v551, %v602
      %v604 = vpop.f32.mrf.mxu0
      %v605 = vadd.f32 %v553, %v604
      %v606 = vpop.f32.mrf.mxu0
      %v607 = vpop.f32.mrf.mxu0
      %608 = vdwg.mxu0
      %s609 = scalar_lea.vmem %s2, 24
      %v610 = vld [vmem:[%s609] sm:$0xf]
      %v613 = vunpack.c.l.b16 %v378
      %v614 = vunpack.c.l.b16 %v379
      %v615 = vpack.c.b16 %v614, %v613
      %v617 = vsel %vm464, %v610, 0
      %v620 = vsel %vm464, %v615, 0
      %622 = vmatprep.subr.bf16.mxu0 0
      %623 = vmatpush1.bf16.xpose.msra.mxu0 %v493
      %624 = vmatprep.subr.bf16.mxu0 0
      %625 = vmatpush1.bf16.xpose.msra.mxu0 %v490
      %626 = vmatprep.subr.bf16.mxu0 0
      %627 = vmatpush1.bf16.xpose.msra.mxu0 %v487
      %628 = vmatprep.subr.bf16.mxu0 0
      %629 = vmatpush1.bf16.xpose.msra.mxu0 %v484
      %630 = vmatprep.subr.bf16.mxu0 0
      %631 = vmatpush1.bf16.xpose.msra.mxu0 %v481
      %632 = vmatprep.subr.bf16.mxu0 0
      %633 = vmatpush1.bf16.xpose.msra.mxu0 %v478
      %634 = vmatprep.subr.bf16.mxu0 0
      %635 = vmatpush1.bf16.xpose.msra.mxu0 %v475
      %636 = vmatprep.subr.bf16.mxu0 0
      %637 = vmatpush1.bf16.xpose.msra.mxu0 %v472
      %638 = vmatprep.subr.bf16.mxu0 0
      %639 = vmatpush2.bf16.xpose.msra.mxu0 %v620
      %640 = vmatprep.subr.bf16.mxu0 0
      %641 = vmatpush2.bf16.xpose.msra.mxu0 %v514
      %642 = vmatprep.subr.bf16.mxu0 0
      %643 = vmatpush2.bf16.xpose.msra.mxu0 %v511
      %644 = vmatprep.subr.bf16.mxu0 0
      %645 = vmatpush2.bf16.xpose.msra.mxu0 %v508
      %646 = vmatprep.subr.bf16.mxu0 0
      %647 = vmatpush2.bf16.xpose.msra.mxu0 %v505
      %648 = vmatprep.subr.bf16.mxu0 0
      %649 = vmatpush2.bf16.xpose.msra.mxu0 %v502
      %650 = vmatprep.subr.bf16.mxu0 0
      %651 = vmatpush2.bf16.xpose.msra.mxu0 %v499
      %652 = vmatprep.subr.bf16.mxu0 0
      %653 = vmatpush2.bf16.xpose.msra.mxu0 %v496
      %654 = vmatprep.mubr.bf16.mxu0 0
      %655 = vmatmul.mubr.bf16.gmra.mxu0 %v617
      %v656 = vpop.f32.mrf.mxu0
      %v657 = vadd.f32 0.0, %v656
      %v658 = vpop.f32.mrf.mxu0
      %v659 = vadd.f32 0.0, %v658
      %v660 = vpop.f32.mrf.mxu0
      %v661 = vpop.f32.mrf.mxu0
      %662 = vdwg.mxu0
      %v663 = vadd.f32 %v603, %v657
      %v664 = vadd.f32 %v605, %v659
      %vm665 = vsmask.f32 3328
      %vm666 = vsmask.f32 7440
      %vm667 = vmor %vm665, %vm666
      %v669 = vshrl.u32 %v327, 16
      %v671 = vrot.slane %v669, 4
      %v672 = vshll.u32 %v327, 16
      %v674 = vrot.slane %v672, 5
      %v675 = vor.u32 %v671, %v674
      %v676 = vrot.slane %v675, 4
      %v678 = vshll.u32 %v328, 16
      %v680 = vrot.slane %v678, 5
      %v681 = vsel %vm667, %v676, %v680
      %v682 = vshrl.u32 %v328, 16
      %v684 = vrot.slane %v682, 4
      %v685 = vor.u32 %v684, %v680
      %v686 = vrot.slane %v685, 4
      %v688 = vshll.u32 %v329, 16
      %v690 = vrot.slane %v688, 5
      %v691 = vsel %vm667, %v686, %v690
      %v693 = vshrl.u32 %v330, 16
      %v695 = vrot.slane %v693, 4
      %v696 = vshll.u32 %v330, 16
      %v698 = vrot.slane %v696, 5
      %v699 = vor.u32 %v695, %v698
      %v700 = vrot.slane %v699, 4
      %v702 = vshll.u32 %v331, 16
      %v704 = vrot.slane %v702, 5
      %v705 = vsel %vm667, %v700, %v704
      %v706 = vshrl.u32 %v331, 16
      %v708 = vrot.slane %v706, 4
      %v709 = vor.u32 %v708, %v704
      %v710 = vrot.slane %v709, 4
      %v712 = vshll.u32 %v332, 16
      %v714 = vrot.slane %v712, 5
      %v715 = vsel %vm667, %v710, %v714
      %v717 = vshrl.u32 %v333, 16
      %v719 = vrot.slane %v717, 4
      %v720 = vshll.u32 %v333, 16
      %v722 = vrot.slane %v720, 5
      %v723 = vor.u32 %v719, %v722
      %v724 = vrot.slane %v723, 4
      %v726 = vshll.u32 %v334, 16
      %v728 = vrot.slane %v726, 5
      %v729 = vsel %vm667, %v724, %v728
      %v730 = vshrl.u32 %v334, 16
      %v732 = vrot.slane %v730, 4
      %v733 = vor.u32 %v732, %v728
      %v734 = vrot.slane %v733, 4
      %v736 = vshll.u32 %v335, 16
      %v738 = vrot.slane %v736, 5
      %v739 = vsel %vm667, %v734, %v738
      %v741 = vshrl.u32 %v336, 16
      %v743 = vrot.slane %v741, 4
      %v744 = vshll.u32 %v336, 16
      %v746 = vrot.slane %v744, 5
      %v747 = vor.u32 %v743, %v746
      %v748 = vrot.slane %v747, 4
      %v750 = vshll.u32 %v337, 16
      %v752 = vrot.slane %v750, 5
      %v753 = vsel %vm667, %v748, %v752
      %v754 = vshrl.u32 %v337, 16
      %v756 = vrot.slane %v754, 4
      %v757 = vor.u32 %v756, %v752
      %v758 = vrot.slane %v757, 4
      %v760 = vshll.u32 %v338, 16
      %v762 = vrot.slane %v760, 5
      %v763 = vsel %vm667, %v758, %v762
      %v765 = vshrl.u32 %v339, 16
      %v767 = vrot.slane %v765, 4
      %v768 = vshll.u32 %v339, 16
      %v770 = vrot.slane %v768, 5
      %v771 = vor.u32 %v767, %v770
      %v772 = vrot.slane %v771, 4
      %v774 = vshll.u32 %v340, 16
      %v776 = vrot.slane %v774, 5
      %v777 = vsel %vm667, %v772, %v776
      %v778 = vshrl.u32 %v340, 16
      %v780 = vrot.slane %v778, 4
      %v781 = vor.u32 %v780, %v776
      %v782 = vrot.slane %v781, 4
      %v784 = vshll.u32 %v341, 16
      %v786 = vrot.slane %v784, 5
      %v787 = vsel %vm667, %v782, %v786
      %v789 = vshrl.u32 %v342, 16
      %v791 = vrot.slane %v789, 4
      %v792 = vshll.u32 %v342, 16
      %v794 = vrot.slane %v792, 5
      %v795 = vor.u32 %v791, %v794
      %v796 = vrot.slane %v795, 4
      %v798 = vshll.u32 %v343, 16
      %v800 = vrot.slane %v798, 5
      %v801 = vsel %vm667, %v796, %v800
      %v802 = vshrl.u32 %v343, 16
      %v804 = vrot.slane %v802, 4
      %v805 = vor.u32 %v804, %v800
      %v806 = vrot.slane %v805, 4
      %v808 = vshll.u32 %v344, 16
      %v810 = vrot.slane %v808, 5
      %v811 = vsel %vm667, %v806, %v810
      %v813 = vshrl.u32 %v345, 16
      %v815 = vrot.slane %v813, 4
      %v816 = vshll.u32 %v345, 16
      %v818 = vrot.slane %v816, 5
      %v819 = vor.u32 %v815, %v818
      %v820 = vrot.slane %v819, 4
      %v822 = vshll.u32 %v346, 16
      %v824 = vrot.slane %v822, 5
      %v825 = vsel %vm667, %v820, %v824
      %v826 = vshrl.u32 %v346, 16
      %v828 = vrot.slane %v826, 4
      %v829 = vor.u32 %v828, %v824
      %v830 = vrot.slane %v829, 4
      %v832 = vshll.u32 %v347, 16
      %v834 = vrot.slane %v832, 5
      %v835 = vsel %vm667, %v830, %v834
      %v837 = vshrl.u32 %v348, 16
      %v839 = vrot.slane %v837, 4
      %v840 = vshll.u32 %v348, 16
      %v842 = vrot.slane %v840, 5
      %v843 = vor.u32 %v839, %v842
      %v844 = vrot.slane %v843, 4
      %v846 = vshll.u32 %v349, 16
      %v848 = vrot.slane %v846, 5
      %v849 = vsel %vm667, %v844, %v848
      %v850 = vshrl.u32 %v349, 16
      %v852 = vrot.slane %v850, 4
      %v853 = vor.u32 %v852, %v848
      %v854 = vrot.slane %v853, 4
      %v856 = vshll.u32 %v350, 16
      %v858 = vrot.slane %v856, 5
      %v859 = vsel %vm667, %v854, %v858
      %v861 = vshrl.u32 %v351, 16
      %v863 = vrot.slane %v861, 4
      %v864 = vshll.u32 %v351, 16
      %v866 = vrot.slane %v864, 5
      %v867 = vor.u32 %v863, %v866
      %v868 = vrot.slane %v867, 4
      %v870 = vshll.u32 %v352, 16
      %v872 = vrot.slane %v870, 5
      %v873 = vsel %vm667, %v868, %v872
      %v874 = vshrl.u32 %v352, 16
      %v876 = vrot.slane %v874, 4
      %v877 = vor.u32 %v876, %v872
      %v878 = vrot.slane %v877, 4
      %v880 = vshll.u32 %v353, 16
      %v882 = vrot.slane %v880, 5
      %v883 = vsel %vm667, %v878, %v882
      %v885 = vshrl.u32 %v354, 16
      %v887 = vrot.slane %v885, 4
      %v888 = vshll.u32 %v354, 16
      %v890 = vrot.slane %v888, 5
      %v891 = vor.u32 %v887, %v890
      %v892 = vrot.slane %v891, 4
      %v894 = vshll.u32 %v355, 16
      %v896 = vrot.slane %v894, 5
      %v897 = vsel %vm667, %v892, %v896
      %v898 = vshrl.u32 %v355, 16
      %v900 = vrot.slane %v898, 4
      %v901 = vor.u32 %v900, %v896
      %v902 = vrot.slane %v901, 4
      %v904 = vshll.u32 %v356, 16
      %v906 = vrot.slane %v904, 5
      %v907 = vsel %vm667, %v902, %v906
      %v909 = vshrl.u32 %v357, 16
      %v911 = vrot.slane %v909, 4
      %v912 = vshll.u32 %v357, 16
      %v914 = vrot.slane %v912, 5
      %v915 = vor.u32 %v911, %v914
      %v916 = vrot.slane %v915, 4
      %v918 = vshll.u32 %v358, 16
      %v920 = vrot.slane %v918, 5
      %v921 = vsel %vm667, %v916, %v920
      %v922 = vshrl.u32 %v358, 16
      %v924 = vrot.slane %v922, 4
      %v925 = vor.u32 %v924, %v920
      %v926 = vrot.slane %v925, 4
      %v928 = vshll.u32 %v359, 16
      %v930 = vrot.slane %v928, 5
      %v931 = vsel %vm667, %v926, %v930
      %v933 = vshrl.u32 %v360, 16
      %v935 = vrot.slane %v933, 4
      %v936 = vshll.u32 %v360, 16
      %v938 = vrot.slane %v936, 5
      %v939 = vor.u32 %v935, %v938
      %v940 = vrot.slane %v939, 4
      %v942 = vshll.u32 %v361, 16
      %v944 = vrot.slane %v942, 5
      %v945 = vsel %vm667, %v940, %v944
      %v946 = vshrl.u32 %v361, 16
      %v948 = vrot.slane %v946, 4
      %v949 = vor.u32 %v948, %v944
      %v950 = vrot.slane %v949, 4
      %v952 = vshll.u32 %v362, 16
      %v954 = vrot.slane %v952, 5
      %v955 = vsel %vm667, %v950, %v954
      %v957 = vshrl.u32 %v363, 16
      %v959 = vrot.slane %v957, 4
      %v960 = vshll.u32 %v363, 16
      %v962 = vrot.slane %v960, 5
      %v963 = vor.u32 %v959, %v962
      %v964 = vrot.slane %v963, 4
      %v966 = vshll.u32 %v364, 16
      %v968 = vrot.slane %v966, 5
      %v969 = vsel %vm667, %v964, %v968
      %v970 = vshrl.u32 %v364, 16
      %v972 = vrot.slane %v970, 4
      %v973 = vor.u32 %v972, %v968
      %v974 = vrot.slane %v973, 4
      %v976 = vshll.u32 %v365, 16
      %v978 = vrot.slane %v976, 5
      %v979 = vsel %vm667, %v974, %v978
      %v981 = vshrl.u32 %v366, 16
      %v983 = vrot.slane %v981, 4
      %v984 = vshll.u32 %v366, 16
      %v986 = vrot.slane %v984, 5
      %v987 = vor.u32 %v983, %v986
      %v988 = vrot.slane %v987, 4
      %v990 = vshll.u32 %v367, 16
      %v992 = vrot.slane %v990, 5
      %v993 = vsel %vm667, %v988, %v992
      %v994 = vshrl.u32 %v367, 16
      %v996 = vrot.slane %v994, 4
      %v997 = vor.u32 %v996, %v992
      %v998 = vrot.slane %v997, 4
      %v1000 = vshll.u32 %v368, 16
      %v1002 = vrot.slane %v1000, 5
      %v1003 = vsel %vm667, %v998, %v1002
      %v1005 = vshrl.u32 %v369, 16
      %v1007 = vrot.slane %v1005, 4
      %v1008 = vshll.u32 %v369, 16
      %v1010 = vrot.slane %v1008, 5
      %v1011 = vor.u32 %v1007, %v1010
      %v1012 = vrot.slane %v1011, 4
      %v1014 = vshll.u32 %v370, 16
      %v1016 = vrot.slane %v1014, 5
      %v1017 = vsel %vm667, %v1012, %v1016
      %v1018 = vshrl.u32 %v370, 16
      %v1020 = vrot.slane %v1018, 4
      %v1021 = vor.u32 %v1020, %v1016
      %v1022 = vrot.slane %v1021, 4
      %v1024 = vshll.u32 %v371, 16
      %v1026 = vrot.slane %v1024, 5
      %v1027 = vsel %vm667, %v1022, %v1026
      %v1029 = vshrl.u32 %v372, 16
      %v1031 = vrot.slane %v1029, 4
      %v1032 = vshll.u32 %v372, 16
      %v1034 = vrot.slane %v1032, 5
      %v1035 = vor.u32 %v1031, %v1034
      %v1036 = vrot.slane %v1035, 4
      %v1038 = vshll.u32 %v373, 16
      %v1040 = vrot.slane %v1038, 5
      %v1041 = vsel %vm667, %v1036, %v1040
      %v1042 = vshrl.u32 %v373, 16
      %v1044 = vrot.slane %v1042, 4
      %v1045 = vor.u32 %v1044, %v1040
      %v1046 = vrot.slane %v1045, 4
      %v1048 = vshll.u32 %v374, 16
      %v1050 = vrot.slane %v1048, 5
      %v1051 = vsel %vm667, %v1046, %v1050
      %v1053 = vshrl.u32 %v375, 16
      %v1055 = vrot.slane %v1053, 4
      %v1056 = vshll.u32 %v375, 16
      %v1058 = vrot.slane %v1056, 5
      %v1059 = vor.u32 %v1055, %v1058
      %v1060 = vrot.slane %v1059, 4
      %v1062 = vshll.u32 %v376, 16
      %v1064 = vrot.slane %v1062, 5
      %v1065 = vsel %vm667, %v1060, %v1064
      %v1066 = vshrl.u32 %v376, 16
      %v1068 = vrot.slane %v1066, 4
      %v1069 = vor.u32 %v1068, %v1064
      %v1070 = vrot.slane %v1069, 4
      %v1072 = vshll.u32 %v377, 16
      %v1074 = vrot.slane %v1072, 5
      %v1075 = vsel %vm667, %v1070, %v1074
      %v1077 = vshrl.u32 %v378, 16
      %v1079 = vrot.slane %v1077, 4
      %v1080 = vshll.u32 %v378, 16
      %v1082 = vrot.slane %v1080, 5
      %v1083 = vor.u32 %v1079, %v1082
      %v1084 = vrot.slane %v1083, 4
      %v1086 = vshll.u32 %v379, 16
      %v1088 = vrot.slane %v1086, 5
      %v1089 = vsel %vm667, %v1084, %v1088
      %v1090 = vshrl.u32 %v379, 16
      %v1092 = vrot.slane %v1090, 4
      %v1093 = vor.u32 %v1092, %v1088
      %v1094 = vrot.slane %v1093, 4
      %v1096 = vshll.u32 %v380, 16
      %v1098 = vrot.slane %v1096, 5
      %v1099 = vsel %vm667, %v1094, %v1098
      %s1100 = scalar_lea.vmem %s2, 4
      %v1101 = vld [vmem:[%s1100] sm:$0xf]
      %v1102 = vunpack.c.l.b16 %v681
      %v1103 = vunpack.c.l.b16 %v691
      %v1104 = vunpack.c.l.b16 %v705
      %v1105 = vunpack.c.l.b16 %v715
      %v1106 = vunpack.c.l.b16 %v729
      %v1107 = vunpack.c.l.b16 %v739
      %v1108 = vunpack.c.l.b16 %v753
      %v1109 = vunpack.c.l.b16 %v763
      %v1110 = vunpack.c.l.b16 %v777
      %v1111 = vunpack.c.l.b16 %v787
      %v1112 = vunpack.c.l.b16 %v801
      %v1113 = vunpack.c.l.b16 %v811
      %v1114 = vunpack.c.l.b16 %v825
      %v1115 = vunpack.c.l.b16 %v835
      %v1116 = vunpack.c.l.b16 %v849
      %v1117 = vunpack.c.l.b16 %v859
      %v1118 = vunpack.c.l.b16 %v873
      %v1119 = vunpack.c.l.b16 %v883
      %v1120 = vunpack.c.l.b16 %v897
      %v1121 = vunpack.c.l.b16 %v907
      %v1122 = vunpack.c.l.b16 %v921
      %v1123 = vunpack.c.l.b16 %v931
      %v1124 = vunpack.c.l.b16 %v945
      %v1125 = vunpack.c.l.b16 %v955
      %v1126 = vunpack.c.l.b16 %v969
      %v1127 = vunpack.c.l.b16 %v979
      %v1128 = vunpack.c.l.b16 %v993
      %v1129 = vunpack.c.l.b16 %v1003
      %v1130 = vunpack.c.l.b16 %v1017
      %v1131 = vunpack.c.l.b16 %v1027
      %v1132 = vunpack.c.l.b16 %v1041
      %v1133 = vunpack.c.l.b16 %v1051
      %v1134 = vpack.c.b16 %v1103, %v1102
      %v1135 = vpack.c.b16 %v1105, %v1104
      %v1136 = vpack.c.b16 %v1107, %v1106
      %v1137 = vpack.c.b16 %v1109, %v1108
      %v1138 = vpack.c.b16 %v1111, %v1110
      %v1139 = vpack.c.b16 %v1113, %v1112
      %v1140 = vpack.c.b16 %v1115, %v1114
      %v1141 = vpack.c.b16 %v1117, %v1116
      %v1142 = vpack.c.b16 %v1119, %v1118
      %v1143 = vpack.c.b16 %v1121, %v1120
      %v1144 = vpack.c.b16 %v1123, %v1122
      %v1145 = vpack.c.b16 %v1125, %v1124
      %v1146 = vpack.c.b16 %v1127, %v1126
      %v1147 = vpack.c.b16 %v1129, %v1128
      %v1148 = vpack.c.b16 %v1131, %v1130
      %v1149 = vpack.c.b16 %v1133, %v1132
      %v1151 = vsel %vm464, %v1101, 0
      %v1154 = vsel %vm464, %v1134, 0
      %v1157 = vsel %vm464, %v1135, 0
      %v1160 = vsel %vm464, %v1136, 0
      %v1163 = vsel %vm464, %v1137, 0
      %v1166 = vsel %vm464, %v1138, 0
      %v1169 = vsel %vm464, %v1139, 0
      %v1172 = vsel %vm464, %v1140, 0
      %v1175 = vsel %vm464, %v1141, 0
      %v1178 = vsel %vm464, %v1142, 0
      %v1181 = vsel %vm464, %v1143, 0
      %v1184 = vsel %vm464, %v1144, 0
      %v1187 = vsel %vm464, %v1145, 0
      %v1190 = vsel %vm464, %v1146, 0
      %v1193 = vsel %vm464, %v1147, 0
      %v1196 = vsel %vm464, %v1148, 0
      %v1199 = vsel %vm464, %v1149, 0
      %1201 = vmatprep.subr.bf16.mxu0 0
      %1202 = vmatpush1.bf16.xpose.msra.mxu0 %v1175
      %1203 = vmatprep.subr.bf16.mxu0 0
      %1204 = vmatpush1.bf16.xpose.msra.mxu0 %v1172
      %1205 = vmatprep.subr.bf16.mxu0 0
      %1206 = vmatpush1.bf16.xpose.msra.mxu0 %v1169
      %1207 = vmatprep.subr.bf16.mxu0 0
      %1208 = vmatpush1.bf16.xpose.msra.mxu0 %v1166
      %1209 = vmatprep.subr.bf16.mxu0 0
      %1210 = vmatpush1.bf16.xpose.msra.mxu0 %v1163
      %1211 = vmatprep.subr.bf16.mxu0 0
      %1212 = vmatpush1.bf16.xpose.msra.mxu0 %v1160
      %1213 = vmatprep.subr.bf16.mxu0 0
      %1214 = vmatpush1.bf16.xpose.msra.mxu0 %v1157
      %1215 = vmatprep.subr.bf16.mxu0 0
      %1216 = vmatpush1.bf16.xpose.msra.mxu0 %v1154
      %1217 = vmatprep.subr.bf16.mxu0 0
      %1218 = vmatpush2.bf16.xpose.msra.mxu0 %v1199
      %1219 = vmatprep.subr.bf16.mxu0 0
      %1220 = vmatpush2.bf16.xpose.msra.mxu0 %v1196
      %1221 = vmatprep.subr.bf16.mxu0 0
      %1222 = vmatpush2.bf16.xpose.msra.mxu0 %v1193
      %1223 = vmatprep.subr.bf16.mxu0 0
      %1224 = vmatpush2.bf16.xpose.msra.mxu0 %v1190
      %1225 = vmatprep.subr.bf16.mxu0 0
      %1226 = vmatpush2.bf16.xpose.msra.mxu0 %v1187
      %1227 = vmatprep.subr.bf16.mxu0 0
      %1228 = vmatpush2.bf16.xpose.msra.mxu0 %v1184
      %1229 = vmatprep.subr.bf16.mxu0 0
      %1230 = vmatpush2.bf16.xpose.msra.mxu0 %v1181
      %1231 = vmatprep.subr.bf16.mxu0 0
      %1232 = vmatpush2.bf16.xpose.msra.mxu0 %v1178
      %1233 = vmatprep.mubr.bf16.mxu0 0
      %1234 = vmatmul.mubr.bf16.gmra.mxu0 %v1151
      %v1235 = vpop.f32.mrf.mxu0
      %v1236 = vadd.f32 0.0, %v1235
      %v1237 = vpop.f32.mrf.mxu0
      %v1238 = vadd.f32 0.0, %v1237
      %v1239 = vpop.f32.mrf.mxu0
      %v1240 = vpop.f32.mrf.mxu0
      %1241 = vdwg.mxu0
      %v1242 = vadd.f32 %v663, %v1236
      %v1243 = vadd.f32 %v664, %v1238
      %s1244 = scalar_lea.vmem %s2, 16
      %v1245 = vld [vmem:[%s1244] sm:$0xf]
      %v1246 = vunpack.c.l.b16 %v1065
      %v1247 = vunpack.c.l.b16 %v1075
      %v1248 = vpack.c.b16 %v1247, %v1246
      %v1250 = vsel %vm464, %v1245, 0
      %v1253 = vsel %vm464, %v1248, 0
      %1255 = vmatprep.subr.bf16.mxu0 0
      %1256 = vmatpush1.bf16.xpose.msra.mxu0 %v1178
      %1257 = vmatprep.subr.bf16.mxu0 0
      %1258 = vmatpush1.bf16.xpose.msra.mxu0 %v1175
      %1259 = vmatprep.subr.bf16.mxu0 0
      %1260 = vmatpush1.bf16.xpose.msra.mxu0 %v1172
      %1261 = vmatprep.subr.bf16.mxu0 0
      %1262 = vmatpush1.bf16.xpose.msra.mxu0 %v1169
      %1263 = vmatprep.subr.bf16.mxu0 0
      %1264 = vmatpush1.bf16.xpose.msra.mxu0 %v1166
      %1265 = vmatprep.subr.bf16.mxu0 0
      %1266 = vmatpush1.bf16.xpose.msra.mxu0 %v1163
      %1267 = vmatprep.subr.bf16.mxu0 0
      %1268 = vmatpush1.bf16.xpose.msra.mxu0 %v1160
      %1269 = vmatprep.subr.bf16.mxu0 0
      %1270 = vmatpush1.bf16.xpose.msra.mxu0 %v1157
      %1271 = vmatprep.subr.bf16.mxu0 0
      %1272 = vmatpush2.bf16.xpose.msra.mxu0 %v1253
      %1273 = vmatprep.subr.bf16.mxu0 0
      %1274 = vmatpush2.bf16.xpose.msra.mxu0 %v1199
      %1275 = vmatprep.subr.bf16.mxu0 0
      %1276 = vmatpush2.bf16.xpose.msra.mxu0 %v1196
      %1277 = vmatprep.subr.bf16.mxu0 0
      %1278 = vmatpush2.bf16.xpose.msra.mxu0 %v1193
      %1279 = vmatprep.subr.bf16.mxu0 0
      %1280 = vmatpush2.bf16.xpose.msra.mxu0 %v1190
      %1281 = vmatprep.subr.bf16.mxu0 0
      %1282 = vmatpush2.bf16.xpose.msra.mxu0 %v1187
      %1283 = vmatprep.subr.bf16.mxu0 0
      %1284 = vmatpush2.bf16.xpose.msra.mxu0 %v1184
      %1285 = vmatprep.subr.bf16.mxu0 0
      %1286 = vmatpush2.bf16.xpose.msra.mxu0 %v1181
      %1287 = vmatprep.mubr.bf16.mxu0 0
      %1288 = vmatmul.mubr.bf16.gmra.mxu0 %v1250
      %v1289 = vpop.f32.mrf.mxu0
      %v1290 = vadd.f32 0.0, %v1289
      %v1291 = vpop.f32.mrf.mxu0
      %v1292 = vadd.f32 0.0, %v1291
      %v1293 = vpop.f32.mrf.mxu0
      %v1294 = vpop.f32.mrf.mxu0
      %1295 = vdwg.mxu0
      %v1296 = vadd.f32 %v1242, %v1290
      %v1297 = vadd.f32 %v1243, %v1292
      %s1298 = scalar_lea.vmem %s2, 28
      %v1299 = vld [vmem:[%s1298] sm:$0xf]
      %v1300 = vunpack.c.l.b16 %v1089
      %v1301 = vunpack.c.l.b16 %v1099
      %v1302 = vpack.c.b16 %v1301, %v1300
      %v1304 = vsel %vm464, %v1299, 0
      %v1307 = vsel %vm464, %v1302, 0
      %1309 = vmatprep.subr.bf16.mxu0 0
      %1310 = vmatpush1.bf16.xpose.msra.mxu0 %v1181
      %1311 = vmatprep.subr.bf16.mxu0 0
      %1312 = vmatpush1.bf16.xpose.msra.mxu0 %v1178
      %1313 = vmatprep.subr.bf16.mxu0 0
      %1314 = vmatpush1.bf16.xpose.msra.mxu0 %v1175
      %1315 = vmatprep.subr.bf16.mxu0 0
      %1316 = vmatpush1.bf16.xpose.msra.mxu0 %v1172
      %1317 = vmatprep.subr.bf16.mxu0 0
      %1318 = vmatpush1.bf16.xpose.msra.mxu0 %v1169
      %1319 = vmatprep.subr.bf16.mxu0 0
      %1320 = vmatpush1.bf16.xpose.msra.mxu0 %v1166
      %1321 = vmatprep.subr.bf16.mxu0 0
      %1322 = vmatpush1.bf16.xpose.msra.mxu0 %v1163
      %1323 = vmatprep.subr.bf16.mxu0 0
      %1324 = vmatpush1.bf16.xpose.msra.mxu0 %v1160
      %1325 = vmatprep.subr.bf16.mxu0 0
      %1326 = vmatpush2.bf16.xpose.msra.mxu0 %v1307
      %1327 = vmatprep.subr.bf16.mxu0 0
      %1328 = vmatpush2.bf16.xpose.msra.mxu0 %v1253
      %1329 = vmatprep.subr.bf16.mxu0 0
      %1330 = vmatpush2.bf16.xpose.msra.mxu0 %v1199
      %1331 = vmatprep.subr.bf16.mxu0 0
      %1332 = vmatpush2.bf16.xpose.msra.mxu0 %v1196
      %1333 = vmatprep.subr.bf16.mxu0 0
      %1334 = vmatpush2.bf16.xpose.msra.mxu0 %v1193
      %1335 = vmatprep.subr.bf16.mxu0 0
      %1336 = vmatpush2.bf16.xpose.msra.mxu0 %v1190
      %1337 = vmatprep.subr.bf16.mxu0 0
      %1338 = vmatpush2.bf16.xpose.msra.mxu0 %v1187
      %1339 = vmatprep.subr.bf16.mxu0 0
      %1340 = vmatpush2.bf16.xpose.msra.mxu0 %v1184
      %1341 = vmatprep.mubr.bf16.mxu0 0
      %1342 = vmatmul.mubr.bf16.gmra.mxu0 %v1304
      %v1343 = vpop.f32.mrf.mxu0
      %v1344 = vadd.f32 0.0, %v1343
      %v1345 = vpop.f32.mrf.mxu0
      %v1346 = vadd.f32 0.0, %v1345
      %v1347 = vpop.f32.mrf.mxu0
      %v1348 = vpop.f32.mrf.mxu0
      %1349 = vdwg.mxu0
      %v1350 = vadd.f32 %v1296, %v1344
      %v1351 = vadd.f32 %v1297, %v1346
      %vm1370 = vcmask 1042432
      %vm1371 = vcmask 1046532
      %vm1372 = vmor %vm1370, %vm1371
      %v1373 = vrot.slane %v327, 5
      %v1374 = vrot.slane %v1373, 4
      %v1375 = vrot.slane %v328, 5
      %v1376 = vsel %vm1372, %v1374, %v1375
      %v1377 = vrot.slane %v1375, 4
      %v1378 = vrot.slane %v329, 5
      %v1379 = vsel %vm1372, %v1377, %v1378
      %v1380 = vrot.slane %v330, 5
      %v1381 = vrot.slane %v1380, 4
      %v1382 = vrot.slane %v331, 5
      %v1383 = vsel %vm1372, %v1381, %v1382
      %v1384 = vrot.slane %v1382, 4
      %v1385 = vrot.slane %v332, 5
      %v1386 = vsel %vm1372, %v1384, %v1385
      %v1387 = vrot.slane %v333, 5
      %v1388 = vrot.slane %v1387, 4
      %v1389 = vrot.slane %v334, 5
      %v1390 = vsel %vm1372, %v1388, %v1389
      %v1391 = vrot.slane %v1389, 4
      %v1392 = vrot.slane %v335, 5
      %v1393 = vsel %vm1372, %v1391, %v1392
      %v1394 = vrot.slane %v336, 5
      %v1395 = vrot.slane %v1394, 4
      %v1396 = vrot.slane %v337, 5
      %v1397 = vsel %vm1372, %v1395, %v1396
      %v1398 = vrot.slane %v1396, 4
      %v1399 = vrot.slane %v338, 5
      %v1400 = vsel %vm1372, %v1398, %v1399
      %v1401 = vrot.slane %v339, 5
      %v1402 = vrot.slane %v1401, 4
      %v1403 = vrot.slane %v340, 5
      %v1404 = vsel %vm1372, %v1402, %v1403
      %v1405 = vrot.slane %v1403, 4
      %v1406 = vrot.slane %v341, 5
      %v1407 = vsel %vm1372, %v1405, %v1406
      %v1408 = vrot.slane %v342, 5
      %v1409 = vrot.slane %v1408, 4
      %v1410 = vrot.slane %v343, 5
      %v1411 = vsel %vm1372, %v1409, %v1410
      %v1412 = vrot.slane %v1410, 4
      %v1413 = vrot.slane %v344, 5
      %v1414 = vsel %vm1372, %v1412, %v1413
      %v1415 = vrot.slane %v345, 5
      %v1416 = vrot.slane %v1415, 4
      %v1417 = vrot.slane %v346, 5
      %v1418 = vsel %vm1372, %v1416, %v1417
      %v1419 = vrot.slane %v1417, 4
      %v1420 = vrot.slane %v347, 5
      %v1421 = vsel %vm1372, %v1419, %v1420
      %v1422 = vrot.slane %v348, 5
      %v1423 = vrot.slane %v1422, 4
      %v1424 = vrot.slane %v349, 5
      %v1425 = vsel %vm1372, %v1423, %v1424
      %v1426 = vrot.slane %v1424, 4
      %v1427 = vrot.slane %v350, 5
      %v1428 = vsel %vm1372, %v1426, %v1427
      %v1429 = vrot.slane %v351, 5
      %v1430 = vrot.slane %v1429, 4
      %v1431 = vrot.slane %v352, 5
      %v1432 = vsel %vm1372, %v1430, %v1431
      %v1433 = vrot.slane %v1431, 4
      %v1434 = vrot.slane %v353, 5
      %v1435 = vsel %vm1372, %v1433, %v1434
      %v1436 = vrot.slane %v354, 5
      %v1437 = vrot.slane %v1436, 4
      %v1438 = vrot.slane %v355, 5
      %v1439 = vsel %vm1372, %v1437, %v1438
      %v1440 = vrot.slane %v1438, 4
      %v1441 = vrot.slane %v356, 5
      %v1442 = vsel %vm1372, %v1440, %v1441
      %v1443 = vrot.slane %v357, 5
      %v1444 = vrot.slane %v1443, 4
      %v1445 = vrot.slane %v358, 5
      %v1446 = vsel %vm1372, %v1444, %v1445
      %v1447 = vrot.slane %v1445, 4
      %v1448 = vrot.slane %v359, 5
      %v1449 = vsel %vm1372, %v1447, %v1448
      %v1450 = vrot.slane %v360, 5
      %v1451 = vrot.slane %v1450, 4
      %v1452 = vrot.slane %v361, 5
      %v1453 = vsel %vm1372, %v1451, %v1452
      %v1454 = vrot.slane %v1452, 4
      %v1455 = vrot.slane %v362, 5
      %v1456 = vsel %vm1372, %v1454, %v1455
      %v1457 = vrot.slane %v363, 5
      %v1458 = vrot.slane %v1457, 4
      %v1459 = vrot.slane %v364, 5
      %v1460 = vsel %vm1372, %v1458, %v1459
      %v1461 = vrot.slane %v1459, 4
      %v1462 = vrot.slane %v365, 5
      %v1463 = vsel %vm1372, %v1461, %v1462
      %v1464 = vrot.slane %v366, 5
      %v1465 = vrot.slane %v1464, 4
      %v1466 = vrot.slane %v367, 5
      %v1467 = vsel %vm1372, %v1465, %v1466
      %v1468 = vrot.slane %v1466, 4
      %v1469 = vrot.slane %v368, 5
      %v1470 = vsel %vm1372, %v1468, %v1469
      %v1471 = vrot.slane %v369, 5
      %v1472 = vrot.slane %v1471, 4
      %v1473 = vrot.slane %v370, 5
      %v1474 = vsel %vm1372, %v1472, %v1473
      %v1475 = vrot.slane %v1473, 4
      %v1476 = vrot.slane %v371, 5
      %v1477 = vsel %vm1372, %v1475, %v1476
      %v1478 = vrot.slane %v372, 5
      %v1479 = vrot.slane %v1478, 4
      %v1480 = vrot.slane %v373, 5
      %v1481 = vsel %vm1372, %v1479, %v1480
      %v1482 = vrot.slane %v1480, 4
      %v1483 = vrot.slane %v374, 5
      %v1484 = vsel %vm1372, %v1482, %v1483
      %v1485 = vrot.slane %v375, 5
      %v1486 = vrot.slane %v1485, 4
      %v1487 = vrot.slane %v376, 5
      %v1488 = vsel %vm1372, %v1486, %v1487
      %v1489 = vrot.slane %v1487, 4
      %v1490 = vrot.slane %v377, 5
      %v1491 = vsel %vm1372, %v1489, %v1490
      %v1492 = vrot.slane %v378, 5
      %v1493 = vrot.slane %v1492, 4
      %v1494 = vrot.slane %v379, 5
      %v1495 = vsel %vm1372, %v1493, %v1494
      %v1496 = vrot.slane %v1494, 4
      %v1497 = vrot.slane %v380, 5
      %v1498 = vsel %vm1372, %v1496, %v1497
      %s1499 = scalar_lea.vmem %s2, 8
      %v1500 = vld [vmem:[%s1499] sm:$0xf]
      %v1501 = vunpack.c.l.b16 %v1376
      %v1502 = vunpack.c.l.b16 %v1379
      %v1503 = vunpack.c.l.b16 %v1383
      %v1504 = vunpack.c.l.b16 %v1386
      %v1505 = vunpack.c.l.b16 %v1390
      %v1506 = vunpack.c.l.b16 %v1393
      %v1507 = vunpack.c.l.b16 %v1397
      %v1508 = vunpack.c.l.b16 %v1400
      %v1509 = vunpack.c.l.b16 %v1404
      %v1510 = vunpack.c.l.b16 %v1407
      %v1511 = vunpack.c.l.b16 %v1411
      %v1512 = vunpack.c.l.b16 %v1414
      %v1513 = vunpack.c.l.b16 %v1418
      %v1514 = vunpack.c.l.b16 %v1421
      %v1515 = vunpack.c.l.b16 %v1425
      %v1516 = vunpack.c.l.b16 %v1428
      %v1517 = vunpack.c.l.b16 %v1432
      %v1518 = vunpack.c.l.b16 %v1435
      %v1519 = vunpack.c.l.b16 %v1439
      %v1520 = vunpack.c.l.b16 %v1442
      %v1521 = vunpack.c.l.b16 %v1446
      %v1522 = vunpack.c.l.b16 %v1449
      %v1523 = vunpack.c.l.b16 %v1453
      %v1524 = vunpack.c.l.b16 %v1456
      %v1525 = vunpack.c.l.b16 %v1460
      %v1526 = vunpack.c.l.b16 %v1463
      %v1527 = vunpack.c.l.b16 %v1467
      %v1528 = vunpack.c.l.b16 %v1470
      %v1529 = vunpack.c.l.b16 %v1474
      %v1530 = vunpack.c.l.b16 %v1477
      %v1531 = vunpack.c.l.b16 %v1481
      %v1532 = vunpack.c.l.b16 %v1484
      %v1533 = vpack.c.b16 %v1502, %v1501
      %v1534 = vpack.c.b16 %v1504, %v1503
      %v1535 = vpack.c.b16 %v1506, %v1505
      %v1536 = vpack.c.b16 %v1508, %v1507
      %v1537 = vpack.c.b16 %v1510, %v1509
      %v1538 = vpack.c.b16 %v1512, %v1511
      %v1539 = vpack.c.b16 %v1514, %v1513
      %v1540 = vpack.c.b16 %v1516, %v1515
      %v1541 = vpack.c.b16 %v1518, %v1517
      %v1542 = vpack.c.b16 %v1520, %v1519
      %v1543 = vpack.c.b16 %v1522, %v1521
      %v1544 = vpack.c.b16 %v1524, %v1523
      %v1545 = vpack.c.b16 %v1526, %v1525
      %v1546 = vpack.c.b16 %v1528, %v1527
      %v1547 = vpack.c.b16 %v1530, %v1529
      %v1548 = vpack.c.b16 %v1532, %v1531
      %v1550 = vsel %vm464, %v1500, 0
      %v1553 = vsel %vm464, %v1533, 0
      %v1556 = vsel %vm464, %v1534, 0
      %v1559 = vsel %vm464, %v1535, 0
      %v1562 = vsel %vm464, %v1536, 0
      %v1565 = vsel %vm464, %v1537, 0
      %v1568 = vsel %vm464, %v1538, 0
      %v1571 = vsel %vm464, %v1539, 0
      %v1574 = vsel %vm464, %v1540, 0
      %v1577 = vsel %vm464, %v1541, 0
      %v1580 = vsel %vm464, %v1542, 0
      %v1583 = vsel %vm464, %v1543, 0
      %v1586 = vsel %vm464, %v1544, 0
      %v1589 = vsel %vm464, %v1545, 0
      %v1592 = vsel %vm464, %v1546, 0
      %v1595 = vsel %vm464, %v1547, 0
      %v1598 = vsel %vm464, %v1548, 0
      %1600 = vmatprep.subr.bf16.mxu0 0
      %1601 = vmatpush1.bf16.xpose.msra.mxu0 %v1574
      %1602 = vmatprep.subr.bf16.mxu0 0
      %1603 = vmatpush1.bf16.xpose.msra.mxu0 %v1571
      %1604 = vmatprep.subr.bf16.mxu0 0
      %1605 = vmatpush1.bf16.xpose.msra.mxu0 %v1568
      %1606 = vmatprep.subr.bf16.mxu0 0
      %1607 = vmatpush1.bf16.xpose.msra.mxu0 %v1565
      %1608 = vmatprep.subr.bf16.mxu0 0
      %1609 = vmatpush1.bf16.xpose.msra.mxu0 %v1562
      %1610 = vmatprep.subr.bf16.mxu0 0
      %1611 = vmatpush1.bf16.xpose.msra.mxu0 %v1559
      %1612 = vmatprep.subr.bf16.mxu0 0
      %1613 = vmatpush1.bf16.xpose.msra.mxu0 %v1556
      %1614 = vmatprep.subr.bf16.mxu0 0
      %1615 = vmatpush1.bf16.xpose.msra.mxu0 %v1553
      %1616 = vmatprep.subr.bf16.mxu0 0
      %1617 = vmatpush2.bf16.xpose.msra.mxu0 %v1598
      %1618 = vmatprep.subr.bf16.mxu0 0
      %1619 = vmatpush2.bf16.xpose.msra.mxu0 %v1595
      %1620 = vmatprep.subr.bf16.mxu0 0
      %1621 = vmatpush2.bf16.xpose.msra.mxu0 %v1592
      %1622 = vmatprep.subr.bf16.mxu0 0
      %1623 = vmatpush2.bf16.xpose.msra.mxu0 %v1589
      %1624 = vmatprep.subr.bf16.mxu0 0
      %1625 = vmatpush2.bf16.xpose.msra.mxu0 %v1586
      %1626 = vmatprep.subr.bf16.mxu0 0
      %1627 = vmatpush2.bf16.xpose.msra.mxu0 %v1583
      %1628 = vmatprep.subr.bf16.mxu0 0
      %1629 = vmatpush2.bf16.xpose.msra.mxu0 %v1580
      %1630 = vmatprep.subr.bf16.mxu0 0
      %1631 = vmatpush2.bf16.xpose.msra.mxu0 %v1577
      %1632 = vmatprep.mubr.bf16.mxu0 0
      %1633 = vmatmul.mubr.bf16.gmra.mxu0 %v1550
      %v1634 = vpop.f32.mrf.mxu0
      %v1635 = vadd.f32 0.0, %v1634
      %v1636 = vpop.f32.mrf.mxu0
      %v1637 = vadd.f32 0.0, %v1636
      %v1638 = vpop.f32.mrf.mxu0
      %v1639 = vpop.f32.mrf.mxu0
      %1640 = vdwg.mxu0
      %v1641 = vadd.f32 %v1350, %v1635
      %v1642 = vadd.f32 %v1351, %v1637
      %s1643 = scalar_lea.vmem %s2, 20
      %v1644 = vld [vmem:[%s1643] sm:$0xf]
      %v1645 = vunpack.c.l.b16 %v1488
      %v1646 = vunpack.c.l.b16 %v1491
      %v1647 = vpack.c.b16 %v1646, %v1645
      %v1649 = vsel %vm464, %v1644, 0
      %v1652 = vsel %vm464, %v1647, 0
      %1654 = vmatprep.subr.bf16.mxu0 0
      %1655 = vmatpush1.bf16.xpose.msra.mxu0 %v1577
      %1656 = vmatprep.subr.bf16.mxu0 0
      %1657 = vmatpush1.bf16.xpose.msra.mxu0 %v1574
      %1658 = vmatprep.subr.bf16.mxu0 0
      %1659 = vmatpush1.bf16.xpose.msra.mxu0 %v1571
      %1660 = vmatprep.subr.bf16.mxu0 0
      %1661 = vmatpush1.bf16.xpose.msra.mxu0 %v1568
      %1662 = vmatprep.subr.bf16.mxu0 0
      %1663 = vmatpush1.bf16.xpose.msra.mxu0 %v1565
      %1664 = vmatprep.subr.bf16.mxu0 0
      %1665 = vmatpush1.bf16.xpose.msra.mxu0 %v1562
      %1666 = vmatprep.subr.bf16.mxu0 0
      %1667 = vmatpush1.bf16.xpose.msra.mxu0 %v1559
      %1668 = vmatprep.subr.bf16.mxu0 0
      %1669 = vmatpush1.bf16.xpose.msra.mxu0 %v1556
      %1670 = vmatprep.subr.bf16.mxu0 0
      %1671 = vmatpush2.bf16.xpose.msra.mxu0 %v1652
      %1672 = vmatprep.subr.bf16.mxu0 0
      %1673 = vmatpush2.bf16.xpose.msra.mxu0 %v1598
      %1674 = vmatprep.subr.bf16.mxu0 0
      %1675 = vmatpush2.bf16.xpose.msra.mxu0 %v1595
      %1676 = vmatprep.subr.bf16.mxu0 0
      %1677 = vmatpush2.bf16.xpose.msra.mxu0 %v1592
      %1678 = vmatprep.subr.bf16.mxu0 0
      %1679 = vmatpush2.bf16.xpose.msra.mxu0 %v1589
      %1680 = vmatprep.subr.bf16.mxu0 0
      %1681 = vmatpush2.bf16.xpose.msra.mxu0 %v1586
      %1682 = vmatprep.subr.bf16.mxu0 0
      %1683 = vmatpush2.bf16.xpose.msra.mxu0 %v1583
      %1684 = vmatprep.subr.bf16.mxu0 0
      %1685 = vmatpush2.bf16.xpose.msra.mxu0 %v1580
      %1686 = vmatprep.mubr.bf16.mxu0 0
      %1687 = vmatmul.mubr.bf16.gmra.mxu0 %v1649
      %v1688 = vpop.f32.mrf.mxu0
      %v1689 = vadd.f32 0.0, %v1688
      %v1690 = vpop.f32.mrf.mxu0
      %v1691 = vadd.f32 0.0, %v1690
      %v1692 = vpop.f32.mrf.mxu0
      %v1693 = vpop.f32.mrf.mxu0
      %1694 = vdwg.mxu0
      %v1695 = vadd.f32 %v1641, %v1689
      %v1696 = vadd.f32 %v1642, %v1691
      %s1697 = scalar_lea.vmem %s2, 32
      %v1698 = vld [vmem:[%s1697] sm:$0xf]
      %v1699 = vunpack.c.l.b16 %v1495
      %v1700 = vunpack.c.l.b16 %v1498
      %v1701 = vpack.c.b16 %v1700, %v1699
      %v1703 = vsel %vm464, %v1698, 0
      %v1706 = vsel %vm464, %v1701, 0
      %1708 = vmatprep.subr.bf16.mxu0 0
      %1709 = vmatpush1.bf16.xpose.msra.mxu0 %v1580
      %1710 = vmatprep.subr.bf16.mxu0 0
      %1711 = vmatpush1.bf16.xpose.msra.mxu0 %v1577
      %1712 = vmatprep.subr.bf16.mxu0 0
      %1713 = vmatpush1.bf16.xpose.msra.mxu0 %v1574
      %1714 = vmatprep.subr.bf16.mxu0 0
      %1715 = vmatpush1.bf16.xpose.msra.mxu0 %v1571
      %1716 = vmatprep.subr.bf16.mxu0 0
      %1717 = vmatpush1.bf16.xpose.msra.mxu0 %v1568
      %1718 = vmatprep.subr.bf16.mxu0 0
      %1719 = vmatpush1.bf16.xpose.msra.mxu0 %v1565
      %1720 = vmatprep.subr.bf16.mxu0 0
      %1721 = vmatpush1.bf16.xpose.msra.mxu0 %v1562
      %1722 = vmatprep.subr.bf16.mxu0 0
      %1723 = vmatpush1.bf16.xpose.msra.mxu0 %v1559
      %1724 = vmatprep.subr.bf16.mxu0 0
      %1725 = vmatpush2.bf16.xpose.msra.mxu0 %v1706
      %1726 = vmatprep.subr.bf16.mxu0 0
      %1727 = vmatpush2.bf16.xpose.msra.mxu0 %v1652
      %1728 = vmatprep.subr.bf16.mxu0 0
      %1729 = vmatpush2.bf16.xpose.msra.mxu0 %v1598
      %1730 = vmatprep.subr.bf16.mxu0 0
      %1731 = vmatpush2.bf16.xpose.msra.mxu0 %v1595
      %1732 = vmatprep.subr.bf16.mxu0 0
      %1733 = vmatpush2.bf16.xpose.msra.mxu0 %v1592
      %1734 = vmatprep.subr.bf16.mxu0 0
      %1735 = vmatpush2.bf16.xpose.msra.mxu0 %v1589
      %1736 = vmatprep.subr.bf16.mxu0 0
      %1737 = vmatpush2.bf16.xpose.msra.mxu0 %v1586
      %1738 = vmatprep.subr.bf16.mxu0 0
      %1739 = vmatpush2.bf16.xpose.msra.mxu0 %v1583
      %1740 = vmatprep.mubr.bf16.mxu0 0
      %1741 = vmatmul.mubr.bf16.gmra.mxu0 %v1703
      %v1742 = vpop.f32.mrf.mxu0
      %v1743 = vadd.f32 0.0, %v1742
      %v1744 = vpop.f32.mrf.mxu0
      %v1745 = vadd.f32 0.0, %v1744
      %v1746 = vpop.f32.mrf.mxu0
      %v1747 = vpop.f32.mrf.mxu0
      %1748 = vdwg.mxu0
      %v1749 = vadd.f32 %v1695, %v1743
      %v1750 = vadd.f32 %v1696, %v1745
      %v1751 = vld [vmem:[%s3] sm:$0xff]
      %1753 = vset.pattern.permute.xlu0 0
      %1754 = vperm.xlu0 %1753, %v1751
      %v1755 = vpop.permute.xlu0 %1754
      %v1757 = vmul.f32 %v1749, %v1755
      %v1758 = vmul.f32 %v1750, %v1755
      %v1759 = vld [vmem:[%s4] sm:$0xff]
      %1761 = vset.pattern.permute.xlu0 0
      %1762 = vperm.xlu0 %1761, %v1759
      %v1763 = vpop.permute.xlu0 %1762
      %v1765 = vadd.f32 %v1757, %v1763
      %v1766 = vadd.f32 %v1758, %v1763
      %vm1767 = vcmp.ge.f32.partialorder %v1765, 0.0
      %vm1768 = vcmp.ge.f32.partialorder %v1766, 0.0
      %v1769 = vmul.f32 %v1765, 0.2
      %v1770 = vmul.f32 %v1766, 0.2
      %v1771 = vsel %vm1767, %v1765, %v1769
      %v1772 = vsel %vm1768, %v1766, %v1770
      %1773 = vst [vmem:[%s324] sm:$0xff] %v1771
      %1774 = vst [vmem:[%s324 + $0x8] sm:$0xff] %v1772
      %s1775 = smul.u32 2, %s21
      %p1776 = scmp.lt.s32.totalorder %s20, 1
      %s1777 = scalar_select %p1776, %s20, 1
      %p1778 = scmp.lt.s32.totalorder %s1775, 1
      %s1779 = scalar_select %p1778, %s1775, 1
      %s1780 = smul.addr %s1777, 2
      %s1781 = sadd.s32 %s1779, %s1780
      %s1782 = smul.addr %s1781, 8
      %s1783 = scalar_lea.vmem %s5, %s1782
      // Predicated region
      $region41: #{conv_bn_relu_forward.3} parent=39 // pred_check
        %p1784 = pneg %p167
      $region42: #{conv_bn_relu_forward.3} parent=39 // pred_check_branch
        %1786 = sbr.rel (%p1784) target = $region44
      $region43: #{conv_bn_relu_forward.3} parent=39 // pred_region
        %s1787 = smul.u32 2, %s21
      $region44: #{conv_bn_relu_forward.3} parent=39 // pred_fallthru
        _
    $region40: #{conv_bn_relu_forward.3} parent=5 // pred_fallthru
      _
    %p1788 = scmp.le.s32.totalorder 2, %s11
    // Predicated region
    $region45: #{conv_bn_relu_forward.3} parent=5 // pred_check
      %p1789 = pneg %p1788
    $region46: #{conv_bn_relu_forward.3} parent=5 // pred_check_branch
      %1791 = sbr.rel (%p1789) target = $region48
    $region47: #{conv_bn_relu_forward.3} parent=5 // pred_region
      %s1792 = ssub.s32 %s11, 2
      // Predicated region
      $region49: #{conv_bn_relu_forward.3} parent=47 // pred_check
        %p1793 = pneg %p173
      $region50: #{conv_bn_relu_forward.3} parent=47 // pred_check_branch
        %1795 = sbr.rel (%p1793) target = $region52
      $region51: #{conv_bn_relu_forward.3} parent=47 // pred_region
        %s1796 = smul.u32 2, %s23
        %p1797 = scmp.lt.s32.totalorder %s22, 1
        %s1798 = scalar_select %p1797, %s22, 1
        %p1799 = scmp.lt.s32.totalorder %s1796, 1
        %s1800 = scalar_select %p1799, %s1796, 1
        %s1801 = smul.addr %s1798, 2
        %s1802 = sadd.s32 %s1800, %s1801
        %s1803 = smul.addr %s1802, 8
        %s1804 = scalar_lea.vmem %s5, %s1803
      $region52: #{conv_bn_relu_forward.3} parent=47 // pred_fallthru
        _
    $region48: #{conv_bn_relu_forward.3} parent=5 // pred_fallthru
      _
  $region6: #{conv_bn_relu_forward.3} parent=0 // loop_footer
    %s15 = sadd.s32 1, %s11
  $region7: #{conv_bn_relu_forward.3} parent=0 // loop_footer_branch
    %10 = sbr.rel target = $region3
  $region8: #{conv_bn_relu_forward.3} parent=0 // loop_exit
    _

// kernel: conv_bn_relu_forward.2
$region0: #{conv_bn_relu_forward.2}
  #allocation0 [shape = 'u32[]', space=smem, size = 0x4, offset = 0x4, fixed_abs, tag = 'smem constant byte address 0x4 - core index']
  #allocation1 [shape = 'u32[144,128]{1,0:T(1,128)}', space=vmem, size = 0x12000, scoped, tag = 'internal scratch']
  %s0 = inlined_call_operand.vmem [shape: bf16[2,18,18,4], index: 0, kind: input, shape index: {}]
  %s1 = inlined_call_operand.vmem [shape: bf16[2,1,2,18,4], index: 1, kind: input, shape index: {}]
  %s2 = inlined_call_operand.vmem [shape: bf16[9,8,4], index: 2, kind: input, shape index: {}]
  %s3 = inlined_call_operand.vmem [shape: f32[2,1,8,1], index: 3, kind: output, shape index: {0}]
  %s4 = inlined_call_operand.vmem [shape: f32[2,1,8,1], index: 4, kind: output, shape index: {1}]
  %5 = xla_tuple %s3, %s4
  %s6 = sld [smem:[#allocation0]]
  $region53: #{conv_bn_relu_forward.2} parent=0
    _
  %s8 = ssub.s32 1, %s6
  %s9 = scalar_select 0, %s8, %s6
  loop: start=0, step=1, limit=4
  $region2: #{conv_bn_relu_forward.2} parent=0 // loop_pre_header
    _
  $region3: #{conv_bn_relu_forward.2} parent=0 // loop_header
    %s11 = sphi 0, %s15
    %p12 = scmp.ge.s32.totalorder %s11, 4
    %s18 = sphi 0, %s30
    %s19 = sphi 0, %s26
    %s20 = sphi 0, %s18
    %s21 = sphi 0, %s19
    %s22 = sphi 0, %s20
    %s23 = sphi 0, %s21
    %s35 = sphi 0, %s37
    %s38 = sphi 0, %s35
    %s39 = sphi 0, %s38
    %s55 = sphi 0, %s39
    %s63 = sphi 0, %s65
    %s66 = sphi 0, %s63
    %s67 = sphi 0, %s66
    %s83 = sphi 0, %s67
    %s87 = sphi 0, %s87
    %s89 = sphi 0, %s87
    %s90 = sphi 0, %s89
    %s104 = sphi 0, %s90
    %s112 = sphi 0, %s114
    %s115 = sphi 0, %s112
    %s116 = sphi 0, %s115
    %s132 = sphi 0, %s116
    %s140 = sphi 0, %s142
    %s143 = sphi 0, %s140
    %s144 = sphi 0, %s143
    %s160 = sphi 0, %s144
  $region4: #{conv_bn_relu_forward.2} parent=0 // loop_header_branch
    %14 = sbr.rel (%p12) target = $region8
  $region5: #{conv_bn_relu_forward.2} parent=0 // loop_body
    %s16 = ssub.s32 %s11, 1
    %s17 = ssub.s32 %s11, 2
    %s24 = sadd.s32 1, %s19
    %p25 = scmp.ge.s32.totalorder %s24, 1
    %s26 = scalar_select %p25, 0, %s24
    %s27 = sadd.s32 1, %s18
    %s28 = scalar_select %p25, %s27, %s18
    %p29 = scmp.ge.s32.totalorder %s28, 2
    %s30 = scalar_select %p29, 0, %s28
    %s31 = ssub.s32 %s18, %s30
    %s32 = ssub.s32 %s19, %s26
    %s33 = sor.u32 %s31, %s32
    %p34 = scmp.eq.s32.totalorder %s33, 0
    %s36 = sadd.s32 %s35, 1
    %s37 = scalar_select %p34, %s35, %s36
    %p40 = pneg %p34
    %p41 = scmp.eq.s32.totalorder %s11, 1
    %p42 = por %p40, %p41
    %p43 = scmp.ne.s32.totalorder %s35, %s38
    %p44 = scmp.eq.s32.totalorder %s11, 0
    %p45 = por %p43, %p44
    %p46 = scmp.ne.s32.totalorder %s35, %s38
    %p47 = scmp.eq.s32.totalorder %s16, 1
    %p48 = por %p46, %p47
    %p49 = scmp.ne.s32.totalorder %s38, %s39
    %p50 = scmp.eq.s32.totalorder %s16, 0
    %p51 = por %p49, %p50
    %p52 = scmp.ne.s32.totalorder %s38, %s39
    %p53 = scmp.eq.s32.totalorder %s17, 1
    %p54 = por %p52, %p53
    %p56 = scmp.ne.s32.totalorder %s39, %s55
    %p57 = scmp.eq.s32.totalorder %s17, 0
    %p58 = por %p56, %p57
    %s59 = ssub.s32 %s18, %s30
    %s60 = ssub.s32 %s19, %s26
    %s61 = sor.u32 %s59, %s60
    %p62 = scmp.eq.s32.totalorder %s61, 0
    %s64 = sadd.s32 %s63, 1
    %s65 = scalar_select %p62, %s63, %s64
    %p68 = pneg %p62
    %p69 = scmp.eq.s32.totalorder %s11, 1
    %p70 = por %p68, %p69
    %p71 = scmp.ne.s32.totalorder %s63, %s66
    %p72 = scmp.eq.s32.totalorder %s11, 0
    %p73 = por %p71, %p72
    %p74 = scmp.ne.s32.totalorder %s63, %s66
    %p75 = scmp.eq.s32.totalorder %s16, 1
    %p76 = por %p74, %p75
    %p77 = scmp.ne.s32.totalorder %s66, %s67
    %p78 = scmp.eq.s32.totalorder %s16, 0
    %p79 = por %p77, %p78
    %p80 = scmp.ne.s32.totalorder %s66, %s67
    %p81 = scmp.eq.s32.totalorder %s17, 1
    %p82 = por %p80, %p81
    %p84 = scmp.ne.s32.totalorder %s67, %s83
    %p85 = scmp.eq.s32.totalorder %s17, 0
    %p86 = por %p84, %p85
    %s88 = sadd.s32 %s87, 1
    %p91 = scmp.eq.s32.totalorder %s11, 1
    %p92 = scmp.ne.s32.totalorder %s87, %s89
    %p93 = scmp.eq.s32.totalorder %s11, 0
    %p94 = por %p92, %p93
    %p95 = scmp.ne.s32.totalorder %s87, %s89
    %p96 = scmp.eq.s32.totalorder %s16, 1
    %p97 = por %p95, %p96
    %p98 = scmp.ne.s32.totalorder %s89, %s90
    %p99 = scmp.eq.s32.totalorder %s16, 0
    %p100 = por %p98, %p99
    %p101 = scmp.ne.s32.totalorder %s89, %s90
    %p102 = scmp.eq.s32.totalorder %s17, 1
    %p103 = por %p101, %p102
    %p105 = scmp.ne.s32.totalorder %s90, %s104
    %p106 = scmp.eq.s32.totalorder %s17, 0
    %p107 = por %p105, %p106
    %s108 = ssub.s32 %s18, %s30
    %s109 = ssub.s32 %s19, %s26
    %s110 = sor.u32 %s108, %s109
    %p111 = scmp.eq.s32.totalorder %s110, 0
    %s113 = sadd.s32 %s112, 1
    %s114 = scalar_select %p111, %s112, %s113
    %p117 = pneg %p111
    %p118 = scmp.eq.s32.totalorder %s11, 1
    %p119 = por %p117, %p118
    %p120 = scmp.ne.s32.totalorder %s112, %s115
    %p121 = scmp.eq.s32.totalorder %s11, 0
    %p122 = por %p120, %p121
    %p123 = scmp.ne.s32.totalorder %s112, %s115
    %p124 = scmp.eq.s32.totalorder %s16, 1
    %p125 = por %p123, %p124
    %p126 = scmp.ne.s32.totalorder %s115, %s116
    %p127 = scmp.eq.s32.totalorder %s16, 0
    %p128 = por %p126, %p127
    %p129 = scmp.ne.s32.totalorder %s115, %s116
    %p130 = scmp.eq.s32.totalorder %s17, 1
    %p131 = por %p129, %p130
    %p133 = scmp.ne.s32.totalorder %s116, %s132
    %p134 = scmp.eq.s32.totalorder %s17, 0
    %p135 = por %p133, %p134
    %s136 = ssub.s32 %s18, %s30
    %s137 = ssub.s32 %s19, %s26
    %s138 = sor.u32 %s136, %s137
    %p139 = scmp.eq.s32.totalorder %s138, 0
    %s141 = sadd.s32 %s140, 1
    %s142 = scalar_select %p139, %s140, %s141
    %p145 = pneg %p139
    %p146 = scmp.eq.s32.totalorder %s11, 1
    %p147 = por %p145, %p146
    %p148 = scmp.ne.s32.totalorder %s140, %s143
    %p149 = scmp.eq.s32.totalorder %s11, 0
    %p150 = por %p148, %p149
    %p151 = scmp.ne.s32.totalorder %s140, %s143
    %p152 = scmp.eq.s32.totalorder %s16, 1
    %p153 = por %p151, %p152
    %p154 = scmp.ne.s32.totalorder %s143, %s144
    %p155 = scmp.eq.s32.totalorder %s16, 0
    %p156 = por %p154, %p155
    %p157 = scmp.ne.s32.totalorder %s143, %s144
    %p158 = scmp.eq.s32.totalorder %s17, 1
    %p159 = por %p157, %p158
    %p161 = scmp.ne.s32.totalorder %s144, %s160
    %p162 = scmp.eq.s32.totalorder %s17, 0
    %p163 = por %p161, %p162
    %p164 = scmp.le.s32.totalorder 1, %s11
    %p165 = scmp.lt.s32.totalorder %s11, 3
    %p166 = pnand %p164, %p165
    %p167 = pneg %p166
    // Predicated region
    $region9: #{conv_bn_relu_forward.2} parent=5 // pred_check
      _
    $region10: #{conv_bn_relu_forward.2} parent=5 // pred_check_branch
      %169 = sbr.rel (%p166) target = $region12
    $region11: #{conv_bn_relu_forward.2} parent=5 // pred_region
      %s170 = ssub.s32 %s11, 1
      // Predicated region
      $region13: #{conv_bn_relu_forward.2} parent=11 // pred_check
        %p171 = pneg %p100
      $region14: #{conv_bn_relu_forward.2} parent=11 // pred_check_branch
        %173 = sbr.rel (%p171) target = $region16
      $region15: #{conv_bn_relu_forward.2} parent=11 // pred_region
        _
      $region16: #{conv_bn_relu_forward.2} parent=11 // pred_fallthru
        _
    $region12: #{conv_bn_relu_forward.2} parent=5 // pred_fallthru
      _
    %p174 = scmp.lt.s32.totalorder %s11, 2
    // Predicated region
    $region17: #{conv_bn_relu_forward.2} parent=5 // pred_check
      %p175 = pneg %p174
    $region18: #{conv_bn_relu_forward.2} parent=5 // pred_check_branch
      %177 = sbr.rel (%p175) target = $region20
    $region19: #{conv_bn_relu_forward.2} parent=5 // pred_region
      // Predicated region
      $region21: #{conv_bn_relu_forward.2} parent=19 // pred_check
        %p178 = pneg %p45
      $region22: #{conv_bn_relu_forward.2} parent=19 // pred_check_branch
        %180 = sbr.rel (%p178) target = $region24
      $region23: #{conv_bn_relu_forward.2} parent=19 // pred_region
        %s181 = smul.u32 16, %s19
        %s182 = ssub.s32 18, %s181
        %p183 = scmp.lt.s32.totalorder %s182, 16
        %s184 = scalar_select %p183, %s182, 16
        %s185 = smul.u32 64, %s184
        %s186 = smul.u32 %s185, 3
        %p187 = scmp.lt.s32.totalorder %s18, 1
        %s188 = scalar_select %p187, %s18, 1
        %p189 = scmp.lt.s32.totalorder %s181, 17
        %s190 = scalar_select %p189, %s181, 17
        %s191 = smul.addr %s190, 3
        %s192 = smul.addr %s188, 54
        %s193 = sadd.s32 %s191, %s192
        %s194 = smul.addr %s193, 4
        %s195 = scalar_lea.vmem %s0, %s194
        %s196 = smul.u32 16, %s19
        %s197 = ssub.s32 18, %s196
        %p198 = scmp.lt.s32.totalorder %s197, 16
        %s199 = scalar_select %p198, %s197, 16
        %s200 = smul.u32 64, %s199
        %s201 = smul.u32 %s200, 3
      $region24: #{conv_bn_relu_forward.2} parent=19 // pred_fallthru
        _
      // Predicated region
      $region25: #{conv_bn_relu_forward.2} parent=19 // pred_check
        %p202 = pneg %p73
      $region26: #{conv_bn_relu_forward.2} parent=19 // pred_check_branch
        %204 = sbr.rel (%p202) target = $region28
      $region27: #{conv_bn_relu_forward.2} parent=19 // pred_region
        %p205 = scmp.lt.s32.totalorder %s18, 1
        %s206 = scalar_select %p205, %s18, 1
        %p207 = scmp.lt.s32.totalorder %s19, 0
        %s208 = scalar_select %p207, %s19, 0
        %s209 = smul.addr %s208, 6
        %s210 = smul.addr %s206, 6
        %s211 = sadd.s32 %s209, %s210
        %s212 = smul.addr %s211, 4
        %s213 = scalar_lea.vmem %s1, %s212
      $region28: #{conv_bn_relu_forward.2} parent=19 // pred_fallthru
        _
    $region20: #{conv_bn_relu_forward.2} parent=5 // pred_fallthru
      _
    %p214 = scmp.le.s32.totalorder 1, %s11
    %p215 = scmp.lt.s32.totalorder %s11, 3
    %p216 = pnand %p214, %p215
    %p217 = pneg %p216
    // Predicated region
    $region29: #{conv_bn_relu_forward.2} parent=5 // pred_check
      _
    $region30: #{conv_bn_relu_forward.2} parent=5 // pred_check_branch
      %219 = sbr.rel (%p216) target = $region32
    $region31: #{conv_bn_relu_forward.2} parent=5 // pred_region
      %s220 = ssub.s32 %s11, 1
      %s221 = smul.u32 16, %s21
      %s222 = ssub.s32 18, %s221
      %p223 = scmp.lt.s32.totalorder %s222, 16
      %s224 = scalar_select %p223, %s222, 16
      %s225 = smul.u32 64, %s224
      %s226 = smul.u32 %s225, 3
      %p227 = scmp.lt.s32.totalorder %s20, 1
      %s228 = scalar_select %p227, %s20, 1
      %p229 = scmp.lt.s32.totalorder %s221, 17
      %s230 = scalar_select %p229, %s221, 17
      %s231 = smul.addr %s230, 3
      %s232 = smul.addr %s228, 54
      %s233 = sadd.s32 %s231, %s232
      %s234 = smul.addr %s233, 4
      %s235 = scalar_lea.vmem %s0, %s234
      %p236 = pneg %p51
      %p237 = pneg %p48
      %p238 = scmp.lt.s32.totalorder %s20, 1
      %s239 = scalar_select %p238, %s20, 1
      %p240 = scmp.lt.s32.totalorder %s21, 0
      %s241 = scalar_select %p240, %s21, 0
      %s242 = smul.addr %s241, 6
      %s243 = smul.addr %s239, 6
      %s244 = sadd.s32 %s242, %s243
      %s245 = smul.addr %s244, 4
      %s246 = scalar_lea.vmem %s1, %s245
      %p247 = pneg %p79
      %p248 = pneg %p76
      %p249 = pneg %p100
      %p250 = pneg %p97
      %p251 = pneg %p128
      %p252 = pneg %p125
      %p253 = scmp.lt.s32.totalorder %s20, 1
      %s254 = scalar_select %p253, %s20, 1
      %p255 = scmp.lt.s32.totalorder %s21, 0
      %s256 = scalar_select %p255, %s21, 0
      %s257 = sadd.s32 %s256, %s254
      %s258 = smul.addr %s257, 8
      %s259 = scalar_lea.vmem %s3, %s258
      %p260 = pneg %p156
      %p261 = pneg %p153
      %p262 = scmp.lt.s32.totalorder %s20, 1
      %s263 = scalar_select %p262, %s20, 1
      %p264 = scmp.lt.s32.totalorder %s21, 0
      %s265 = scalar_select %p264, %s21, 0
      %s266 = sadd.s32 %s265, %s263
      %s267 = smul.addr %s266, 8
      %s268 = scalar_lea.vmem %s4, %s267
      %s269 = smul.u32 16, %s21
      %s270 = ssub.s32 18, %s269
      %p271 = scmp.lt.s32.totalorder %s270, 16
      %s272 = scalar_select %p271, %s270, 16
      %s273 = smul.u32 64, %s272
      %s274 = smul.u32 %s273, 3
      %p275 = scmp.lt.s32.totalorder %s20, 1
      %s276 = scalar_select %p275, %s20, 1
      %p277 = scmp.lt.s32.totalorder %s269, 17
      %s278 = scalar_select %p277, %s269, 17
      %s279 = smul.addr %s278, 3
      %s280 = smul.addr %s276, 54
      %s281 = sadd.s32 %s279, %s280
      %s282 = smul.addr %s281, 4
      %s283 = scalar_lea.vmem %s0, %s282
      %s284 = smul.u32 16, %s21
      %s285 = ssub.s32 18, %s284
      %p286 = scmp.lt.s32.totalorder %s285, 16
      %s287 = scalar_select %p286, %s285, 16
      %s288 = smul.u32 64, %s287
      %s289 = smul.u32 %s288, 3
      %p290 = scmp.lt.s32.totalorder %s20, 1
      %s291 = scalar_select %p290, %s20, 1
      %p292 = scmp.lt.s32.totalorder %s21, 0
      %s293 = scalar_select %p292, %s21, 0
      %s294 = smul.addr %s293, 6
      %s295 = smul.addr %s291, 6
      %s296 = sadd.s32 %s294, %s295
      %s297 = smul.addr %s296, 4
      %s298 = scalar_lea.vmem %s1, %s297
      %p299 = scmp.lt.s32.totalorder %s20, 1
      %s300 = scalar_select %p299, %s20, 1
      %p301 = scmp.lt.s32.totalorder %s21, 0
      %s302 = scalar_select %p301, %s21, 0
      %s303 = sadd.s32 %s302, %s300
      %s304 = smul.addr %s303, 8
      %s305 = scalar_lea.vmem %s3, %s304
      %p306 = scmp.lt.s32.totalorder %s20, 1
      %s307 = scalar_select %p306, %s20, 1
      %p308 = scmp.lt.s32.totalorder %s21, 0
      %s309 = scalar_select %p308, %s21, 0
      %s310 = sadd.s32 %s309, %s307
      %s311 = smul.addr %s310, 8
      %s312 = scalar_lea.vmem %s4, %s311
      %v314 = vld [vmem:[%s283] sm:$0xf]
      %v315 = vld [vmem:[%s283 + $0x4] sm:$0xf]
      %v316 = vld [vmem:[%s283 + $0x8] sm:$0x1]
      %v317 = vld [vmem:[%s283 + $0xc] sm:$0xf]
      %v318 = vld [vmem:[%s283 + $0x10] sm:$0xf]
      %v319 = vld [vmem:[%s283 + $0x14] sm:$0x1]
      %v320 = vld [vmem:[%s283 + $0x18] sm:$0xf]
      %v321 = vld [vmem:[%s283 + $0x1c] sm:$0xf]
      %v322 = vld [vmem:[%s283 + $0x20] sm:$0x1]
      %v323 = vld [vmem:[%s283 + $0x24] sm:$0xf]
      %v324 = vld [vmem:[%s283 + $0x28] sm:$0xf]
      %v325 = vld [vmem:[%s283 + $0x2c] sm:$0x1]
      %v326 = vld [vmem:[%s283 + $0x30] sm:$0xf]
      %v327 = vld [vmem:[%s283 + $0x34] sm:$0xf]
      %v328 = vld [vmem:[%s283 + $0x38] sm:$0x1]
      %v329 = vld [vmem:[%s283 + $0x3c] sm:$0xf]
      %v330 = vld [vmem:[%s283 + $0x40] sm:$0xf]
      %v331 = vld [vmem:[%s283 + $0x44] sm:$0x1]
      %v332 = vld [vmem:[%s283 + $0x48] sm:$0xf]
      %v333 = vld [vmem:[%s283 + $0x4c] sm:$0xf]
      %v334 = vld [vmem:[%s283 + $0x50] sm:$0x1]
      %v335 = vld [vmem:[%s283 + $0x54] sm:$0xf]
      %v336 = vld [vmem:[%s283 + $0x58] sm:$0xf]
      %v337 = vld [vmem:[%s283 + $0x5c] sm:$0x1]
      %v338 = vld [vmem:[%s283 + $0x60] sm:$0xf]
      %v339 = vld [vmem:[%s283 + $0x64] sm:$0xf]
      %v340 = vld [vmem:[%s283 + $0x68] sm:$0x1]
      %v341 = vld [vmem:[%s283 + $0x6c] sm:$0xf]
      %v342 = vld [vmem:[%s283 + $0x70] sm:$0xf]
      %v343 = vld [vmem:[%s283 + $0x74] sm:$0x1]
      %v344 = vld [vmem:[%s283 + $0x78] sm:$0xf]
      %v345 = vld [vmem:[%s283 + $0x7c] sm:$0xf]
      %v346 = vld [vmem:[%s283 + $0x80] sm:$0x1]
      %v347 = vld [vmem:[%s283 + $0x84] sm:$0xf]
      %v348 = vld [vmem:[%s283 + $0x88] sm:$0xf]
      %v349 = vld [vmem:[%s283 + $0x8c] sm:$0x1]
      %v350 = vld [vmem:[%s283 + $0x90] sm:$0xf]
      %v351 = vld [vmem:[%s283 + $0x94] sm:$0xf]
      %v352 = vld [vmem:[%s283 + $0x98] sm:$0x1]
      %v353 = vld [vmem:[%s283 + $0x9c] sm:$0xf]
      %v354 = vld [vmem:[%s283 + $0xa0] sm:$0xf]
      %v355 = vld [vmem:[%s283 + $0xa4] sm:$0x1]
      %v356 = vld [vmem:[%s283 + $0xa8] sm:$0xf]
      %v357 = vld [vmem:[%s283 + $0xac] sm:$0xf]
      %v358 = vld [vmem:[%s283 + $0xb0] sm:$0x1]
      %v359 = vld [vmem:[%s283 + $0xb4] sm:$0xf]
      %v360 = vld [vmem:[%s283 + $0xb8] sm:$0xf]
      %v361 = vld [vmem:[%s283 + $0xbc] sm:$0x1]
      %v362 = vld [vmem:[%s298] sm:$0xf]
      %v363 = vld [vmem:[%s298 + $0x4] sm:$0xf]
      %v364 = vld [vmem:[%s298 + $0x8] sm:$0x1]
      %v365 = vld [vmem:[%s298 + $0xc] sm:$0xf]
      %v366 = vld [vmem:[%s298 + $0x10] sm:$0xf]
      %v367 = vld [vmem:[%s298 + $0x14] sm:$0x1]
      %v368 = vld [vmem:[%s2] sm:$0xf]
      %s369 = scalar_lea.vmem %s2, 12
      %v370 = vld [vmem:[%s369] sm:$0xf]
      %v403 = vunpack.c.l.b16 %v317
      %v404 = vunpack.c.l.b16 %v318
      %v405 = vunpack.c.l.b16 %v320
      %v406 = vunpack.c.l.b16 %v321
      %v407 = vunpack.c.l.b16 %v323
      %v408 = vunpack.c.l.b16 %v324
      %v409 = vunpack.c.l.b16 %v326
      %v410 = vunpack.c.l.b16 %v327
      %v411 = vunpack.c.l.b16 %v329
      %v412 = vunpack.c.l.b16 %v330
      %v413 = vunpack.c.l.b16 %v332
      %v414 = vunpack.c.l.b16 %v333
      %v415 = vunpack.c.l.b16 %v335
      %v416 = vunpack.c.l.b16 %v336
      %v417 = vunpack.c.l.b16 %v338
      %v418 = vunpack.c.l.b16 %v339
      %v419 = vunpack.c.l.b16 %v341
      %v420 = vunpack.c.l.b16 %v342
      %v421 = vunpack.c.l.b16 %v344
      %v422 = vunpack.c.l.b16 %v345
      %v423 = vunpack.c.l.b16 %v347
      %v424 = vunpack.c.l.b16 %v348
      %v425 = vunpack.c.l.b16 %v350
      %v426 = vunpack.c.l.b16 %v351
      %v427 = vunpack.c.l.b16 %v353
      %v428 = vunpack.c.l.b16 %v354
      %v429 = vunpack.c.l.b16 %v356
      %v430 = vunpack.c.l.b16 %v357
      %v431 = vunpack.c.l.b16 %v359
      %v432 = vunpack.c.l.b16 %v360
      %v433 = vunpack.c.l.b16 %v362
      %v434 = vunpack.c.l.b16 %v363
      %v435 = vpack.c.b16 %v404, %v403
      %v436 = vpack.c.b16 %v406, %v405
      %v437 = vpack.c.b16 %v408, %v407
      %v438 = vpack.c.b16 %v410, %v409
      %v439 = vpack.c.b16 %v412, %v411
      %v440 = vpack.c.b16 %v414, %v413
      %v441 = vpack.c.b16 %v416, %v415
      %v442 = vpack.c.b16 %v418, %v417
      %v443 = vpack.c.b16 %v420, %v419
      %v444 = vpack.c.b16 %v422, %v421
      %v445 = vpack.c.b16 %v424, %v423
      %v446 = vpack.c.b16 %v426, %v425
      %v447 = vpack.c.b16 %v428, %v427
      %v448 = vpack.c.b16 %v430, %v429
      %v449 = vpack.c.b16 %v432, %v431
      %v450 = vpack.c.b16 %v434, %v433
      %vm451 = vcmask 31744
      %v453 = vsel %vm451, %v370, 0
      %v456 = vsel %vm451, %v435, 0
      %v459 = vsel %vm451, %v436, 0
      %v462 = vsel %vm451, %v437, 0
      %v465 = vsel %vm451, %v438, 0
      %v468 = vsel %vm451, %v439, 0
      %v471 = vsel %vm451, %v440, 0
      %v474 = vsel %vm451, %v441, 0
      %v477 = vsel %vm451, %v442, 0
      %v480 = vsel %vm451, %v443, 0
      %v483 = vsel %vm451, %v444, 0
      %v486 = vsel %vm451, %v445, 0
      %v489 = vsel %vm451, %v446, 0
      %v492 = vsel %vm451, %v447, 0
      %v495 = vsel %vm451, %v448, 0
      %v498 = vsel %vm451, %v449, 0
      %v501 = vsel %vm451, %v450, 0
      %503 = vmatprep.subr.bf16.mxu0 0
      %504 = vmatpush1.bf16.xpose.msra.mxu0 %v477
      %505 = vmatprep.subr.bf16.mxu0 0
      %506 = vmatpush1.bf16.xpose.msra.mxu0 %v474
      %507 = vmatprep.subr.bf16.mxu0 0
      %508 = vmatpush1.bf16.xpose.msra.mxu0 %v471
      %509 = vmatprep.subr.bf16.mxu0 0
      %510 = vmatpush1.bf16.xpose.msra.mxu0 %v468
      %511 = vmatprep.subr.bf16.mxu0 0
      %512 = vmatpush1.bf16.xpose.msra.mxu0 %v465
      %513 = vmatprep.subr.bf16.mxu0 0
      %514 = vmatpush1.bf16.xpose.msra.mxu0 %v462
      %515 = vmatprep.subr.bf16.mxu0 0
      %516 = vmatpush1.bf16.xpose.msra.mxu0 %v459
      %517 = vmatprep.subr.bf16.mxu0 0
      %518 = vmatpush1.bf16.xpose.msra.mxu0 %v456
      %519 = vmatprep.subr.bf16.mxu0 0
      %520 = vmatpush2.bf16.xpose.msra.mxu0 %v501
      %521 = vmatprep.subr.bf16.mxu0 0
      %522 = vmatpush2.bf16.xpose.msra.mxu0 %v498
      %523 = vmatprep.subr.bf16.mxu0 0
      %524 = vmatpush2.bf16.xpose.msra.mxu0 %v495
      %525 = vmatprep.subr.bf16.mxu0 0
      %526 = vmatpush2.bf16.xpose.msra.mxu0 %v492
      %527 = vmatprep.subr.bf16.mxu0 0
      %528 = vmatpush2.bf16.xpose.msra.mxu0 %v489
      %529 = vmatprep.subr.bf16.mxu0 0
      %530 = vmatpush2.bf16.xpose.msra.mxu0 %v486
      %531 = vmatprep.subr.bf16.mxu0 0
      %532 = vmatpush2.bf16.xpose.msra.mxu0 %v483
      %533 = vmatprep.subr.bf16.mxu0 0
      %534 = vmatpush2.bf16.xpose.msra.mxu0 %v480
      %535 = vmatprep.mubr.bf16.mxu0 0
      %536 = vmatmul.mubr.bf16.gmra.mxu0 %v453
      %v537 = vpop.f32.mrf.mxu0
      %v538 = vadd.f32 0.0, %v537
      %v539 = vpop.f32.mrf.mxu0
      %v540 = vadd.f32 0.0, %v539
      %v541 = vpop.f32.mrf.mxu0
      %v542 = vpop.f32.mrf.mxu0
      %543 = vdwg.mxu0
      %v546 = vunpack.c.l.b16 %v314
      %v547 = vunpack.c.l.b16 %v315
      %v548 = vpack.c.b16 %v547, %v546
      %v550 = vsel %vm451, %v368, 0
      %v553 = vsel %vm451, %v548, 0
      %555 = vmatprep.subr.bf16.mxu0 0
      %556 = vmatpush1.bf16.xpose.msra.mxu0 %v474
      %557 = vmatprep.subr.bf16.mxu0 0
      %558 = vmatpush1.bf16.xpose.msra.mxu0 %v471
      %559 = vmatprep.subr.bf16.mxu0 0
      %560 = vmatpush1.bf16.xpose.msra.mxu0 %v468
      %561 = vmatprep.subr.bf16.mxu0 0
      %562 = vmatpush1.bf16.xpose.msra.mxu0 %v465
      %563 = vmatprep.subr.bf16.mxu0 0
      %564 = vmatpush1.bf16.xpose.msra.mxu0 %v462
      %565 = vmatprep.subr.bf16.mxu0 0
      %566 = vmatpush1.bf16.xpose.msra.mxu0 %v459
      %567 = vmatprep.subr.bf16.mxu0 0
      %568 = vmatpush1.bf16.xpose.msra.mxu0 %v456
      %569 = vmatprep.subr.bf16.mxu0 0
      %570 = vmatpush1.bf16.xpose.msra.mxu0 %v553
      %571 = vmatprep.subr.bf16.mxu0 0
      %572 = vmatpush2.bf16.xpose.msra.mxu0 %v498
      %573 = vmatprep.subr.bf16.mxu0 0
      %574 = vmatpush2.bf16.xpose.msra.mxu0 %v495
      %575 = vmatprep.subr.bf16.mxu0 0
      %576 = vmatpush2.bf16.xpose.msra.mxu0 %v492
      %577 = vmatprep.subr.bf16.mxu0 0
      %578 = vmatpush2.bf16.xpose.msra.mxu0 %v489
      %579 = vmatprep.subr.bf16.mxu0 0
      %580 = vmatpush2.bf16.xpose.msra.mxu0 %v486
      %581 = vmatprep.subr.bf16.mxu0 0
      %582 = vmatpush2.bf16.xpose.msra.mxu0 %v483
      %583 = vmatprep.subr.bf16.mxu0 0
      %584 = vmatpush2.bf16.xpose.msra.mxu0 %v480
      %585 = vmatprep.subr.bf16.mxu0 0
      %586 = vmatpush2.bf16.xpose.msra.mxu0 %v477
      %587 = vmatprep.mubr.bf16.mxu0 0
      %588 = vmatmul.mubr.bf16.gmra.mxu0 %v550
      %v589 = vpop.f32.mrf.mxu0
      %v590 = vadd.f32 %v538, %v589
      %v591 = vpop.f32.mrf.mxu0
      %v592 = vadd.f32 %v540, %v591
      %v593 = vpop.f32.mrf.mxu0
      %v594 = vpop.f32.mrf.mxu0
      %595 = vdwg.mxu0
      %s596 = scalar_lea.vmem %s2, 24
      %v597 = vld [vmem:[%s596] sm:$0xf]
      %v600 = vunpack.c.l.b16 %v365
      %v601 = vunpack.c.l.b16 %v366
      %v602 = vpack.c.b16 %v601, %v600
      %v604 = vsel %vm451, %v597, 0
      %v607 = vsel %vm451, %v602, 0
      %609 = vmatprep.subr.bf16.mxu0 0
      %610 = vmatpush1.bf16.xpose.msra.mxu0 %v480
      %611 = vmatprep.subr.bf16.mxu0 0
      %612 = vmatpush1.bf16.xpose.msra.mxu0 %v477
      %613 = vmatprep.subr.bf16.mxu0 0
      %614 = vmatpush1.bf16.xpose.msra.mxu0 %v474
      %615 = vmatprep.subr.bf16.mxu0 0
      %616 = vmatpush1.bf16.xpose.msra.mxu0 %v471
      %617 = vmatprep.subr.bf16.mxu0 0
      %618 = vmatpush1.bf16.xpose.msra.mxu0 %v468
      %619 = vmatprep.subr.bf16.mxu0 0
      %620 = vmatpush1.bf16.xpose.msra.mxu0 %v465
      %621 = vmatprep.subr.bf16.mxu0 0
      %622 = vmatpush1.bf16.xpose.msra.mxu0 %v462
      %623 = vmatprep.subr.bf16.mxu0 0
      %624 = vmatpush1.bf16.xpose.msra.mxu0 %v459
      %625 = vmatprep.subr.bf16.mxu0 0
      %626 = vmatpush2.bf16.xpose.msra.mxu0 %v607
      %627 = vmatprep.subr.bf16.mxu0 0
      %628 = vmatpush2.bf16.xpose.msra.mxu0 %v501
      %629 = vmatprep.subr.bf16.mxu0 0
      %630 = vmatpush2.bf16.xpose.msra.mxu0 %v498
      %631 = vmatprep.subr.bf16.mxu0 0
      %632 = vmatpush2.bf16.xpose.msra.mxu0 %v495
      %633 = vmatprep.subr.bf16.mxu0 0
      %634 = vmatpush2.bf16.xpose.msra.mxu0 %v492
      %635 = vmatprep.subr.bf16.mxu0 0
      %636 = vmatpush2.bf16.xpose.msra.mxu0 %v489
      %637 = vmatprep.subr.bf16.mxu0 0
      %638 = vmatpush2.bf16.xpose.msra.mxu0 %v486
      %639 = vmatprep.subr.bf16.mxu0 0
      %640 = vmatpush2.bf16.xpose.msra.mxu0 %v483
      %641 = vmatprep.mubr.bf16.mxu0 0
      %642 = vmatmul.mubr.bf16.gmra.mxu0 %v604
      %v643 = vpop.f32.mrf.mxu0
      %v644 = vadd.f32 0.0, %v643
      %v645 = vpop.f32.mrf.mxu0
      %v646 = vadd.f32 0.0, %v645
      %v647 = vpop.f32.mrf.mxu0
      %v648 = vpop.f32.mrf.mxu0
      %649 = vdwg.mxu0
      %v650 = vadd.f32 %v590, %v644
      %v651 = vadd.f32 %v592, %v646
      %vm652 = vsmask.f32 3328
      %vm653 = vsmask.f32 7440
      %vm654 = vmor %vm652, %vm653
      %v656 = vshrl.u32 %v314, 16
      %v658 = vrot.slane %v656, 4
      %v659 = vshll.u32 %v314, 16
      %v661 = vrot.slane %v659, 5
      %v662 = vor.u32 %v658, %v661
      %v663 = vrot.slane %v662, 4
      %v665 = vshll.u32 %v315, 16
      %v667 = vrot.slane %v665, 5
      %v668 = vsel %vm654, %v663, %v667
      %v669 = vshrl.u32 %v315, 16
      %v671 = vrot.slane %v669, 4
      %v672 = vor.u32 %v671, %v667
      %v673 = vrot.slane %v672, 4
      %v675 = vshll.u32 %v316, 16
      %v677 = vrot.slane %v675, 5
      %v678 = vsel %vm654, %v673, %v677
      %v680 = vshrl.u32 %v317, 16
      %v682 = vrot.slane %v680, 4
      %v683 = vshll.u32 %v317, 16
      %v685 = vrot.slane %v683, 5
      %v686 = vor.u32 %v682, %v685
      %v687 = vrot.slane %v686, 4
      %v689 = vshll.u32 %v318, 16
      %v691 = vrot.slane %v689, 5
      %v692 = vsel %vm654, %v687, %v691
      %v693 = vshrl.u32 %v318, 16
      %v695 = vrot.slane %v693, 4
      %v696 = vor.u32 %v695, %v691
      %v697 = vrot.slane %v696, 4
      %v699 = vshll.u32 %v319, 16
      %v701 = vrot.slane %v699, 5
      %v702 = vsel %vm654, %v697, %v701
      %v704 = vshrl.u32 %v320, 16
      %v706 = vrot.slane %v704, 4
      %v707 = vshll.u32 %v320, 16
      %v709 = vrot.slane %v707, 5
      %v710 = vor.u32 %v706, %v709
      %v711 = vrot.slane %v710, 4
      %v713 = vshll.u32 %v321, 16
      %v715 = vrot.slane %v713, 5
      %v716 = vsel %vm654, %v711, %v715
      %v717 = vshrl.u32 %v321, 16
      %v719 = vrot.slane %v717, 4
      %v720 = vor.u32 %v719, %v715
      %v721 = vrot.slane %v720, 4
      %v723 = vshll.u32 %v322, 16
      %v725 = vrot.slane %v723, 5
      %v726 = vsel %vm654, %v721, %v725
      %v728 = vshrl.u32 %v323, 16
      %v730 = vrot.slane %v728, 4
      %v731 = vshll.u32 %v323, 16
      %v733 = vrot.slane %v731, 5
      %v734 = vor.u32 %v730, %v733
      %v735 = vrot.slane %v734, 4
      %v737 = vshll.u32 %v324, 16
      %v739 = vrot.slane %v737, 5
      %v740 = vsel %vm654, %v735, %v739
      %v741 = vshrl.u32 %v324, 16
      %v743 = vrot.slane %v741, 4
      %v744 = vor.u32 %v743, %v739
      %v745 = vrot.slane %v744, 4
      %v747 = vshll.u32 %v325, 16
      %v749 = vrot.slane %v747, 5
      %v750 = vsel %vm654, %v745, %v749
      %v752 = vshrl.u32 %v326, 16
      %v754 = vrot.slane %v752, 4
      %v755 = vshll.u32 %v326, 16
      %v757 = vrot.slane %v755, 5
      %v758 = vor.u32 %v754, %v757
      %v759 = vrot.slane %v758, 4
      %v761 = vshll.u32 %v327, 16
      %v763 = vrot.slane %v761, 5
      %v764 = vsel %vm654, %v759, %v763
      %v765 = vshrl.u32 %v327, 16
      %v767 = vrot.slane %v765, 4
      %v768 = vor.u32 %v767, %v763
      %v769 = vrot.slane %v768, 4
      %v771 = vshll.u32 %v328, 16
      %v773 = vrot.slane %v771, 5
      %v774 = vsel %vm654, %v769, %v773
      %v776 = vshrl.u32 %v329, 16
      %v778 = vrot.slane %v776, 4
      %v779 = vshll.u32 %v329, 16
      %v781 = vrot.slane %v779, 5
      %v782 = vor.u32 %v778, %v781
      %v783 = vrot.slane %v782, 4
      %v785 = vshll.u32 %v330, 16
      %v787 = vrot.slane %v785, 5
      %v788 = vsel %vm654, %v783, %v787
      %v789 = vshrl.u32 %v330, 16
      %v791 = vrot.slane %v789, 4
      %v792 = vor.u32 %v791, %v787
      %v793 = vrot.slane %v792, 4
      %v795 = vshll.u32 %v331, 16
      %v797 = vrot.slane %v795, 5
      %v798 = vsel %vm654, %v793, %v797
      %v800 = vshrl.u32 %v332, 16
      %v802 = vrot.slane %v800, 4
      %v803 = vshll.u32 %v332, 16
      %v805 = vrot.slane %v803, 5
      %v806 = vor.u32 %v802, %v805
      %v807 = vrot.slane %v806, 4
      %v809 = vshll.u32 %v333, 16
      %v811 = vrot.slane %v809, 5
      %v812 = vsel %vm654, %v807, %v811
      %v813 = vshrl.u32 %v333, 16
      %v815 = vrot.slane %v813, 4
      %v816 = vor.u32 %v815, %v811
      %v817 = vrot.slane %v816, 4
      %v819 = vshll.u32 %v334, 16
      %v821 = vrot.slane %v819, 5
      %v822 = vsel %vm654, %v817, %v821
      %v824 = vshrl.u32 %v335, 16
      %v826 = vrot.slane %v824, 4
      %v827 = vshll.u32 %v335, 16
      %v829 = vrot.slane %v827, 5
      %v830 = vor.u32 %v826, %v829
      %v831 = vrot.slane %v830, 4
      %v833 = vshll.u32 %v336, 16
      %v835 = vrot.slane %v833, 5
      %v836 = vsel %vm654, %v831, %v835
      %v837 = vshrl.u32 %v336, 16
      %v839 = vrot.slane %v837, 4
      %v840 = vor.u32 %v839, %v835
      %v841 = vrot.slane %v840, 4
      %v843 = vshll.u32 %v337, 16
      %v845 = vrot.slane %v843, 5
      %v846 = vsel %vm654, %v841, %v845
      %v848 = vshrl.u32 %v338, 16
      %v850 = vrot.slane %v848, 4
      %v851 = vshll.u32 %v338, 16
      %v853 = vrot.slane %v851, 5
      %v854 = vor.u32 %v850, %v853
      %v855 = vrot.slane %v854, 4
      %v857 = vshll.u32 %v339, 16
      %v859 = vrot.slane %v857, 5
      %v860 = vsel %vm654, %v855, %v859
      %v861 = vshrl.u32 %v339, 16
      %v863 = vrot.slane %v861, 4
      %v864 = vor.u32 %v863, %v859
      %v865 = vrot.slane %v864, 4
      %v867 = vshll.u32 %v340, 16
      %v869 = vrot.slane %v867, 5
      %v870 = vsel %vm654, %v865, %v869
      %v872 = vshrl.u32 %v341, 16
      %v874 = vrot.slane %v872, 4
      %v875 = vshll.u32 %v341, 16
      %v877 = vrot.slane %v875, 5
      %v878 = vor.u32 %v874, %v877
      %v879 = vrot.slane %v878, 4
      %v881 = vshll.u32 %v342, 16
      %v883 = vrot.slane %v881, 5
      %v884 = vsel %vm654, %v879, %v883
      %v885 = vshrl.u32 %v342, 16
      %v887 = vrot.slane %v885, 4
      %v888 = vor.u32 %v887, %v883
      %v889 = vrot.slane %v888, 4
      %v891 = vshll.u32 %v343, 16
      %v893 = vrot.slane %v891, 5
      %v894 = vsel %vm654, %v889, %v893
      %v896 = vshrl.u32 %v344, 16
      %v898 = vrot.slane %v896, 4
      %v899 = vshll.u32 %v344, 16
      %v901 = vrot.slane %v899, 5
      %v902 = vor.u32 %v898, %v901
      %v903 = vrot.slane %v902, 4
      %v905 = vshll.u32 %v345, 16
      %v907 = vrot.slane %v905, 5
      %v908 = vsel %vm654, %v903, %v907
      %v909 = vshrl.u32 %v345, 16
      %v911 = vrot.slane %v909, 4
      %v912 = vor.u32 %v911, %v907
      %v913 = vrot.slane %v912, 4
      %v915 = vshll.u32 %v346, 16
      %v917 = vrot.slane %v915, 5
      %v918 = vsel %vm654, %v913, %v917
      %v920 = vshrl.u32 %v347, 16
      %v922 = vrot.slane %v920, 4
      %v923 = vshll.u32 %v347, 16
      %v925 = vrot.slane %v923, 5
      %v926 = vor.u32 %v922, %v925
      %v927 = vrot.slane %v926, 4
      %v929 = vshll.u32 %v348, 16
      %v931 = vrot.slane %v929, 5
      %v932 = vsel %vm654, %v927, %v931
      %v933 = vshrl.u32 %v348, 16
      %v935 = vrot.slane %v933, 4
      %v936 = vor.u32 %v935, %v931
      %v937 = vrot.slane %v936, 4
      %v939 = vshll.u32 %v349, 16
      %v941 = vrot.slane %v939, 5
      %v942 = vsel %vm654, %v937, %v941
      %v944 = vshrl.u32 %v350, 16
      %v946 = vrot.slane %v944, 4
      %v947 = vshll.u32 %v350, 16
      %v949 = vrot.slane %v947, 5
      %v950 = vor.u32 %v946, %v949
      %v951 = vrot.slane %v950, 4
      %v953 = vshll.u32 %v351, 16
      %v955 = vrot.slane %v953, 5
      %v956 = vsel %vm654, %v951, %v955
      %v957 = vshrl.u32 %v351, 16
      %v959 = vrot.slane %v957, 4
      %v960 = vor.u32 %v959, %v955
      %v961 = vrot.slane %v960, 4
      %v963 = vshll.u32 %v352, 16
      %v965 = vrot.slane %v963, 5
      %v966 = vsel %vm654, %v961, %v965
      %v968 = vshrl.u32 %v353, 16
      %v970 = vrot.slane %v968, 4
      %v971 = vshll.u32 %v353, 16
      %v973 = vrot.slane %v971, 5
      %v974 = vor.u32 %v970, %v973
      %v975 = vrot.slane %v974, 4
      %v977 = vshll.u32 %v354, 16
      %v979 = vrot.slane %v977, 5
      %v980 = vsel %vm654, %v975, %v979
      %v981 = vshrl.u32 %v354, 16
      %v983 = vrot.slane %v981, 4
      %v984 = vor.u32 %v983, %v979
      %v985 = vrot.slane %v984, 4
      %v987 = vshll.u32 %v355, 16
      %v989 = vrot.slane %v987, 5
      %v990 = vsel %vm654, %v985, %v989
      %v992 = vshrl.u32 %v356, 16
      %v994 = vrot.slane %v992, 4
      %v995 = vshll.u32 %v356, 16
      %v997 = vrot.slane %v995, 5
      %v998 = vor.u32 %v994, %v997
      %v999 = vrot.slane %v998, 4
      %v1001 = vshll.u32 %v357, 16
      %v1003 = vrot.slane %v1001, 5
      %v1004 = vsel %vm654, %v999, %v1003
      %v1005 = vshrl.u32 %v357, 16
      %v1007 = vrot.slane %v1005, 4
      %v1008 = vor.u32 %v1007, %v1003
      %v1009 = vrot.slane %v1008, 4
      %v1011 = vshll.u32 %v358, 16
      %v1013 = vrot.slane %v1011, 5
      %v1014 = vsel %vm654, %v1009, %v1013
      %v1016 = vshrl.u32 %v359, 16
      %v1018 = vrot.slane %v1016, 4
      %v1019 = vshll.u32 %v359, 16
      %v1021 = vrot.slane %v1019, 5
      %v1022 = vor.u32 %v1018, %v1021
      %v1023 = vrot.slane %v1022, 4
      %v1025 = vshll.u32 %v360, 16
      %v1027 = vrot.slane %v1025, 5
      %v1028 = vsel %vm654, %v1023, %v1027
      %v1029 = vshrl.u32 %v360, 16
      %v1031 = vrot.slane %v1029, 4
      %v1032 = vor.u32 %v1031, %v1027
      %v1033 = vrot.slane %v1032, 4
      %v1035 = vshll.u32 %v361, 16
      %v1037 = vrot.slane %v1035, 5
      %v1038 = vsel %vm654, %v1033, %v1037
      %v1040 = vshrl.u32 %v362, 16
      %v1042 = vrot.slane %v1040, 4
      %v1043 = vshll.u32 %v362, 16
      %v1045 = vrot.slane %v1043, 5
      %v1046 = vor.u32 %v1042, %v1045
      %v1047 = vrot.slane %v1046, 4
      %v1049 = vshll.u32 %v363, 16
      %v1051 = vrot.slane %v1049, 5
      %v1052 = vsel %vm654, %v1047, %v1051
      %v1053 = vshrl.u32 %v363, 16
      %v1055 = vrot.slane %v1053, 4
      %v1056 = vor.u32 %v1055, %v1051
      %v1057 = vrot.slane %v1056, 4
      %v1059 = vshll.u32 %v364, 16
      %v1061 = vrot.slane %v1059, 5
      %v1062 = vsel %vm654, %v1057, %v1061
      %v1064 = vshrl.u32 %v365, 16
      %v1066 = vrot.slane %v1064, 4
      %v1067 = vshll.u32 %v365, 16
      %v1069 = vrot.slane %v1067, 5
      %v1070 = vor.u32 %v1066, %v1069
      %v1071 = vrot.slane %v1070, 4
      %v1073 = vshll.u32 %v366, 16
      %v1075 = vrot.slane %v1073, 5
      %v1076 = vsel %vm654, %v1071, %v1075
      %v1077 = vshrl.u32 %v366, 16
      %v1079 = vrot.slane %v1077, 4
      %v1080 = vor.u32 %v1079, %v1075
      %v1081 = vrot.slane %v1080, 4
      %v1083 = vshll.u32 %v367, 16
      %v1085 = vrot.slane %v1083, 5
      %v1086 = vsel %vm654, %v1081, %v1085
      %s1087 = scalar_lea.vmem %s2, 4
      %v1088 = vld [vmem:[%s1087] sm:$0xf]
      %v1089 = vunpack.c.l.b16 %v668
      %v1090 = vunpack.c.l.b16 %v678
      %v1091 = vunpack.c.l.b16 %v692
      %v1092 = vunpack.c.l.b16 %v702
      %v1093 = vunpack.c.l.b16 %v716
      %v1094 = vunpack.c.l.b16 %v726
      %v1095 = vunpack.c.l.b16 %v740
      %v1096 = vunpack.c.l.b16 %v750
      %v1097 = vunpack.c.l.b16 %v764
      %v1098 = vunpack.c.l.b16 %v774
      %v1099 = vunpack.c.l.b16 %v788
      %v1100 = vunpack.c.l.b16 %v798
      %v1101 = vunpack.c.l.b16 %v812
      %v1102 = vunpack.c.l.b16 %v822
      %v1103 = vunpack.c.l.b16 %v836
      %v1104 = vunpack.c.l.b16 %v846
      %v1105 = vunpack.c.l.b16 %v860
      %v1106 = vunpack.c.l.b16 %v870
      %v1107 = vunpack.c.l.b16 %v884
      %v1108 = vunpack.c.l.b16 %v894
      %v1109 = vunpack.c.l.b16 %v908
      %v1110 = vunpack.c.l.b16 %v918
      %v1111 = vunpack.c.l.b16 %v932
      %v1112 = vunpack.c.l.b16 %v942
      %v1113 = vunpack.c.l.b16 %v956
      %v1114 = vunpack.c.l.b16 %v966
      %v1115 = vunpack.c.l.b16 %v980
      %v1116 = vunpack.c.l.b16 %v990
      %v1117 = vunpack.c.l.b16 %v1004
      %v1118 = vunpack.c.l.b16 %v1014
      %v1119 = vunpack.c.l.b16 %v1028
      %v1120 = vunpack.c.l.b16 %v1038
      %v1121 = vpack.c.b16 %v1090, %v1089
      %v1122 = vpack.c.b16 %v1092, %v1091
      %v1123 = vpack.c.b16 %v1094, %v1093
      %v1124 = vpack.c.b16 %v1096, %v1095
      %v1125 = vpack.c.b16 %v1098, %v1097
      %v1126 = vpack.c.b16 %v1100, %v1099
      %v1127 = vpack.c.b16 %v1102, %v1101
      %v1128 = vpack.c.b16 %v1104, %v1103
      %v1129 = vpack.c.b16 %v1106, %v1105
      %v1130 = vpack.c.b16 %v1108, %v1107
      %v1131 = vpack.c.b16 %v1110, %v1109
      %v1132 = vpack.c.b16 %v1112, %v1111
      %v1133 = vpack.c.b16 %v1114, %v1113
      %v1134 = vpack.c.b16 %v1116, %v1115
      %v1135 = vpack.c.b16 %v1118, %v1117
      %v1136 = vpack.c.b16 %v1120, %v1119
      %v1138 = vsel %vm451, %v1088, 0
      %v1141 = vsel %vm451, %v1121, 0
      %v1144 = vsel %vm451, %v1122, 0
      %v1147 = vsel %vm451, %v1123, 0
      %v1150 = vsel %vm451, %v1124, 0
      %v1153 = vsel %vm451, %v1125, 0
      %v1156 = vsel %vm451, %v1126, 0
      %v1159 = vsel %vm451, %v1127, 0
      %v1162 = vsel %vm451, %v1128, 0
      %v1165 = vsel %vm451, %v1129, 0
      %v1168 = vsel %vm451, %v1130, 0
      %v1171 = vsel %vm451, %v1131, 0
      %v1174 = vsel %vm451, %v1132, 0
      %v1177 = vsel %vm451, %v1133, 0
      %v1180 = vsel %vm451, %v1134, 0
      %v1183 = vsel %vm451, %v1135, 0
      %v1186 = vsel %vm451, %v1136, 0
      %1188 = vmatprep.subr.bf16.mxu0 0
      %1189 = vmatpush1.bf16.xpose.msra.mxu0 %v1162
      %1190 = vmatprep.subr.bf16.mxu0 0
      %1191 = vmatpush1.bf16.xpose.msra.mxu0 %v1159
      %1192 = vmatprep.subr.bf16.mxu0 0
      %1193 = vmatpush1.bf16.xpose.msra.mxu0 %v1156
      %1194 = vmatprep.subr.bf16.mxu0 0
      %1195 = vmatpush1.bf16.xpose.msra.mxu0 %v1153
      %1196 = vmatprep.subr.bf16.mxu0 0
      %1197 = vmatpush1.bf16.xpose.msra.mxu0 %v1150
      %1198 = vmatprep.subr.bf16.mxu0 0
      %1199 = vmatpush1.bf16.xpose.msra.mxu0 %v1147
      %1200 = vmatprep.subr.bf16.mxu0 0
      %1201 = vmatpush1.bf16.xpose.msra.mxu0 %v1144
      %1202 = vmatprep.subr.bf16.mxu0 0
      %1203 = vmatpush1.bf16.xpose.msra.mxu0 %v1141
      %1204 = vmatprep.subr.bf16.mxu0 0
      %1205 = vmatpush2.bf16.xpose.msra.mxu0 %v1186
      %1206 = vmatprep.subr.bf16.mxu0 0
      %1207 = vmatpush2.bf16.xpose.msra.mxu0 %v1183
      %1208 = vmatprep.subr.bf16.mxu0 0
      %1209 = vmatpush2.bf16.xpose.msra.mxu0 %v1180
      %1210 = vmatprep.subr.bf16.mxu0 0
      %1211 = vmatpush2.bf16.xpose.msra.mxu0 %v1177
      %1212 = vmatprep.subr.bf16.mxu0 0
      %1213 = vmatpush2.bf16.xpose.msra.mxu0 %v1174
      %1214 = vmatprep.subr.bf16.mxu0 0
      %1215 = vmatpush2.bf16.xpose.msra.mxu0 %v1171
      %1216 = vmatprep.subr.bf16.mxu0 0
      %1217 = vmatpush2.bf16.xpose.msra.mxu0 %v1168
      %1218 = vmatprep.subr.bf16.mxu0 0
      %1219 = vmatpush2.bf16.xpose.msra.mxu0 %v1165
      %1220 = vmatprep.mubr.bf16.mxu0 0
      %1221 = vmatmul.mubr.bf16.gmra.mxu0 %v1138
      %v1222 = vpop.f32.mrf.mxu0
      %v1223 = vadd.f32 0.0, %v1222
      %v1224 = vpop.f32.mrf.mxu0
      %v1225 = vadd.f32 0.0, %v1224
      %v1226 = vpop.f32.mrf.mxu0
      %v1227 = vpop.f32.mrf.mxu0
      %1228 = vdwg.mxu0
      %v1229 = vadd.f32 %v650, %v1223
      %v1230 = vadd.f32 %v651, %v1225
      %s1231 = scalar_lea.vmem %s2, 16
      %v1232 = vld [vmem:[%s1231] sm:$0xf]
      %v1233 = vunpack.c.l.b16 %v1052
      %v1234 = vunpack.c.l.b16 %v1062
      %v1235 = vpack.c.b16 %v1234, %v1233
      %v1237 = vsel %vm451, %v1232, 0
      %v1240 = vsel %vm451, %v1235, 0
      %1242 = vmatprep.subr.bf16.mxu0 0
      %1243 = vmatpush1.bf16.xpose.msra.mxu0 %v1165
      %1244 = vmatprep.subr.bf16.mxu0 0
      %1245 = vmatpush1.bf16.xpose.msra.mxu0 %v1162
      %1246 = vmatprep.subr.bf16.mxu0 0
      %1247 = vmatpush1.bf16.xpose.msra.mxu0 %v1159
      %1248 = vmatprep.subr.bf16.mxu0 0
      %1249 = vmatpush1.bf16.xpose.msra.mxu0 %v1156
      %1250 = vmatprep.subr.bf16.mxu0 0
      %1251 = vmatpush1.bf16.xpose.msra.mxu0 %v1153
      %1252 = vmatprep.subr.bf16.mxu0 0
      %1253 = vmatpush1.bf16.xpose.msra.mxu0 %v1150
      %1254 = vmatprep.subr.bf16.mxu0 0
      %1255 = vmatpush1.bf16.xpose.msra.mxu0 %v1147
      %1256 = vmatprep.subr.bf16.mxu0 0
      %1257 = vmatpush1.bf16.xpose.msra.mxu0 %v1144
      %1258 = vmatprep.subr.bf16.mxu0 0
      %1259 = vmatpush2.bf16.xpose.msra.mxu0 %v1240
      %1260 = vmatprep.subr.bf16.mxu0 0
      %1261 = vmatpush2.bf16.xpose.msra.mxu0 %v1186
      %1262 = vmatprep.subr.bf16.mxu0 0
      %1263 = vmatpush2.bf16.xpose.msra.mxu0 %v1183
      %1264 = vmatprep.subr.bf16.mxu0 0
      %1265 = vmatpush2.bf16.xpose.msra.mxu0 %v1180
      %1266 = vmatprep.subr.bf16.mxu0 0
      %1267 = vmatpush2.bf16.xpose.msra.mxu0 %v1177
      %1268 = vmatprep.subr.bf16.mxu0 0
      %1269 = vmatpush2.bf16.xpose.msra.mxu0 %v1174
      %1270 = vmatprep.subr.bf16.mxu0 0
      %1271 = vmatpush2.bf16.xpose.msra.mxu0 %v1171
      %1272 = vmatprep.subr.bf16.mxu0 0
      %1273 = vmatpush2.bf16.xpose.msra.mxu0 %v1168
      %1274 = vmatprep.mubr.bf16.mxu0 0
      %1275 = vmatmul.mubr.bf16.gmra.mxu0 %v1237
      %v1276 = vpop.f32.mrf.mxu0
      %v1277 = vadd.f32 0.0, %v1276
      %v1278 = vpop.f32.mrf.mxu0
      %v1279 = vadd.f32 0.0, %v1278
      %v1280 = vpop.f32.mrf.mxu0
      %v1281 = vpop.f32.mrf.mxu0
      %1282 = vdwg.mxu0
      %v1283 = vadd.f32 %v1229, %v1277
      %v1284 = vadd.f32 %v1230, %v1279
      %s1285 = scalar_lea.vmem %s2, 28
      %v1286 = vld [vmem:[%s1285] sm:$0xf]
      %v1287 = vunpack.c.l.b16 %v1076
      %v1288 = vunpack.c.l.b16 %v1086
      %v1289 = vpack.c.b16 %v1288, %v1287
      %v1291 = vsel %vm451, %v1286, 0
      %v1294 = vsel %vm451, %v1289, 0
      %1296 = vmatprep.subr.bf16.mxu0 0
      %1297 = vmatpush1.bf16.xpose.msra.mxu0 %v1168
      %1298 = vmatprep.subr.bf16.mxu0 0
      %1299 = vmatpush1.bf16.xpose.msra.mxu0 %v1165
      %1300 = vmatprep.subr.bf16.mxu0 0
      %1301 = vmatpush1.bf16.xpose.msra.mxu0 %v1162
      %1302 = vmatprep.subr.bf16.mxu0 0
      %1303 = vmatpush1.bf16.xpose.msra.mxu0 %v1159
      %1304 = vmatprep.subr.bf16.mxu0 0
      %1305 = vmatpush1.bf16.xpose.msra.mxu0 %v1156
      %1306 = vmatprep.subr.bf16.mxu0 0
      %1307 = vmatpush1.bf16.xpose.msra.mxu0 %v1153
      %1308 = vmatprep.subr.bf16.mxu0 0
      %1309 = vmatpush1.bf16.xpose.msra.mxu0 %v1150
      %1310 = vmatprep.subr.bf16.mxu0 0
      %1311 = vmatpush1.bf16.xpose.msra.mxu0 %v1147
      %1312 = vmatprep.subr.bf16.mxu0 0
      %1313 = vmatpush2.bf16.xpose.msra.mxu0 %v1294
      %1314 = vmatprep.subr.bf16.mxu0 0
      %1315 = vmatpush2.bf16.xpose.msra.mxu0 %v1240
      %1316 = vmatprep.subr.bf16.mxu0 0
      %1317 = vmatpush2.bf16.xpose.msra.mxu0 %v1186
      %1318 = vmatprep.subr.bf16.mxu0 0
      %1319 = vmatpush2.bf16.xpose.msra.mxu0 %v1183
      %1320 = vmatprep.subr.bf16.mxu0 0
      %1321 = vmatpush2.bf16.xpose.msra.mxu0 %v1180
      %1322 = vmatprep.subr.bf16.mxu0 0
      %1323 = vmatpush2.bf16.xpose.msra.mxu0 %v1177
      %1324 = vmatprep.subr.bf16.mxu0 0
      %1325 = vmatpush2.bf16.xpose.msra.mxu0 %v1174
      %1326 = vmatprep.subr.bf16.mxu0 0
      %1327 = vmatpush2.bf16.xpose.msra.mxu0 %v1171
      %1328 = vmatprep.mubr.bf16.mxu0 0
      %1329 = vmatmul.mubr.bf16.gmra.mxu0 %v1291
      %v1330 = vpop.f32.mrf.mxu0
      %v1331 = vadd.f32 0.0, %v1330
      %v1332 = vpop.f32.mrf.mxu0
      %v1333 = vadd.f32 0.0, %v1332
      %v1334 = vpop.f32.mrf.mxu0
      %v1335 = vpop.f32.mrf.mxu0
      %1336 = vdwg.mxu0
      %v1337 = vadd.f32 %v1283, %v1331
      %v1338 = vadd.f32 %v1284, %v1333
      %vm1357 = vcmask 1042432
      %vm1358 = vcmask 1046532
      %vm1359 = vmor %vm1357, %vm1358
      %v1360 = vrot.slane %v314, 5
      %v1361 = vrot.slane %v1360, 4
      %v1362 = vrot.slane %v315, 5
      %v1363 = vsel %vm1359, %v1361, %v1362
      %v1364 = vrot.slane %v1362, 4
      %v1365 = vrot.slane %v316, 5
      %v1366 = vsel %vm1359, %v1364, %v1365
      %v1367 = vrot.slane %v317, 5
      %v1368 = vrot.slane %v1367, 4
      %v1369 = vrot.slane %v318, 5
      %v1370 = vsel %vm1359, %v1368, %v1369
      %v1371 = vrot.slane %v1369, 4
      %v1372 = vrot.slane %v319, 5
      %v1373 = vsel %vm1359, %v1371, %v1372
      %v1374 = vrot.slane %v320, 5
      %v1375 = vrot.slane %v1374, 4
      %v1376 = vrot.slane %v321, 5
      %v1377 = vsel %vm1359, %v1375, %v1376
      %v1378 = vrot.slane %v1376, 4
      %v1379 = vrot.slane %v322, 5
      %v1380 = vsel %vm1359, %v1378, %v1379
      %v1381 = vrot.slane %v323, 5
      %v1382 = vrot.slane %v1381, 4
      %v1383 = vrot.slane %v324, 5
      %v1384 = vsel %vm1359, %v1382, %v1383
      %v1385 = vrot.slane %v1383, 4
      %v1386 = vrot.slane %v325, 5
      %v1387 = vsel %vm1359, %v1385, %v1386
      %v1388 = vrot.slane %v326, 5
      %v1389 = vrot.slane %v1388, 4
      %v1390 = vrot.slane %v327, 5
      %v1391 = vsel %vm1359, %v1389, %v1390
      %v1392 = vrot.slane %v1390, 4
      %v1393 = vrot.slane %v328, 5
      %v1394 = vsel %vm1359, %v1392, %v1393
      %v1395 = vrot.slane %v329, 5
      %v1396 = vrot.slane %v1395, 4
      %v1397 = vrot.slane %v330, 5
      %v1398 = vsel %vm1359, %v1396, %v1397
      %v1399 = vrot.slane %v1397, 4
      %v1400 = vrot.slane %v331, 5
      %v1401 = vsel %vm1359, %v1399, %v1400
      %v1402 = vrot.slane %v332, 5
      %v1403 = vrot.slane %v1402, 4
      %v1404 = vrot.slane %v333, 5
      %v1405 = vsel %vm1359, %v1403, %v1404
      %v1406 = vrot.slane %v1404, 4
      %v1407 = vrot.slane %v334, 5
      %v1408 = vsel %vm1359, %v1406, %v1407
      %v1409 = vrot.slane %v335, 5
      %v1410 = vrot.slane %v1409, 4
      %v1411 = vrot.slane %v336, 5
      %v1412 = vsel %vm1359, %v1410, %v1411
      %v1413 = vrot.slane %v1411, 4
      %v1414 = vrot.slane %v337, 5
      %v1415 = vsel %vm1359, %v1413, %v1414
      %v1416 = vrot.slane %v338, 5
      %v1417 = vrot.slane %v1416, 4
      %v1418 = vrot.slane %v339, 5
      %v1419 = vsel %vm1359, %v1417, %v1418
      %v1420 = vrot.slane %v1418, 4
      %v1421 = vrot.slane %v340, 5
      %v1422 = vsel %vm1359, %v1420, %v1421
      %v1423 = vrot.slane %v341, 5
      %v1424 = vrot.slane %v1423, 4
      %v1425 = vrot.slane %v342, 5
      %v1426 = vsel %vm1359, %v1424, %v1425
      %v1427 = vrot.slane %v1425, 4
      %v1428 = vrot.slane %v343, 5
      %v1429 = vsel %vm1359, %v1427, %v1428
      %v1430 = vrot.slane %v344, 5
      %v1431 = vrot.slane %v1430, 4
      %v1432 = vrot.slane %v345, 5
      %v1433 = vsel %vm1359, %v1431, %v1432
      %v1434 = vrot.slane %v1432, 4
      %v1435 = vrot.slane %v346, 5
      %v1436 = vsel %vm1359, %v1434, %v1435
      %v1437 = vrot.slane %v347, 5
      %v1438 = vrot.slane %v1437, 4
      %v1439 = vrot.slane %v348, 5
      %v1440 = vsel %vm1359, %v1438, %v1439
      %v1441 = vrot.slane %v1439, 4
      %v1442 = vrot.slane %v349, 5
      %v1443 = vsel %vm1359, %v1441, %v1442
      %v1444 = vrot.slane %v350, 5
      %v1445 = vrot.slane %v1444, 4
      %v1446 = vrot.slane %v351, 5
      %v1447 = vsel %vm1359, %v1445, %v1446
      %v1448 = vrot.slane %v1446, 4
      %v1449 = vrot.slane %v352, 5
      %v1450 = vsel %vm1359, %v1448, %v1449
      %v1451 = vrot.slane %v353, 5
      %v1452 = vrot.slane %v1451, 4
      %v1453 = vrot.slane %v354, 5
      %v1454 = vsel %vm1359, %v1452, %v1453
      %v1455 = vrot.slane %v1453, 4
      %v1456 = vrot.slane %v355, 5
      %v1457 = vsel %vm1359, %v1455, %v1456
      %v1458 = vrot.slane %v356, 5
      %v1459 = vrot.slane %v1458, 4
      %v1460 = vrot.slane %v357, 5
      %v1461 = vsel %vm1359, %v1459, %v1460
      %v1462 = vrot.slane %v1460, 4
      %v1463 = vrot.slane %v358, 5
      %v1464 = vsel %vm1359, %v1462, %v1463
      %v1465 = vrot.slane %v359, 5
      %v1466 = vrot.slane %v1465, 4
      %v1467 = vrot.slane %v360, 5
      %v1468 = vsel %vm1359, %v1466, %v1467
      %v1469 = vrot.slane %v1467, 4
      %v1470 = vrot.slane %v361, 5
      %v1471 = vsel %vm1359, %v1469, %v1470
      %v1472 = vrot.slane %v362, 5
      %v1473 = vrot.slane %v1472, 4
      %v1474 = vrot.slane %v363, 5
      %v1475 = vsel %vm1359, %v1473, %v1474
      %v1476 = vrot.slane %v1474, 4
      %v1477 = vrot.slane %v364, 5
      %v1478 = vsel %vm1359, %v1476, %v1477
      %v1479 = vrot.slane %v365, 5
      %v1480 = vrot.slane %v1479, 4
      %v1481 = vrot.slane %v366, 5
      %v1482 = vsel %vm1359, %v1480, %v1481
      %v1483 = vrot.slane %v1481, 4
      %v1484 = vrot.slane %v367, 5
      %v1485 = vsel %vm1359, %v1483, %v1484
      %s1486 = scalar_lea.vmem %s2, 8
      %v1487 = vld [vmem:[%s1486] sm:$0xf]
      %v1488 = vunpack.c.l.b16 %v1363
      %v1489 = vunpack.c.l.b16 %v1366
      %v1490 = vunpack.c.l.b16 %v1370
      %v1491 = vunpack.c.l.b16 %v1373
      %v1492 = vunpack.c.l.b16 %v1377
      %v1493 = vunpack.c.l.b16 %v1380
      %v1494 = vunpack.c.l.b16 %v1384
      %v1495 = vunpack.c.l.b16 %v1387
      %v1496 = vunpack.c.l.b16 %v1391
      %v1497 = vunpack.c.l.b16 %v1394
      %v1498 = vunpack.c.l.b16 %v1398
      %v1499 = vunpack.c.l.b16 %v1401
      %v1500 = vunpack.c.l.b16 %v1405
      %v1501 = vunpack.c.l.b16 %v1408
      %v1502 = vunpack.c.l.b16 %v1412
      %v1503 = vunpack.c.l.b16 %v1415
      %v1504 = vunpack.c.l.b16 %v1419
      %v1505 = vunpack.c.l.b16 %v1422
      %v1506 = vunpack.c.l.b16 %v1426
      %v1507 = vunpack.c.l.b16 %v1429
      %v1508 = vunpack.c.l.b16 %v1433
      %v1509 = vunpack.c.l.b16 %v1436
      %v1510 = vunpack.c.l.b16 %v1440
      %v1511 = vunpack.c.l.b16 %v1443
      %v1512 = vunpack.c.l.b16 %v1447
      %v1513 = vunpack.c.l.b16 %v1450
      %v1514 = vunpack.c.l.b16 %v1454
      %v1515 = vunpack.c.l.b16 %v1457
      %v1516 = vunpack.c.l.b16 %v1461
      %v1517 = vunpack.c.l.b16 %v1464
      %v1518 = vunpack.c.l.b16 %v1468
      %v1519 = vunpack.c.l.b16 %v1471
      %v1520 = vpack.c.b16 %v1489, %v1488
      %v1521 = vpack.c.b16 %v1491, %v1490
      %v1522 = vpack.c.b16 %v1493, %v1492
      %v1523 = vpack.c.b16 %v1495, %v1494
      %v1524 = vpack.c.b16 %v1497, %v1496
      %v1525 = vpack.c.b16 %v1499, %v1498
      %v1526 = vpack.c.b16 %v1501, %v1500
      %v1527 = vpack.c.b16 %v1503, %v1502
      %v1528 = vpack.c.b16 %v1505, %v1504
      %v1529 = vpack.c.b16 %v1507, %v1506
      %v1530 = vpack.c.b16 %v1509, %v1508
      %v1531 = vpack.c.b16 %v1511, %v1510
      %v1532 = vpack.c.b16 %v1513, %v1512
      %v1533 = vpack.c.b16 %v1515, %v1514
      %v1534 = vpack.c.b16 %v1517, %v1516
      %v1535 = vpack.c.b16 %v1519, %v1518
      %v1537 = vsel %vm451, %v1487, 0
      %v1540 = vsel %vm451, %v1520, 0
      %v1543 = vsel %vm451, %v1521, 0
      %v1546 = vsel %vm451, %v1522, 0
      %v1549 = vsel %vm451, %v1523, 0
      %v1552 = vsel %vm451, %v1524, 0
      %v1555 = vsel %vm451, %v1525, 0
      %v1558 = vsel %vm451, %v1526, 0
      %v1561 = vsel %vm451, %v1527, 0
      %v1564 = vsel %vm451, %v1528, 0
      %v1567 = vsel %vm451, %v1529, 0
      %v1570 = vsel %vm451, %v1530, 0
      %v1573 = vsel %vm451, %v1531, 0
      %v1576 = vsel %vm451, %v1532, 0
      %v1579 = vsel %vm451, %v1533, 0
      %v1582 = vsel %vm451, %v1534, 0
      %v1585 = vsel %vm451, %v1535, 0
      %1587 = vmatprep.subr.bf16.mxu0 0
      %1588 = vmatpush1.bf16.xpose.msra.mxu0 %v1561
      %1589 = vmatprep.subr.bf16.mxu0 0
      %1590 = vmatpush1.bf16.xpose.msra.mxu0 %v1558
      %1591 = vmatprep.subr.bf16.mxu0 0
      %1592 = vmatpush1.bf16.xpose.msra.mxu0 %v1555
      %1593 = vmatprep.subr.bf16.mxu0 0
      %1594 = vmatpush1.bf16.xpose.msra.mxu0 %v1552
      %1595 = vmatprep.subr.bf16.mxu0 0
      %1596 = vmatpush1.bf16.xpose.msra.mxu0 %v1549
      %1597 = vmatprep.subr.bf16.mxu0 0
      %1598 = vmatpush1.bf16.xpose.msra.mxu0 %v1546
      %1599 = vmatprep.subr.bf16.mxu0 0
      %1600 = vmatpush1.bf16.xpose.msra.mxu0 %v1543
      %1601 = vmatprep.subr.bf16.mxu0 0
      %1602 = vmatpush1.bf16.xpose.msra.mxu0 %v1540
      %1603 = vmatprep.subr.bf16.mxu0 0
      %1604 = vmatpush2.bf16.xpose.msra.mxu0 %v1585
      %1605 = vmatprep.subr.bf16.mxu0 0
      %1606 = vmatpush2.bf16.xpose.msra.mxu0 %v1582
      %1607 = vmatprep.subr.bf16.mxu0 0
      %1608 = vmatpush2.bf16.xpose.msra.mxu0 %v1579
      %1609 = vmatprep.subr.bf16.mxu0 0
      %1610 = vmatpush2.bf16.xpose.msra.mxu0 %v1576
      %1611 = vmatprep.subr.bf16.mxu0 0
      %1612 = vmatpush2.bf16.xpose.msra.mxu0 %v1573
      %1613 = vmatprep.subr.bf16.mxu0 0
      %1614 = vmatpush2.bf16.xpose.msra.mxu0 %v1570
      %1615 = vmatprep.subr.bf16.mxu0 0
      %1616 = vmatpush2.bf16.xpose.msra.mxu0 %v1567
      %1617 = vmatprep.subr.bf16.mxu0 0
      %1618 = vmatpush2.bf16.xpose.msra.mxu0 %v1564
      %1619 = vmatprep.mubr.bf16.mxu0 0
      %1620 = vmatmul.mubr.bf16.gmra.mxu0 %v1537
      %v1621 = vpop.f32.mrf.mxu0
      %v1622 = vadd.f32 0.0, %v1621
      %v1623 = vpop.f32.mrf.mxu0
      %v1624 = vadd.f32 0.0, %v1623
      %v1625 = vpop.f32.mrf.mxu0
      %v1626 = vpop.f32.mrf.mxu0
      %1627 = vdwg.mxu0
      %v1628 = vadd.f32 %v1337, %v1622
      %v1629 = vadd.f32 %v1338, %v1624
      %s1630 = scalar_lea.vmem %s2, 20
      %v1631 = vld [vmem:[%s1630] sm:$0xf]
      %v1632 = vunpack.c.l.b16 %v1475
      %v1633 = vunpack.c.l.b16 %v1478
      %v1634 = vpack.c.b16 %v1633, %v1632
      %v1636 = vsel %vm451, %v1631, 0
      %v1639 = vsel %vm451, %v1634, 0
      %1641 = vmatprep.subr.bf16.mxu0 0
      %1642 = vmatpush1.bf16.xpose.msra.mxu0 %v1564
      %1643 = vmatprep.subr.bf16.mxu0 0
      %1644 = vmatpush1.bf16.xpose.msra.mxu0 %v1561
      %1645 = vmatprep.subr.bf16.mxu0 0
      %1646 = vmatpush1.bf16.xpose.msra.mxu0 %v1558
      %1647 = vmatprep.subr.bf16.mxu0 0
      %1648 = vmatpush1.bf16.xpose.msra.mxu0 %v1555
      %1649 = vmatprep.subr.bf16.mxu0 0
      %1650 = vmatpush1.bf16.xpose.msra.mxu0 %v1552
      %1651 = vmatprep.subr.bf16.mxu0 0
      %1652 = vmatpush1.bf16.xpose.msra.mxu0 %v1549
      %1653 = vmatprep.subr.bf16.mxu0 0
      %1654 = vmatpush1.bf16.xpose.msra.mxu0 %v1546
      %1655 = vmatprep.subr.bf16.mxu0 0
      %1656 = vmatpush1.bf16.xpose.msra.mxu0 %v1543
      %1657 = vmatprep.subr.bf16.mxu0 0
      %1658 = vmatpush2.bf16.xpose.msra.mxu0 %v1639
      %1659 = vmatprep.subr.bf16.mxu0 0
      %1660 = vmatpush2.bf16.xpose.msra.mxu0 %v1585
      %1661 = vmatprep.subr.bf16.mxu0 0
      %1662 = vmatpush2.bf16.xpose.msra.mxu0 %v1582
      %1663 = vmatprep.subr.bf16.mxu0 0
      %1664 = vmatpush2.bf16.xpose.msra.mxu0 %v1579
      %1665 = vmatprep.subr.bf16.mxu0 0
      %1666 = vmatpush2.bf16.xpose.msra.mxu0 %v1576
      %1667 = vmatprep.subr.bf16.mxu0 0
      %1668 = vmatpush2.bf16.xpose.msra.mxu0 %v1573
      %1669 = vmatprep.subr.bf16.mxu0 0
      %1670 = vmatpush2.bf16.xpose.msra.mxu0 %v1570
      %1671 = vmatprep.subr.bf16.mxu0 0
      %1672 = vmatpush2.bf16.xpose.msra.mxu0 %v1567
      %1673 = vmatprep.mubr.bf16.mxu0 0
      %1674 = vmatmul.mubr.bf16.gmra.mxu0 %v1636
      %v1675 = vpop.f32.mrf.mxu0
      %v1676 = vadd.f32 0.0, %v1675
      %v1677 = vpop.f32.mrf.mxu0
      %v1678 = vadd.f32 0.0, %v1677
      %v1679 = vpop.f32.mrf.mxu0
      %v1680 = vpop.f32.mrf.mxu0
      %1681 = vdwg.mxu0
      %v1682 = vadd.f32 %v1628, %v1676
      %v1683 = vadd.f32 %v1629, %v1678
      %s1684 = scalar_lea.vmem %s2, 32
      %v1685 = vld [vmem:[%s1684] sm:$0xf]
      %v1686 = vunpack.c.l.b16 %v1482
      %v1687 = vunpack.c.l.b16 %v1485
      %v1688 = vpack.c.b16 %v1687, %v1686
      %v1690 = vsel %vm451, %v1685, 0
      %v1693 = vsel %vm451, %v1688, 0
      %1695 = vmatprep.subr.bf16.mxu0 0
      %1696 = vmatpush1.bf16.xpose.msra.mxu0 %v1567
      %1697 = vmatprep.subr.bf16.mxu0 0
      %1698 = vmatpush1.bf16.xpose.msra.mxu0 %v1564
      %1699 = vmatprep.subr.bf16.mxu0 0
      %1700 = vmatpush1.bf16.xpose.msra.mxu0 %v1561
      %1701 = vmatprep.subr.bf16.mxu0 0
      %1702 = vmatpush1.bf16.xpose.msra.mxu0 %v1558
      %1703 = vmatprep.subr.bf16.mxu0 0
      %1704 = vmatpush1.bf16.xpose.msra.mxu0 %v1555
      %1705 = vmatprep.subr.bf16.mxu0 0
      %1706 = vmatpush1.bf16.xpose.msra.mxu0 %v1552
      %1707 = vmatprep.subr.bf16.mxu0 0
      %1708 = vmatpush1.bf16.xpose.msra.mxu0 %v1549
      %1709 = vmatprep.subr.bf16.mxu0 0
      %1710 = vmatpush1.bf16.xpose.msra.mxu0 %v1546
      %1711 = vmatprep.subr.bf16.mxu0 0
      %1712 = vmatpush2.bf16.xpose.msra.mxu0 %v1693
      %1713 = vmatprep.subr.bf16.mxu0 0
      %1714 = vmatpush2.bf16.xpose.msra.mxu0 %v1639
      %1715 = vmatprep.subr.bf16.mxu0 0
      %1716 = vmatpush2.bf16.xpose.msra.mxu0 %v1585
      %1717 = vmatprep.subr.bf16.mxu0 0
      %1718 = vmatpush2.bf16.xpose.msra.mxu0 %v1582
      %1719 = vmatprep.subr.bf16.mxu0 0
      %1720 = vmatpush2.bf16.xpose.msra.mxu0 %v1579
      %1721 = vmatprep.subr.bf16.mxu0 0
      %1722 = vmatpush2.bf16.xpose.msra.mxu0 %v1576
      %1723 = vmatprep.subr.bf16.mxu0 0
      %1724 = vmatpush2.bf16.xpose.msra.mxu0 %v1573
      %1725 = vmatprep.subr.bf16.mxu0 0
      %1726 = vmatpush2.bf16.xpose.msra.mxu0 %v1570
      %1727 = vmatprep.mubr.bf16.mxu0 0
      %1728 = vmatmul.mubr.bf16.gmra.mxu0 %v1690
      %v1729 = vpop.f32.mrf.mxu0
      %v1730 = vadd.f32 0.0, %v1729
      %v1731 = vpop.f32.mrf.mxu0
      %v1732 = vadd.f32 0.0, %v1731
      %v1733 = vpop.f32.mrf.mxu0
      %v1734 = vpop.f32.mrf.mxu0
      %1735 = vdwg.mxu0
      %v1736 = vadd.f32 %v1682, %v1730
      %v1737 = vadd.f32 %v1683, %v1732
      %v1738 = vadd.f32 %v1736, %v1737
      %1739 = vadd.xlane.f32.xlu0 %v1738
      %v1740 = vpop.xlane.xlu0 %1739
      %vm1741 = vcmask 7168
      %1742 = vst.msk [vmem:[%s305] sm:$0xff] %vm1741, %v1740
      %v1743 = vmul.f32 %v1736, %v1736
      %v1744 = vmul.f32 %v1737, %v1737
      %v1745 = vadd.f32 %v1743, %v1744
      %1746 = vadd.xlane.f32.xlu0 %v1745
      %v1747 = vpop.xlane.xlu0 %1746
      %1748 = vst.msk [vmem:[%s312] sm:$0xff] %vm1741, %v1747
      %p1749 = scmp.lt.s32.totalorder %s20, 1
      %s1750 = scalar_select %p1749, %s20, 1
      %p1751 = scmp.lt.s32.totalorder %s21, 0
      %s1752 = scalar_select %p1751, %s21, 0
      %s1753 = sadd.s32 %s1752, %s1750
      %s1754 = smul.addr %s1753, 8
      %s1755 = scalar_lea.vmem %s3, %s1754
      %p1756 = scmp.lt.s32.totalorder %s20, 1
      %s1757 = scalar_select %p1756, %s20, 1
      %p1758 = scmp.lt.s32.totalorder %s21, 0
      %s1759 = scalar_select %p1758, %s21, 0
      %s1760 = sadd.s32 %s1759, %s1757
      %s1761 = smul.addr %s1760, 8
      %s1762 = scalar_lea.vmem %s4, %s1761
      // Predicated region
      $region33: #{conv_bn_relu_forward.2} parent=31 // pred_check
        %p1763 = pneg %p125
      $region34: #{conv_bn_relu_forward.2} parent=31 // pred_check_branch
        %1765 = sbr.rel (%p1763) target = $region36
      $region35: #{conv_bn_relu_forward.2} parent=31 // pred_region
        _
      $region36: #{conv_bn_relu_forward.2} parent=31 // pred_fallthru
        _
      // Predicated region
      $region37: #{conv_bn_relu_forward.2} parent=31 // pred_check
        %p1766 = pneg %p153
      $region38: #{conv_bn_relu_forward.2} parent=31 // pred_check_branch
        %1768 = sbr.rel (%p1766) target = $region40
      $region39: #{conv_bn_relu_forward.2} parent=31 // pred_region
        _
      $region40: #{conv_bn_relu_forward.2} parent=31 // pred_fallthru
        _
    $region32: #{conv_bn_relu_forward.2} parent=5 // pred_fallthru
      _
    %p1769 = scmp.le.s32.totalorder 2, %s11
    // Predicated region
    $region41: #{conv_bn_relu_forward.2} parent=5 // pred_check
      %p1770 = pneg %p1769
    $region42: #{conv_bn_relu_forward.2} parent=5 // pred_check_branch
      %1772 = sbr.rel (%p1770) target = $region44
    $region43: #{conv_bn_relu_forward.2} parent=5 // pred_region
      %s1773 = ssub.s32 %s11, 2
      // Predicated region
      $region45: #{conv_bn_relu_forward.2} parent=43 // pred_check
        %p1774 = pneg %p131
      $region46: #{conv_bn_relu_forward.2} parent=43 // pred_check_branch
        %1776 = sbr.rel (%p1774) target = $region48
      $region47: #{conv_bn_relu_forward.2} parent=43 // pred_region
        %p1777 = scmp.lt.s32.totalorder %s22, 1
        %s1778 = scalar_select %p1777, %s22, 1
        %p1779 = scmp.lt.s32.totalorder %s23, 0
        %s1780 = scalar_select %p1779, %s23, 0
        %s1781 = sadd.s32 %s1780, %s1778
        %s1782 = smul.addr %s1781, 8
        %s1783 = scalar_lea.vmem %s3, %s1782
      $region48: #{conv_bn_relu_forward.2} parent=43 // pred_fallthru
        _
      // Predicated region
      $region49: #{conv_bn_relu_forward.2} parent=43 // pred_check
        %p1784 = pneg %p159
      $region50: #{conv_bn_relu_forward.2} parent=43 // pred_check_branch
        %1786 = sbr.rel (%p1784) target = $region52
      $region51: #{conv_bn_relu_forward.2} parent=43 // pred_region
        %p1787 = scmp.lt.s32.totalorder %s22, 1
        %s1788 = scalar_select %p1787, %s22, 1
        %p1789 = scmp.lt.s32.totalorder %s23, 0
        %s1790 = scalar_select %p1789, %s23, 0
        %s1791 = sadd.s32 %s1790, %s1788
        %s1792 = smul.addr %s1791, 8
        %s1793 = scalar_lea.vmem %s4, %s1792
      $region52: #{conv_bn_relu_forward.2} parent=43 // pred_fallthru
        _
    $region44: #{conv_bn_relu_forward.2} parent=5 // pred_fallthru
      _
  $region6: #{conv_bn_relu_forward.2} parent=0 // loop_footer
    %s15 = sadd.s32 1, %s11
  $region7: #{conv_bn_relu_forward.2} parent=0 // loop_footer_branch
    %10 = sbr.rel target = $region3
  $region8: #{conv_bn_relu_forward.2} parent=0 // loop_exit
    _

</llo_original>
